<compile_context>
chip_gen: v5e
topology: v5e:2x2
jax: 0.10.0
libtpu: 0.0.40
codegen_flags: <defaults>
</compile_context>

<pallas_src>
import jax
import jax.numpy as jnp
from jax.experimental import pallas as pl
from jax.experimental.pallas import tpu as pltpu

NUM_PLANE = 7
SLAB_ROWS = 40            # rows 0..31: 32-wide hidden constants; rows 32..39: heads
SLAB_COLS = 128           # lane-dense so per-step constant loads are plain vld
MAX_TILE_M = 4096         # lanes per grid step; fused kernel keeps ~<4 MB live VMEM
HIGHEST = jax.lax.Precision.HIGHEST


def _num_tensorcores():
    """Best-effort TensorCores-per-chip query (2 on v7x-class parts).

    Only used to decide whether shrinking the tile to get >=2 grid steps is
    worthwhile (megacore sharding).  Falls back to 1 (single maximal tile),
    which is the right choice on v5e/v6e."""
    try:
        info = pltpu.get_tpu_info()
    except Exception:
        return 1
    for name in ("num_cores", "tensorcores_per_chip", "num_tensorcores",
                 "num_tensor_cores", "core_count"):
        v = getattr(info, name, None)
        if isinstance(v, int) and 1 <= v <= 8:
            return min(v, 2)
    return 1


def _pick_tile_m(m, n_cores=1):
    """Large tiles amortize the ~0.35us per-grid-step overhead; only halve the
    tile (to keep >=2 grid steps for dimension_semantics=('parallel',)) on
    chips that actually have 2 TensorCores."""
    m128 = ((max(m, 1) + 127) // 128) * 128
    tile = min(MAX_TILE_M, m128)
    if n_cores > 1 and m128 > 128:
        half = ((m128 // 2 + 127) // 128) * 128
        tile = min(tile, max(128, half))
    return max(128, tile)


def _point_kernel(xy_ref, s_ref, out_ref):
    f32 = jnp.float32
    xy = xy_ref[...]                          # (2, T)  points on lanes
    x0 = xy[0:1, :]                           # (1, T)
    x1 = xy[1:2, :]                           # (1, T)

    s = s_ref[...]                            # (40, 128) packed constants
    w_d2 = s[0:32, 0:32]                      # (32, 32) distance Linear(32,32) weight
    wd1a = s[0:32, 32:33]                     # (32, 1)  Wd1[:, 0]
    wd1b = s[0:32, 33:34]                     # (32, 1)  Wd1[:, 1]
    pbias = s[0:32, 34:34 + NUM_PLANE]        # (32, 7)  per-plane first-layer bias (+bd1)
    b_d2 = s[0:32, 41:42]                     # (32, 1)
    wb1a = s[0:32, 42:43]                     # (32, 1)  Wb1[:, 0]
    wb1b = s[0:32, 43:44]                     # (32, 1)  Wb1[:, 1]
    b_b1 = s[0:32, 44:45]                     # (32, 1)
    w_b2 = s[32:32 + NUM_PLANE, 0:32]         # (7, 32)
    b_b2 = s[32:32 + NUM_PLANE, 32:33]        # (7, 1)
    w_d3_blk = s[32:40, 64:96]                # (8, 32): row 0 = Wd3, rows 1..7 = 0
    b_d3 = s[32:33, 96:97]                    # (1, 1)

    # --- belongings branch: K=2 first layer as VPU broadcast-FMAs ------------
    hb = jnp.maximum(wb1a * x0 + wb1b * x1 + b_b1, 0.0)                 # (32, T)
    logits = jnp.dot(w_b2, hb, preferred_element_type=f32,
                     precision=HIGHEST) + b_b2                          # (7, T)
    logits = logits - jnp.max(logits, axis=0, keepdims=True)
    ex = jnp.exp(logits)
    # exact reciprocal: keeps sum_k bel_k == 1 to f32 roundoff, which the
    # Wd3/bd3 fold below relies on (approx recip previously injected bias).
    inv = 1.0 / jnp.sum(ex, axis=0, keepdims=True)
    bel = ex * inv                                                      # (7, T)

    # --- distance branch: fused per-plane accumulate --------------------------
    # shared point term of the first layer (plane term precomputed as pbias)
    h1_pts = wd1a * x0 + wd1b * x1                                      # (32, T)
    # For each plane: h2_k = relu(Wd2 @ relu(h1_pts + pbias_k) + bd2), folded
    # straight into the softmax-weighted accumulator.  No (32, 7T) concat or
    # materialization — only one extra (32, T) value is live per iteration.
    h2w = None
    for k in range(NUM_PLANE):                                          # static unroll
        h1_k = jnp.maximum(h1_pts + pbias[:, k:k + 1], 0.0)             # (32, T)
        h2_k = jnp.maximum(
            jnp.dot(w_d2, h1_k, preferred_element_type=f32,
                    precision=HIGHEST) + b_d2, 0.0)                     # (32, T)
        term = h2_k * bel[k:k + 1, :]
        h2w = term if h2w is None else h2w + term                       # (32, T)

    # fold the final Linear(32,1) out of the plane loop (softmax weights sum
    # to 1): sum_k bel_k*(Wd3 @ h2_k + bd3) == Wd3 @ (sum_k bel_k*h2_k) + bd3.
    # Run the 32-row contraction on the MXU (zero-padded 8-row lhs) instead of
    # a VPU multiply + XLU sublane reduction.
    dist = jnp.dot(w_d3_blk, h2w, preferred_element_type=f32,
                   precision=HIGHEST)[0:1, :] + b_d3                    # (1, T)

    # single lane-dense output slab: rows 0..6 = soft_belongs, row 7 = soft_distance
    out_ref[0:NUM_PLANE, :] = bel
    out_ref[NUM_PLANE:NUM_PLANE + 1, :] = dist


def init_params(key):
    ks = jax.random.split(key, 17)
    u = lambda k, shape: jax.random.uniform(k, shape, jnp.float32, -0.5, 0.5)
    return dict(
        z_vector=jax.random.uniform(ks[0], (1, 128), jnp.float32),       # torch.rand(1,128)
        Wf1=u(ks[1], (NUM_PLANE * 32, 128)),  bf1=u(ks[2], (NUM_PLANE * 32,)),
        Wf2=u(ks[3], (NUM_PLANE * 32, NUM_PLANE * 32)), bf2=u(ks[4], (NUM_PLANE * 32,)),
        Wp=u(ks[5], (2, 32)),   bp=u(ks[6], (2,)),       # to_parameters
        Wd1=u(ks[7], (32, 4)),  bd1=u(ks[8], (32,)),     # to_distance_soft[0]
        Wd2=u(ks[9], (32, 32)), bd2=u(ks[10], (32,)),    # to_distance_soft[2]
        Wd3=u(ks[11], (1, 32)), bd3=u(ks[12], (1,)),     # to_distance_soft[4]
        Wb1=u(ks[13], (32, 2)), bb1=u(ks[14], (32,)),    # to_belongings_soft[0]
        Wb2=u(ks[15], (7, 32)), bb2=u(ks[16], (7,)),     # to_belongings_soft[2]
        # to_interest_region / soft_belongs parameter are unused in forward()
    )


def base_model_forward(params, points):
    """points: (B, N, 3) float32 (x, y, homogeneous 1)."""
    f32 = jnp.float32
    B, N, _ = points.shape
    M = B * N
    mm = lambda a, b: jnp.matmul(a, b, precision=HIGHEST)

    # ---- plane feature extractor (tiny, point-independent) — plain-JAX glue ----
    h = jnp.maximum(mm(params["z_vector"], params["Wf1"].T) + params["bf1"], 0.0)
    h = jnp.maximum(mm(h, params["Wf2"].T) + params["bf2"], 0.0)
    plane_features = h.reshape(1, NUM_PLANE, 32)
    plane_m_polar = mm(plane_features, params["Wp"].T) + params["bp"]    # (1, 7, 2)
    rho = plane_m_polar[:, :, 0] * 2.0 * jnp.pi
    plane_m = jnp.stack((jnp.cos(rho), jnp.sin(rho), -plane_m_polar[:, :, 1]), axis=1)  # (1,3,7)
    # NOTE: d_n = |points @ plane_m| in the reference forward is dead code (not returned).

    # plane-parameter part of the first distance layer (point-free), per plane
    pbias = (mm(plane_m_polar[0], params["Wd1"][:, 2:4].T) + params["bd1"]).astype(f32)  # (7, 32)

    # ---- pack all small constants into one lane-dense slab (one DMA stream) ----
    slab = jnp.zeros((SLAB_ROWS, SLAB_COLS), f32)
    slab = slab.at[0:32, 0:32].set(params["Wd2"].astype(f32))
    slab = slab.at[0:32, 32:34].set(params["Wd1"][:, :2].astype(f32))
    slab = slab.at[0:32, 34:34 + NUM_PLANE].set(pbias.T)
    slab = slab.at[0:32, 41].set(params["bd2"].astype(f32))
    slab = slab.at[0:32, 42:44].set(params["Wb1"].astype(f32))
    slab = slab.at[0:32, 44].set(params["bb1"].astype(f32))
    slab = slab.at[32:32 + NUM_PLANE, 0:32].set(params["Wb2"].astype(f32))
    slab = slab.at[32:32 + NUM_PLANE, 32].set(params["bb2"].astype(f32))
    slab = slab.at[32, 64:96].set(params["Wd3"].astype(f32)[0])          # Wd3 row (rows 33..39 stay 0)
    slab = slab.at[32, 96].set(params["bd3"].astype(f32)[0])

    # ---- transposed point layout: point index on the lane axis ----
    xy_t = points[:, :, :2].reshape(M, 2).T.astype(f32)                  # (2, M)
    tile_m = _pick_tile_m(M, _num_tensorcores())
    m_pad = ((M + tile_m - 1) // tile_m) * tile_m
    if m_pad != M:
        xy_t = jnp.pad(xy_t, ((0, 0), (0, m_pad - M)))                   # zero pads are benign

    out = pl.pallas_call(
        _point_kernel,
        out_shape=jax.ShapeDtypeStruct((NUM_PLANE + 1, m_pad), f32),
        grid_spec=pltpu.PrefetchScalarGridSpec(
            num_scalar_prefetch=0,
            grid=(m_pad // tile_m,),
            in_specs=[
                pl.BlockSpec((2, tile_m), lambda i: (0, i)),             # xy (points on lanes)
                pl.BlockSpec((SLAB_ROWS, SLAB_COLS), lambda i: (0, 0)),  # packed constants
            ],
            out_specs=pl.BlockSpec((NUM_PLANE + 1, tile_m), lambda i: (0, i)),
        ),
        compiler_params=pltpu.CompilerParams(
            dimension_semantics=("parallel",),
            vmem_limit_bytes=32 * 1024 * 1024,
        ),
    )(xy_t, slab)

    # row 7 is a contiguous slice along M — no transpose for soft_distance.
    soft_distance = out[NUM_PLANE, :M].reshape(B, N)
    # TODO(synk): downstream consumers could read the lane-dense (7, M) slab
    # directly and skip this (M, 7) transpose (a second HBM pass for large M);
    # kept so the returned shapes match the PyTorch forward exactly.
    soft_belongs = out[0:NUM_PLANE, :M].T.reshape(B, N, NUM_PLANE)
    return soft_distance, soft_belongs, plane_m, None, None


def reference_forward(params, points):
    """Pure-JAX replica of the PyTorch forward for validation (f32, exact matmuls)."""
    B, N, _ = points.shape
    mm = lambda a, b: jnp.matmul(a, b, precision=HIGHEST)
    h = jnp.maximum(mm(params["z_vector"], params["Wf1"].T) + params["bf1"], 0.0)
    h = jnp.maximum(mm(h, params["Wf2"].T) + params["bf2"], 0.0)
    pf = h.reshape(1, NUM_PLANE, 32)
    pmp = mm(pf, params["Wp"].T) + params["bp"]
    rho = pmp[:, :, 0] * 2.0 * jnp.pi
    plane_m = jnp.stack((jnp.cos(rho), jnp.sin(rho), -pmp[:, :, 1]), axis=1)
    packed = jnp.concatenate(
        (jnp.tile(points[:, :, None, :2], (1, 1, NUM_PLANE, 1)),
         jnp.tile(pmp[:, None, :, :], (B, N, 1, 1))), axis=-1).reshape(-1, 4)
    d = jnp.maximum(mm(packed, params["Wd1"].T) + params["bd1"], 0.0)
    d = jnp.maximum(mm(d, params["Wd2"].T) + params["bd2"], 0.0)
    d = (mm(d, params["Wd3"].T) + params["bd3"]).reshape(B, N, NUM_PLANE)
    bl = jnp.maximum(mm(points[:, :, :2], params["Wb1"].T) + params["bb1"], 0.0)
    bl = mm(bl, params["Wb2"].T) + params["bb2"]
    bel = jax.nn.softmax(bl, axis=-1)
    return (d * bel).sum(-1), bel, plane_m


if __name__ == "__main__":
    key = jax.random.PRNGKey(0)
    kp, kx = jax.random.split(key)
    params = init_params(kp)

    B, N = 2, 128
    pts_xy = jax.random.normal(kx, (B, N, 2), jnp.float32)
    points = jnp.concatenate([pts_xy, jnp.ones((B, N, 1), jnp.float32)], axis=-1)

    soft_distance, soft_belongs, plane_m, _, _ = base_model_forward(params, points)
    jax.block_until_ready(soft_distance)
    jax.block_until_ready(soft_belongs)
    jax.block_until_ready(plane_m)

    ref_d, ref_b, ref_pm = reference_forward(params, points)
    assert jnp.allclose(soft_distance, ref_d, atol=2e-3, rtol=2e-3), (
        "soft_distance max abs diff %.3e" % float(jnp.max(jnp.abs(soft_distance - ref_d))))
    assert jnp.allclose(soft_belongs, ref_b, atol=2e-3, rtol=2e-3), (
        "soft_belongs max abs diff %.3e" % float(jnp.max(jnp.abs(soft_belongs - ref_b))))
    assert jnp.allclose(plane_m, ref_pm, atol=1e-5, rtol=1e-5)

    print("KERNEL_OK")
</pallas_src>

<mosaic_0001>
module attributes {stable_mosaic.version = 11 : i64} {
  func.func @_point_kernel(%arg0: i32, %arg1: memref<2x256xf32, #tpu.memory_space<vmem>>, %arg2: memref<40x128xf32, #tpu.memory_space<vmem>>, %arg3: memref<8x256xf32, #tpu.memory_space<vmem>>) attributes {dimension_semantics = [#tpu.dimension_semantics<parallel>], iteration_bounds = array<i64: 1>, scalar_prefetch = 0 : i64, scratch_operands = 0 : i64, tpu.core_type = #tpu.core_type<tc>, window_params = [{transform_indices = @transform_0, window_bounds = array<i64: 2, 256>}, {pipeline_mode = #tpu.pipeline_mode<synchronous>, transform_indices = @transform_1, window_bounds = array<i64: 40, 128>}, {transform_indices = @transform_2, window_bounds = array<i64: 8, 256>}]} {
    %c0 = arith.constant 0 : index
    %c0_0 = arith.constant 0 : index
    %0 = vector.load %arg1[%c0, %c0_0] : memref<2x256xf32, #tpu.memory_space<vmem>>, vector<2x256xf32>
    %1 = vector.extract_strided_slice %0 {offsets = [0, 0], sizes = [1, 256], strides = [1, 1]} : vector<2x256xf32> to vector<1x256xf32>
    %2 = vector.extract_strided_slice %0 {offsets = [1, 0], sizes = [1, 256], strides = [1, 1]} : vector<2x256xf32> to vector<1x256xf32>
    %c0_1 = arith.constant 0 : index
    %c0_2 = arith.constant 0 : index
    %3 = vector.load %arg2[%c0_1, %c0_2] : memref<40x128xf32, #tpu.memory_space<vmem>>, vector<40x128xf32>
    %4 = vector.extract_strided_slice %3 {offsets = [0, 0], sizes = [32, 32], strides = [1, 1]} : vector<40x128xf32> to vector<32x32xf32>
    %5 = vector.extract_strided_slice %3 {offsets = [0, 32], sizes = [32, 1], strides = [1, 1]} : vector<40x128xf32> to vector<32x1xf32>
    %6 = vector.extract_strided_slice %3 {offsets = [0, 33], sizes = [32, 1], strides = [1, 1]} : vector<40x128xf32> to vector<32x1xf32>
    %7 = vector.extract_strided_slice %3 {offsets = [0, 34], sizes = [32, 7], strides = [1, 1]} : vector<40x128xf32> to vector<32x7xf32>
    %8 = vector.extract_strided_slice %3 {offsets = [0, 41], sizes = [32, 1], strides = [1, 1]} : vector<40x128xf32> to vector<32x1xf32>
    %9 = vector.extract_strided_slice %3 {offsets = [0, 42], sizes = [32, 1], strides = [1, 1]} : vector<40x128xf32> to vector<32x1xf32>
    %10 = vector.extract_strided_slice %3 {offsets = [0, 43], sizes = [32, 1], strides = [1, 1]} : vector<40x128xf32> to vector<32x1xf32>
    %11 = vector.extract_strided_slice %3 {offsets = [0, 44], sizes = [32, 1], strides = [1, 1]} : vector<40x128xf32> to vector<32x1xf32>
    %12 = vector.extract_strided_slice %3 {offsets = [32, 0], sizes = [7, 32], strides = [1, 1]} : vector<40x128xf32> to vector<7x32xf32>
    %13 = vector.extract_strided_slice %3 {offsets = [32, 32], sizes = [7, 1], strides = [1, 1]} : vector<40x128xf32> to vector<7x1xf32>
    %14 = vector.extract_strided_slice %3 {offsets = [32, 64], sizes = [8, 32], strides = [1, 1]} : vector<40x128xf32> to vector<8x32xf32>
    %15 = vector.extract_strided_slice %3 {offsets = [32, 96], sizes = [1, 1], strides = [1, 1]} : vector<40x128xf32> to vector<1x1xf32>
    %16 = vector.broadcast %9 : vector<32x1xf32> to vector<32x256xf32>
    %17 = vector.broadcast %1 : vector<1x256xf32> to vector<32x256xf32>
    %18 = arith.mulf %16, %17 : vector<32x256xf32>
    %19 = vector.broadcast %10 : vector<32x1xf32> to vector<32x256xf32>
    %20 = vector.broadcast %2 : vector<1x256xf32> to vector<32x256xf32>
    %21 = arith.mulf %19, %20 : vector<32x256xf32>
    %22 = arith.addf %18, %21 : vector<32x256xf32>
    %23 = vector.broadcast %11 : vector<32x1xf32> to vector<32x256xf32>
    %24 = arith.addf %22, %23 : vector<32x256xf32>
    %cst = arith.constant 0.000000e+00 : f32
    %25 = vector.broadcast %cst : f32 to vector<32x256xf32>
    %26 = arith.maximumf %24, %25 : vector<32x256xf32>
    %cst_3 = arith.constant dense<0.000000e+00> : vector<7x256xf32>
    %27 = tpu.matmul %12, %26, %cst_3 {dimension_numbers = #tpu.dot_dimension_numbers<[1], [0], [0], [1], [0, 0, 1, 1], [], []>, precision = #tpu.contract_precision<fp32>} : vector<7x32xf32>, vector<32x256xf32>, vector<7x256xf32> -> vector<7x256xf32>
    %28 = vector.broadcast %13 : vector<7x1xf32> to vector<7x256xf32>
    %29 = arith.addf %27, %28 : vector<7x256xf32>
    %cst_4 = arith.constant dense<0xFF800000> : vector<256xf32>
    %30 = vector.multi_reduction <maximumf>, %29, %cst_4 [0] : vector<7x256xf32> to vector<256xf32>
    %31 = vector.shape_cast %30 : vector<256xf32> to vector<1x256xf32>
    %32 = vector.broadcast %31 : vector<1x256xf32> to vector<7x256xf32>
    %33 = arith.subf %29, %32 : vector<7x256xf32>
    %34 = math.exp %33 : vector<7x256xf32>
    %cst_5 = arith.constant dense<0.000000e+00> : vector<256xf32>
    %35 = vector.multi_reduction <add>, %34, %cst_5 [0] : vector<7x256xf32> to vector<256xf32>
    %36 = vector.shape_cast %35 : vector<256xf32> to vector<1x256xf32>
    %cst_6 = arith.constant 1.000000e+00 : f32
    %37 = vector.broadcast %cst_6 : f32 to vector<1x256xf32>
    %38 = arith.divf %37, %36 : vector<1x256xf32>
    %39 = vector.broadcast %38 : vector<1x256xf32> to vector<7x256xf32>
    %40 = arith.mulf %34, %39 : vector<7x256xf32>
    %41 = vector.broadcast %5 : vector<32x1xf32> to vector<32x256xf32>
    %42 = vector.broadcast %1 : vector<1x256xf32> to vector<32x256xf32>
    %43 = arith.mulf %41, %42 : vector<32x256xf32>
    %44 = vector.broadcast %6 : vector<32x1xf32> to vector<32x256xf32>
    %45 = vector.broadcast %2 : vector<1x256xf32> to vector<32x256xf32>
    %46 = arith.mulf %44, %45 : vector<32x256xf32>
    %47 = arith.addf %43, %46 : vector<32x256xf32>
    %48 = vector.extract_strided_slice %7 {offsets = [0, 0], sizes = [32, 1], strides = [1, 1]} : vector<32x7xf32> to vector<32x1xf32>
    %49 = vector.broadcast %48 : vector<32x1xf32> to vector<32x256xf32>
    %50 = arith.addf %47, %49 : vector<32x256xf32>
    %cst_7 = arith.constant 0.000000e+00 : f32
    %51 = vector.broadcast %cst_7 : f32 to vector<32x256xf32>
    %52 = arith.maximumf %50, %51 : vector<32x256xf32>
    %cst_8 = arith.constant dense<0.000000e+00> : vector<32x256xf32>
    %53 = tpu.matmul %4, %52, %cst_8 {dimension_numbers = #tpu.dot_dimension_numbers<[1], [0], [0], [1], [0, 0, 1, 1], [], []>, precision = #tpu.contract_precision<fp32>} : vector<32x32xf32>, vector<32x256xf32>, vector<32x256xf32> -> vector<32x256xf32>
    %54 = vector.broadcast %8 : vector<32x1xf32> to vector<32x256xf32>
    %55 = arith.addf %53, %54 : vector<32x256xf32>
    %cst_9 = arith.constant 0.000000e+00 : f32
    %56 = vector.broadcast %cst_9 : f32 to vector<32x256xf32>
    %57 = arith.maximumf %55, %56 : vector<32x256xf32>
    %58 = vector.extract_strided_slice %40 {offsets = [0, 0], sizes = [1, 256], strides = [1, 1]} : vector<7x256xf32> to vector<1x256xf32>
    %59 = vector.broadcast %58 : vector<1x256xf32> to vector<32x256xf32>
    %60 = arith.mulf %57, %59 : vector<32x256xf32>
    %61 = vector.extract_strided_slice %7 {offsets = [0, 1], sizes = [32, 1], strides = [1, 1]} : vector<32x7xf32> to vector<32x1xf32>
    %62 = vector.broadcast %61 : vector<32x1xf32> to vector<32x256xf32>
    %63 = arith.addf %47, %62 : vector<32x256xf32>
    %cst_10 = arith.constant 0.000000e+00 : f32
    %64 = vector.broadcast %cst_10 : f32 to vector<32x256xf32>
    %65 = arith.maximumf %63, %64 : vector<32x256xf32>
    %cst_11 = arith.constant dense<0.000000e+00> : vector<32x256xf32>
    %66 = tpu.matmul %4, %65, %cst_11 {dimension_numbers = #tpu.dot_dimension_numbers<[1], [0], [0], [1], [0, 0, 1, 1], [], []>, precision = #tpu.contract_precision<fp32>} : vector<32x32xf32>, vector<32x256xf32>, vector<32x256xf32> -> vector<32x256xf32>
    %67 = vector.broadcast %8 : vector<32x1xf32> to vector<32x256xf32>
    %68 = arith.addf %66, %67 : vector<32x256xf32>
    %cst_12 = arith.constant 0.000000e+00 : f32
    %69 = vector.broadcast %cst_12 : f32 to vector<32x256xf32>
    %70 = arith.maximumf %68, %69 : vector<32x256xf32>
    %71 = vector.extract_strided_slice %40 {offsets = [1, 0], sizes = [1, 256], strides = [1, 1]} : vector<7x256xf32> to vector<1x256xf32>
    %72 = vector.broadcast %71 : vector<1x256xf32> to vector<32x256xf32>
    %73 = arith.mulf %70, %72 : vector<32x256xf32>
    %74 = arith.addf %60, %73 : vector<32x256xf32>
    %75 = vector.extract_strided_slice %7 {offsets = [0, 2], sizes = [32, 1], strides = [1, 1]} : vector<32x7xf32> to vector<32x1xf32>
    %76 = vector.broadcast %75 : vector<32x1xf32> to vector<32x256xf32>
    %77 = arith.addf %47, %76 : vector<32x256xf32>
    %cst_13 = arith.constant 0.000000e+00 : f32
    %78 = vector.broadcast %cst_13 : f32 to vector<32x256xf32>
    %79 = arith.maximumf %77, %78 : vector<32x256xf32>
    %cst_14 = arith.constant dense<0.000000e+00> : vector<32x256xf32>
    %80 = tpu.matmul %4, %79, %cst_14 {dimension_numbers = #tpu.dot_dimension_numbers<[1], [0], [0], [1], [0, 0, 1, 1], [], []>, precision = #tpu.contract_precision<fp32>} : vector<32x32xf32>, vector<32x256xf32>, vector<32x256xf32> -> vector<32x256xf32>
    %81 = vector.broadcast %8 : vector<32x1xf32> to vector<32x256xf32>
    %82 = arith.addf %80, %81 : vector<32x256xf32>
    %cst_15 = arith.constant 0.000000e+00 : f32
    %83 = vector.broadcast %cst_15 : f32 to vector<32x256xf32>
    %84 = arith.maximumf %82, %83 : vector<32x256xf32>
    %85 = vector.extract_strided_slice %40 {offsets = [2, 0], sizes = [1, 256], strides = [1, 1]} : vector<7x256xf32> to vector<1x256xf32>
    %86 = vector.broadcast %85 : vector<1x256xf32> to vector<32x256xf32>
    %87 = arith.mulf %84, %86 : vector<32x256xf32>
    %88 = arith.addf %74, %87 : vector<32x256xf32>
    %89 = vector.extract_strided_slice %7 {offsets = [0, 3], sizes = [32, 1], strides = [1, 1]} : vector<32x7xf32> to vector<32x1xf32>
    %90 = vector.broadcast %89 : vector<32x1xf32> to vector<32x256xf32>
    %91 = arith.addf %47, %90 : vector<32x256xf32>
    %cst_16 = arith.constant 0.000000e+00 : f32
    %92 = vector.broadcast %cst_16 : f32 to vector<32x256xf32>
    %93 = arith.maximumf %91, %92 : vector<32x256xf32>
    %cst_17 = arith.constant dense<0.000000e+00> : vector<32x256xf32>
    %94 = tpu.matmul %4, %93, %cst_17 {dimension_numbers = #tpu.dot_dimension_numbers<[1], [0], [0], [1], [0, 0, 1, 1], [], []>, precision = #tpu.contract_precision<fp32>} : vector<32x32xf32>, vector<32x256xf32>, vector<32x256xf32> -> vector<32x256xf32>
    %95 = vector.broadcast %8 : vector<32x1xf32> to vector<32x256xf32>
    %96 = arith.addf %94, %95 : vector<32x256xf32>
    %cst_18 = arith.constant 0.000000e+00 : f32
    %97 = vector.broadcast %cst_18 : f32 to vector<32x256xf32>
    %98 = arith.maximumf %96, %97 : vector<32x256xf32>
    %99 = vector.extract_strided_slice %40 {offsets = [3, 0], sizes = [1, 256], strides = [1, 1]} : vector<7x256xf32> to vector<1x256xf32>
    %100 = vector.broadcast %99 : vector<1x256xf32> to vector<32x256xf32>
    %101 = arith.mulf %98, %100 : vector<32x256xf32>
    %102 = arith.addf %88, %101 : vector<32x256xf32>
    %103 = vector.extract_strided_slice %7 {offsets = [0, 4], sizes = [32, 1], strides = [1, 1]} : vector<32x7xf32> to vector<32x1xf32>
    %104 = vector.broadcast %103 : vector<32x1xf32> to vector<32x256xf32>
    %105 = arith.addf %47, %104 : vector<32x256xf32>
    %cst_19 = arith.constant 0.000000e+00 : f32
    %106 = vector.broadcast %cst_19 : f32 to vector<32x256xf32>
    %107 = arith.maximumf %105, %106 : vector<32x256xf32>
    %cst_20 = arith.constant dense<0.000000e+00> : vector<32x256xf32>
    %108 = tpu.matmul %4, %107, %cst_20 {dimension_numbers = #tpu.dot_dimension_numbers<[1], [0], [0], [1], [0, 0, 1, 1], [], []>, precision = #tpu.contract_precision<fp32>} : vector<32x32xf32>, vector<32x256xf32>, vector<32x256xf32> -> vector<32x256xf32>
    %109 = vector.broadcast %8 : vector<32x1xf32> to vector<32x256xf32>
    %110 = arith.addf %108, %109 : vector<32x256xf32>
    %cst_21 = arith.constant 0.000000e+00 : f32
    %111 = vector.broadcast %cst_21 : f32 to vector<32x256xf32>
    %112 = arith.maximumf %110, %111 : vector<32x256xf32>
    %113 = vector.extract_strided_slice %40 {offsets = [4, 0], sizes = [1, 256], strides = [1, 1]} : vector<7x256xf32> to vector<1x256xf32>
    %114 = vector.broadcast %113 : vector<1x256xf32> to vector<32x256xf32>
    %115 = arith.mulf %112, %114 : vector<32x256xf32>
    %116 = arith.addf %102, %115 : vector<32x256xf32>
    %117 = vector.extract_strided_slice %7 {offsets = [0, 5], sizes = [32, 1], strides = [1, 1]} : vector<32x7xf32> to vector<32x1xf32>
    %118 = vector.broadcast %117 : vector<32x1xf32> to vector<32x256xf32>
    %119 = arith.addf %47, %118 : vector<32x256xf32>
    %cst_22 = arith.constant 0.000000e+00 : f32
    %120 = vector.broadcast %cst_22 : f32 to vector<32x256xf32>
    %121 = arith.maximumf %119, %120 : vector<32x256xf32>
    %cst_23 = arith.constant dense<0.000000e+00> : vector<32x256xf32>
    %122 = tpu.matmul %4, %121, %cst_23 {dimension_numbers = #tpu.dot_dimension_numbers<[1], [0], [0], [1], [0, 0, 1, 1], [], []>, precision = #tpu.contract_precision<fp32>} : vector<32x32xf32>, vector<32x256xf32>, vector<32x256xf32> -> vector<32x256xf32>
    %123 = vector.broadcast %8 : vector<32x1xf32> to vector<32x256xf32>
    %124 = arith.addf %122, %123 : vector<32x256xf32>
    %cst_24 = arith.constant 0.000000e+00 : f32
    %125 = vector.broadcast %cst_24 : f32 to vector<32x256xf32>
    %126 = arith.maximumf %124, %125 : vector<32x256xf32>
    %127 = vector.extract_strided_slice %40 {offsets = [5, 0], sizes = [1, 256], strides = [1, 1]} : vector<7x256xf32> to vector<1x256xf32>
    %128 = vector.broadcast %127 : vector<1x256xf32> to vector<32x256xf32>
    %129 = arith.mulf %126, %128 : vector<32x256xf32>
    %130 = arith.addf %116, %129 : vector<32x256xf32>
    %131 = vector.extract_strided_slice %7 {offsets = [0, 6], sizes = [32, 1], strides = [1, 1]} : vector<32x7xf32> to vector<32x1xf32>
    %132 = vector.broadcast %131 : vector<32x1xf32> to vector<32x256xf32>
    %133 = arith.addf %47, %132 : vector<32x256xf32>
    %cst_25 = arith.constant 0.000000e+00 : f32
    %134 = vector.broadcast %cst_25 : f32 to vector<32x256xf32>
    %135 = arith.maximumf %133, %134 : vector<32x256xf32>
    %cst_26 = arith.constant dense<0.000000e+00> : vector<32x256xf32>
    %136 = tpu.matmul %4, %135, %cst_26 {dimension_numbers = #tpu.dot_dimension_numbers<[1], [0], [0], [1], [0, 0, 1, 1], [], []>, precision = #tpu.contract_precision<fp32>} : vector<32x32xf32>, vector<32x256xf32>, vector<32x256xf32> -> vector<32x256xf32>
    %137 = vector.broadcast %8 : vector<32x1xf32> to vector<32x256xf32>
    %138 = arith.addf %136, %137 : vector<32x256xf32>
    %cst_27 = arith.constant 0.000000e+00 : f32
    %139 = vector.broadcast %cst_27 : f32 to vector<32x256xf32>
    %140 = arith.maximumf %138, %139 : vector<32x256xf32>
    %141 = vector.extract_strided_slice %40 {offsets = [6, 0], sizes = [1, 256], strides = [1, 1]} : vector<7x256xf32> to vector<1x256xf32>
    %142 = vector.broadcast %141 : vector<1x256xf32> to vector<32x256xf32>
    %143 = arith.mulf %140, %142 : vector<32x256xf32>
    %144 = arith.addf %130, %143 : vector<32x256xf32>
    %cst_28 = arith.constant dense<0.000000e+00> : vector<8x256xf32>
    %145 = tpu.matmul %14, %144, %cst_28 {dimension_numbers = #tpu.dot_dimension_numbers<[1], [0], [0], [1], [0, 0, 1, 1], [], []>, precision = #tpu.contract_precision<fp32>} : vector<8x32xf32>, vector<32x256xf32>, vector<8x256xf32> -> vector<8x256xf32>
    %146 = vector.extract_strided_slice %145 {offsets = [0, 0], sizes = [1, 256], strides = [1, 1]} : vector<8x256xf32> to vector<1x256xf32>
    %147 = vector.broadcast %15 : vector<1x1xf32> to vector<1x256xf32>
    %148 = arith.addf %146, %147 : vector<1x256xf32>
    %c0_29 = arith.constant 0 : index
    %c0_30 = arith.constant 0 : index
    %149 = vector.load %arg3[%c0_29, %c0_30] : memref<8x256xf32, #tpu.memory_space<vmem>>, vector<7x256xf32>
    tpu.vector_store %arg3[%c0_29, %c0_30], %40 {strides = array<i32>} : memref<8x256xf32, #tpu.memory_space<vmem>>, vector<7x256xf32>,
    %c7 = arith.constant 7 : index
    %c0_31 = arith.constant 0 : index
    %150 = vector.load %arg3[%c7, %c0_31] : memref<8x256xf32, #tpu.memory_space<vmem>>, vector<1x256xf32>
    tpu.vector_store %arg3[%c7, %c0_31], %148 {strides = array<i32>} : memref<8x256xf32, #tpu.memory_space<vmem>>, vector<1x256xf32>,
    return
  }
  func.func @transform_0(%arg0: i32) -> (i32, i32) {
    %c0_i32 = arith.constant 0 : i32
    %c0_i32_0 = arith.constant 0 : i32
    return %c0_i32, %arg0 : i32, i32
  }
  func.func @transform_1(%arg0: i32) -> (i32, i32) {
    %c0_i32 = arith.constant 0 : i32
    %c0_i32_0 = arith.constant 0 : i32
    %c0_i32_1 = arith.constant 0 : i32
    return %c0_i32, %c0_i32_0 : i32, i32
  }
  func.func @transform_2(%arg0: i32) -> (i32, i32) {
    %c0_i32 = arith.constant 0 : i32
    %c0_i32_0 = arith.constant 0 : i32
    return %c0_i32, %arg0 : i32, i32
  }
}

</mosaic_0001>

<llo_original>
// kernel: tpu_custom_call.1
$region0: #{tpu_custom_call.1}
  #allocation0 [shape = 'u32[]', space=smem, size = 0x4, offset = 0x4, fixed_abs, tag = 'smem constant byte address 0x4 - core index']
  #allocation1 [shape = 'u32[72,128]{1,0:T(1,128)}', space=vmem, size = 0x9000, scoped, tag = 'internal scratch']
  %s0 = inlined_call_operand.hbm [shape: f32[2,256], index: 0, kind: input, shape index: {}]
  %s1 = inlined_call_operand.hbm [shape: f32[40,128], index: 1, kind: input, shape index: {}]
  %s2 = inlined_call_operand.hbm [shape: f32[8,256], index: 2, kind: output, shape index: {}]
  %s3 = sld [smem:[#allocation0]]
  $region26: #{tpu_custom_call.1} parent=0
    _
  %s5 = ssub.s32 1, %s3
  %s6 = scalar_select 0, %s5, %s3
  $region1: #{tpu_custom_call.1} parent=0
    #allocation2 [shape = 'u8[2048]{0}', space=vmem, size = 0x800, scoped, tag = 'input window, operand 0, single buffered']
    #allocation3 [shape = 's32[1]{0}', space=sflag, size = 0x4, scoped, tag = 'scoped memory for tpu_custom_call.1']
    #allocation4 [shape = 's32[1]{0}', space=sflag, size = 0x4, scoped, tag = 'scoped memory for tpu_custom_call.1']
    #allocation5 [shape = 'u8[20480]{0}', space=vmem, size = 0x5000, scoped, tag = 'input window, operand 1, single buffered']
    #allocation6 [shape = 's32[1]{0}', space=sflag, size = 0x4, scoped, tag = 'scoped memory for tpu_custom_call.1']
    #allocation7 [shape = 'u8[8192]{0}', space=vmem, size = 0x2000, scoped, tag = 'output window, operand 0, single buffered']
    %7 = vsyncpa [#allocation3], 0
    %8 = vsyncpa [#allocation6], 0
    %9 = vsyncpa [#allocation4], 0
    // Predicated region
    $region2: #{tpu_custom_call.1} parent=1 // pred_check
      _
    $region3: #{tpu_custom_call.1} parent=1 // pred_check_branch
      %11 = sbr.rel (0) target = $region5
    $region4: #{tpu_custom_call.1} parent=1 // pred_region
      %13 = vsyncadd [#allocation3], 0
      %s15 = sshll.u32 %s0, 4
      %s16 = int_to_ptr.hbm [resolvable:$true] %s15
      %s17 = sshll.u32 [#allocation2], 4
      %s18 = int_to_ptr.vmem [resolvable:$true] %s17
      %20 = dma.hbm_to_vmem [thread:$0]  %s16, 64, %s18, [#allocation3]
    $region5: #{tpu_custom_call.1} parent=1 // pred_fallthru
      _
    // Predicated region
    $region6: #{tpu_custom_call.1} parent=1 // pred_check
      _
    $region7: #{tpu_custom_call.1} parent=1 // pred_check_branch
      %22 = sbr.rel (0) target = $region9
    $region8: #{tpu_custom_call.1} parent=1 // pred_region
      %24 = vsyncadd [#allocation6], 0
      %s25 = sshll.u32 %s1, 4
      %s26 = int_to_ptr.hbm [resolvable:$true] %s25
      %s27 = sshll.u32 [#allocation5], 4
      %s28 = int_to_ptr.vmem [resolvable:$true] %s27
      %33 = dma.hbm_to_vmem [thread:$0]  %s26, 640, %s28, [#allocation6], 128, 128, 8
    $region9: #{tpu_custom_call.1} parent=1 // pred_fallthru
      _
    // Predicated region
    $region10: #{tpu_custom_call.1} parent=1 // pred_check
      _
    $region11: #{tpu_custom_call.1} parent=1 // pred_check_branch
      %35 = sbr.rel (0) target = $region13
    $region12: #{tpu_custom_call.1} parent=1 // pred_region
      %37 = dma.done [#allocation3], 64
    $region13: #{tpu_custom_call.1} parent=1 // pred_fallthru
      _
    // Predicated region
    $region14: #{tpu_custom_call.1} parent=1 // pred_check
      _
    $region15: #{tpu_custom_call.1} parent=1 // pred_check_branch
      %39 = sbr.rel (0) target = $region17
    $region16: #{tpu_custom_call.1} parent=1 // pred_region
      %41 = dma.done [#allocation6], 640
    $region17: #{tpu_custom_call.1} parent=1 // pred_fallthru
      _
    %v42 = vld [vmem:[#allocation2] sm:$0xf]
    %v43 = vld [vmem:[#allocation5] sm:$0xff]
    %v44 = vld [vmem:[#allocation5 + $0x8] sm:$0xff]
    %v45 = vld [vmem:[#allocation5 + $0x10] sm:$0xff]
    %v46 = vld [vmem:[#allocation5 + $0x18] sm:$0xff]
    %v47 = vld [vmem:[#allocation5 + $0x20] sm:$0xff]
    %49 = vset.pattern.permute.xlu0 42
    %50 = vperm.xlu0 %49, %v43
    %v51 = vpop.permute.xlu0 %50
    %54 = vset.pattern.permute.xlu0 42
    %55 = vperm.xlu0 %54, %v44
    %v56 = vpop.permute.xlu0 %55
    %59 = vset.pattern.permute.xlu0 42
    %60 = vperm.xlu0 %59, %v45
    %v61 = vpop.permute.xlu0 %60
    %64 = vset.pattern.permute.xlu0 42
    %65 = vperm.xlu0 %64, %v46
    %v66 = vpop.permute.xlu0 %65
    %v69 = vperm.slane %v42, 0
    %v70 = vperm.slane %v42, 2
    %v73 = vperm.slane %v69, 0
    %v74 = vperm.slane %v70, 0
    %v75 = vmul.f32 %v51, %v73
    %v76 = vmul.f32 %v51, %v74
    %v77 = vmul.f32 %v56, %v73
    %v78 = vmul.f32 %v56, %v74
    %v79 = vmul.f32 %v61, %v73
    %v80 = vmul.f32 %v61, %v74
    %v81 = vmul.f32 %v66, %v73
    %v82 = vmul.f32 %v66, %v74
    %83 = vset.pattern.permute.xlu0 43
    %84 = vperm.xlu0 %83, %v43
    %v85 = vpop.permute.xlu0 %84
    %87 = vset.pattern.permute.xlu0 43
    %88 = vperm.xlu0 %87, %v44
    %v89 = vpop.permute.xlu0 %88
    %91 = vset.pattern.permute.xlu0 43
    %92 = vperm.xlu0 %91, %v45
    %v93 = vpop.permute.xlu0 %92
    %95 = vset.pattern.permute.xlu0 43
    %96 = vperm.xlu0 %95, %v46
    %v97 = vpop.permute.xlu0 %96
    %v99 = vperm.slane %v42, 1
    %v100 = vperm.slane %v42, 3
    %v103 = vperm.slane %v99, 1
    %v104 = vperm.slane %v100, 1
    %v105 = vmul.f32 %v85, %v103
    %v106 = vmul.f32 %v85, %v104
    %v107 = vmul.f32 %v89, %v103
    %v108 = vmul.f32 %v89, %v104
    %v109 = vmul.f32 %v93, %v103
    %v110 = vmul.f32 %v93, %v104
    %v111 = vmul.f32 %v97, %v103
    %v112 = vmul.f32 %v97, %v104
    %v113 = vadd.f32 %v75, %v105
    %v114 = vadd.f32 %v76, %v106
    %v115 = vadd.f32 %v77, %v107
    %v116 = vadd.f32 %v78, %v108
    %v117 = vadd.f32 %v79, %v109
    %v118 = vadd.f32 %v80, %v110
    %v119 = vadd.f32 %v81, %v111
    %v120 = vadd.f32 %v82, %v112
    %121 = vset.pattern.permute.xlu0 44
    %122 = vperm.xlu0 %121, %v43
    %v123 = vpop.permute.xlu0 %122
    %125 = vset.pattern.permute.xlu0 44
    %126 = vperm.xlu0 %125, %v44
    %v127 = vpop.permute.xlu0 %126
    %129 = vset.pattern.permute.xlu0 44
    %130 = vperm.xlu0 %129, %v45
    %v131 = vpop.permute.xlu0 %130
    %133 = vset.pattern.permute.xlu0 44
    %134 = vperm.xlu0 %133, %v46
    %v135 = vpop.permute.xlu0 %134
    %v137 = vadd.f32 %v113, %v123
    %v138 = vadd.f32 %v114, %v123
    %v139 = vadd.f32 %v115, %v127
    %v140 = vadd.f32 %v116, %v127
    %v141 = vadd.f32 %v117, %v131
    %v142 = vadd.f32 %v118, %v131
    %v143 = vadd.f32 %v119, %v135
    %v144 = vadd.f32 %v120, %v135
    %v145 = vmax.f32 %v137, 0.0
    %v146 = vmax.f32 %v138, 0.0
    %v147 = vmax.f32 %v139, 0.0
    %v148 = vmax.f32 %v140, 0.0
    %v149 = vmax.f32 %v141, 0.0
    %v150 = vmax.f32 %v142, 0.0
    %v151 = vmax.f32 %v143, 0.0
    %v152 = vmax.f32 %v144, 0.0
    %154 = vset.pattern.permute.xlu0 32
    %155 = vperm.xlu0 %154, %v47
    %v156 = vpop.permute.xlu0 %155
    %vm158 = vcmask 261120
    %v159 = vsel %vm158, %v47, 0
    %161 = vmatpush.msra.mxu0 0.0
    %162 = vmatpush.msra.mxu0 0.0
    %163 = vmatpush.msra.mxu0 0.0
    %164 = vmatpush.msra.mxu0 0.0
    %165 = vmatpush.msra.mxu0 0.0
    %166 = vmatpush.msra.mxu0 0.0
    %167 = vmatpush.msra.mxu0 0.0
    %168 = vmatpush.msra.mxu0 0.0
    %169 = vmatpush.msra.mxu0 0.0
    %170 = vmatpush.msra.mxu0 0.0
    %171 = vmatpush.msra.mxu0 0.0
    %172 = vmatpush.msra.mxu0 0.0
    %v173 = vand.u32 %v151, 4294901760
    %174 = vmatpush.msra.mxu0 %v173
    %v175 = vand.u32 %v149, 4294901760
    %176 = vmatpush.msra.mxu0 %v175
    %v177 = vand.u32 %v147, 4294901760
    %178 = vmatpush.msra.mxu0 %v177
    %v179 = vand.u32 %v145, 4294901760
    %180 = vmatpush.msra.mxu0 %v179
    %v181 = vand.u32 %v159, 4294901760
    %v182 = vsub.f32 %v159, %v181
    %v183 = vand.u32 %v182, 4294901760
    %v184 = vsub.f32 %v182, %v183
    %v185 = vand.u32 %v184, 4294901760
    %186 = vmatmul.f32.gmra.mxu0 %v185
    %v187 = vpop.f32.mrf.mxu0
    %v188 = vadd.f32 %v156, %v187
    %189 = vdwg.mxu0
    %190 = vmatpush.msra.mxu0 0.0
    %191 = vmatpush.msra.mxu0 0.0
    %192 = vmatpush.msra.mxu0 0.0
    %193 = vmatpush.msra.mxu0 0.0
    %194 = vmatpush.msra.mxu0 0.0
    %195 = vmatpush.msra.mxu0 0.0
    %196 = vmatpush.msra.mxu0 0.0
    %197 = vmatpush.msra.mxu0 0.0
    %198 = vmatpush.msra.mxu0 0.0
    %199 = vmatpush.msra.mxu0 0.0
    %200 = vmatpush.msra.mxu0 0.0
    %201 = vmatpush.msra.mxu0 0.0
    %v202 = vand.u32 %v151, 4294901760
    %v203 = vsub.f32 %v151, %v202
    %v204 = vand.u32 %v203, 4294901760
    %v205 = vsub.f32 %v203, %v204
    %v206 = vand.u32 %v205, 4294901760
    %207 = vmatpush.msra.mxu0 %v206
    %v208 = vand.u32 %v149, 4294901760
    %v209 = vsub.f32 %v149, %v208
    %v210 = vand.u32 %v209, 4294901760
    %v211 = vsub.f32 %v209, %v210
    %v212 = vand.u32 %v211, 4294901760
    %213 = vmatpush.msra.mxu0 %v212
    %v214 = vand.u32 %v147, 4294901760
    %v215 = vsub.f32 %v147, %v214
    %v216 = vand.u32 %v215, 4294901760
    %v217 = vsub.f32 %v215, %v216
    %v218 = vand.u32 %v217, 4294901760
    %219 = vmatpush.msra.mxu0 %v218
    %v220 = vand.u32 %v145, 4294901760
    %v221 = vsub.f32 %v145, %v220
    %v222 = vand.u32 %v221, 4294901760
    %v223 = vsub.f32 %v221, %v222
    %v224 = vand.u32 %v223, 4294901760
    %225 = vmatpush.msra.mxu0 %v224
    %v226 = vand.u32 %v159, 4294901760
    %227 = vmatmul.f32.gmra.mxu0 %v226
    %v228 = vpop.f32.mrf.mxu0
    %v229 = vadd.f32 %v188, %v228
    %230 = vdwg.mxu0
    %231 = vmatpush.msra.mxu0 0.0
    %232 = vmatpush.msra.mxu0 0.0
    %233 = vmatpush.msra.mxu0 0.0
    %234 = vmatpush.msra.mxu0 0.0
    %235 = vmatpush.msra.mxu0 0.0
    %236 = vmatpush.msra.mxu0 0.0
    %237 = vmatpush.msra.mxu0 0.0
    %238 = vmatpush.msra.mxu0 0.0
    %239 = vmatpush.msra.mxu0 0.0
    %240 = vmatpush.msra.mxu0 0.0
    %241 = vmatpush.msra.mxu0 0.0
    %242 = vmatpush.msra.mxu0 0.0
    %v243 = vand.u32 %v151, 4294901760
    %v244 = vsub.f32 %v151, %v243
    %245 = vmatpush.msra.mxu0 %v244
    %v246 = vand.u32 %v149, 4294901760
    %v247 = vsub.f32 %v149, %v246
    %248 = vmatpush.msra.mxu0 %v247
    %v249 = vand.u32 %v147, 4294901760
    %v250 = vsub.f32 %v147, %v249
    %251 = vmatpush.msra.mxu0 %v250
    %v252 = vand.u32 %v145, 4294901760
    %v253 = vsub.f32 %v145, %v252
    %254 = vmatpush.msra.mxu0 %v253
    %v255 = vand.u32 %v159, 4294901760
    %v256 = vsub.f32 %v159, %v255
    %257 = vmatmul.f32.gmra.mxu0 %v256
    %v258 = vpop.f32.mrf.mxu0
    %v259 = vadd.f32 %v229, %v258
    %260 = vdwg.mxu0
    %261 = vmatpush.msra.mxu0 0.0
    %262 = vmatpush.msra.mxu0 0.0
    %263 = vmatpush.msra.mxu0 0.0
    %264 = vmatpush.msra.mxu0 0.0
    %265 = vmatpush.msra.mxu0 0.0
    %266 = vmatpush.msra.mxu0 0.0
    %267 = vmatpush.msra.mxu0 0.0
    %268 = vmatpush.msra.mxu0 0.0
    %269 = vmatpush.msra.mxu0 0.0
    %270 = vmatpush.msra.mxu0 0.0
    %271 = vmatpush.msra.mxu0 0.0
    %272 = vmatpush.msra.mxu0 0.0
    %v273 = vand.u32 %v151, 4294901760
    %274 = vmatpush.msra.mxu0 %v273
    %v275 = vand.u32 %v149, 4294901760
    %276 = vmatpush.msra.mxu0 %v275
    %v277 = vand.u32 %v147, 4294901760
    %278 = vmatpush.msra.mxu0 %v277
    %v279 = vand.u32 %v145, 4294901760
    %280 = vmatpush.msra.mxu0 %v279
    %v281 = vand.u32 %v159, 4294901760
    %v282 = vsub.f32 %v159, %v281
    %v283 = vand.u32 %v282, 4294901760
    %284 = vmatmul.f32.gmra.mxu0 %v283
    %v285 = vpop.f32.mrf.mxu0
    %v286 = vadd.f32 %v259, %v285
    %287 = vdwg.mxu0
    %288 = vmatpush.msra.mxu0 0.0
    %289 = vmatpush.msra.mxu0 0.0
    %290 = vmatpush.msra.mxu0 0.0
    %291 = vmatpush.msra.mxu0 0.0
    %292 = vmatpush.msra.mxu0 0.0
    %293 = vmatpush.msra.mxu0 0.0
    %294 = vmatpush.msra.mxu0 0.0
    %295 = vmatpush.msra.mxu0 0.0
    %296 = vmatpush.msra.mxu0 0.0
    %297 = vmatpush.msra.mxu0 0.0
    %298 = vmatpush.msra.mxu0 0.0
    %299 = vmatpush.msra.mxu0 0.0
    %v300 = vand.u32 %v151, 4294901760
    %v301 = vsub.f32 %v151, %v300
    %v302 = vand.u32 %v301, 4294901760
    %303 = vmatpush.msra.mxu0 %v302
    %v304 = vand.u32 %v149, 4294901760
    %v305 = vsub.f32 %v149, %v304
    %v306 = vand.u32 %v305, 4294901760
    %307 = vmatpush.msra.mxu0 %v306
    %v308 = vand.u32 %v147, 4294901760
    %v309 = vsub.f32 %v147, %v308
    %v310 = vand.u32 %v309, 4294901760
    %311 = vmatpush.msra.mxu0 %v310
    %v312 = vand.u32 %v145, 4294901760
    %v313 = vsub.f32 %v145, %v312
    %v314 = vand.u32 %v313, 4294901760
    %315 = vmatpush.msra.mxu0 %v314
    %v316 = vand.u32 %v159, 4294901760
    %317 = vmatmul.f32.gmra.mxu0 %v316
    %v318 = vpop.f32.mrf.mxu0
    %v319 = vadd.f32 %v286, %v318
    %320 = vdwg.mxu0
    %321 = vmatpush.msra.mxu0 0.0
    %322 = vmatpush.msra.mxu0 0.0
    %323 = vmatpush.msra.mxu0 0.0
    %324 = vmatpush.msra.mxu0 0.0
    %325 = vmatpush.msra.mxu0 0.0
    %326 = vmatpush.msra.mxu0 0.0
    %327 = vmatpush.msra.mxu0 0.0
    %328 = vmatpush.msra.mxu0 0.0
    %329 = vmatpush.msra.mxu0 0.0
    %330 = vmatpush.msra.mxu0 0.0
    %331 = vmatpush.msra.mxu0 0.0
    %332 = vmatpush.msra.mxu0 0.0
    %v333 = vand.u32 %v151, 4294901760
    %334 = vmatpush.msra.mxu0 %v333
    %v335 = vand.u32 %v149, 4294901760
    %336 = vmatpush.msra.mxu0 %v335
    %v337 = vand.u32 %v147, 4294901760
    %338 = vmatpush.msra.mxu0 %v337
    %v339 = vand.u32 %v145, 4294901760
    %340 = vmatpush.msra.mxu0 %v339
    %v341 = vand.u32 %v159, 4294901760
    %342 = vmatmul.f32.gmra.mxu0 %v341
    %v343 = vpop.f32.mrf.mxu0
    %v344 = vadd.f32 %v319, %v343
    %345 = vdwg.mxu0
    %346 = vmatpush.msra.mxu0 0.0
    %347 = vmatpush.msra.mxu0 0.0
    %348 = vmatpush.msra.mxu0 0.0
    %349 = vmatpush.msra.mxu0 0.0
    %350 = vmatpush.msra.mxu0 0.0
    %351 = vmatpush.msra.mxu0 0.0
    %352 = vmatpush.msra.mxu0 0.0
    %353 = vmatpush.msra.mxu0 0.0
    %354 = vmatpush.msra.mxu0 0.0
    %355 = vmatpush.msra.mxu0 0.0
    %356 = vmatpush.msra.mxu0 0.0
    %357 = vmatpush.msra.mxu0 0.0
    %v358 = vand.u32 %v152, 4294901760
    %359 = vmatpush.msra.mxu0 %v358
    %v360 = vand.u32 %v150, 4294901760
    %361 = vmatpush.msra.mxu0 %v360
    %v362 = vand.u32 %v148, 4294901760
    %363 = vmatpush.msra.mxu0 %v362
    %v364 = vand.u32 %v146, 4294901760
    %365 = vmatpush.msra.mxu0 %v364
    %v366 = vand.u32 %v159, 4294901760
    %v367 = vsub.f32 %v159, %v366
    %v368 = vand.u32 %v367, 4294901760
    %v369 = vsub.f32 %v367, %v368
    %v370 = vand.u32 %v369, 4294901760
    %371 = vmatmul.f32.gmra.mxu0 %v370
    %v372 = vpop.f32.mrf.mxu0
    %v373 = vadd.f32 %v156, %v372
    %374 = vdwg.mxu0
    %375 = vmatpush.msra.mxu0 0.0
    %376 = vmatpush.msra.mxu0 0.0
    %377 = vmatpush.msra.mxu0 0.0
    %378 = vmatpush.msra.mxu0 0.0
    %379 = vmatpush.msra.mxu0 0.0
    %380 = vmatpush.msra.mxu0 0.0
    %381 = vmatpush.msra.mxu0 0.0
    %382 = vmatpush.msra.mxu0 0.0
    %383 = vmatpush.msra.mxu0 0.0
    %384 = vmatpush.msra.mxu0 0.0
    %385 = vmatpush.msra.mxu0 0.0
    %386 = vmatpush.msra.mxu0 0.0
    %v387 = vand.u32 %v152, 4294901760
    %v388 = vsub.f32 %v152, %v387
    %v389 = vand.u32 %v388, 4294901760
    %v390 = vsub.f32 %v388, %v389
    %v391 = vand.u32 %v390, 4294901760
    %392 = vmatpush.msra.mxu0 %v391
    %v393 = vand.u32 %v150, 4294901760
    %v394 = vsub.f32 %v150, %v393
    %v395 = vand.u32 %v394, 4294901760
    %v396 = vsub.f32 %v394, %v395
    %v397 = vand.u32 %v396, 4294901760
    %398 = vmatpush.msra.mxu0 %v397
    %v399 = vand.u32 %v148, 4294901760
    %v400 = vsub.f32 %v148, %v399
    %v401 = vand.u32 %v400, 4294901760
    %v402 = vsub.f32 %v400, %v401
    %v403 = vand.u32 %v402, 4294901760
    %404 = vmatpush.msra.mxu0 %v403
    %v405 = vand.u32 %v146, 4294901760
    %v406 = vsub.f32 %v146, %v405
    %v407 = vand.u32 %v406, 4294901760
    %v408 = vsub.f32 %v406, %v407
    %v409 = vand.u32 %v408, 4294901760
    %410 = vmatpush.msra.mxu0 %v409
    %v411 = vand.u32 %v159, 4294901760
    %412 = vmatmul.f32.gmra.mxu0 %v411
    %v413 = vpop.f32.mrf.mxu0
    %v414 = vadd.f32 %v373, %v413
    %415 = vdwg.mxu0
    %416 = vmatpush.msra.mxu0 0.0
    %417 = vmatpush.msra.mxu0 0.0
    %418 = vmatpush.msra.mxu0 0.0
    %419 = vmatpush.msra.mxu0 0.0
    %420 = vmatpush.msra.mxu0 0.0
    %421 = vmatpush.msra.mxu0 0.0
    %422 = vmatpush.msra.mxu0 0.0
    %423 = vmatpush.msra.mxu0 0.0
    %424 = vmatpush.msra.mxu0 0.0
    %425 = vmatpush.msra.mxu0 0.0
    %426 = vmatpush.msra.mxu0 0.0
    %427 = vmatpush.msra.mxu0 0.0
    %v428 = vand.u32 %v152, 4294901760
    %v429 = vsub.f32 %v152, %v428
    %430 = vmatpush.msra.mxu0 %v429
    %v431 = vand.u32 %v150, 4294901760
    %v432 = vsub.f32 %v150, %v431
    %433 = vmatpush.msra.mxu0 %v432
    %v434 = vand.u32 %v148, 4294901760
    %v435 = vsub.f32 %v148, %v434
    %436 = vmatpush.msra.mxu0 %v435
    %v437 = vand.u32 %v146, 4294901760
    %v438 = vsub.f32 %v146, %v437
    %439 = vmatpush.msra.mxu0 %v438
    %v440 = vand.u32 %v159, 4294901760
    %v441 = vsub.f32 %v159, %v440
    %442 = vmatmul.f32.gmra.mxu0 %v441
    %v443 = vpop.f32.mrf.mxu0
    %v444 = vadd.f32 %v414, %v443
    %445 = vdwg.mxu0
    %446 = vmatpush.msra.mxu0 0.0
    %447 = vmatpush.msra.mxu0 0.0
    %448 = vmatpush.msra.mxu0 0.0
    %449 = vmatpush.msra.mxu0 0.0
    %450 = vmatpush.msra.mxu0 0.0
    %451 = vmatpush.msra.mxu0 0.0
    %452 = vmatpush.msra.mxu0 0.0
    %453 = vmatpush.msra.mxu0 0.0
    %454 = vmatpush.msra.mxu0 0.0
    %455 = vmatpush.msra.mxu0 0.0
    %456 = vmatpush.msra.mxu0 0.0
    %457 = vmatpush.msra.mxu0 0.0
    %v458 = vand.u32 %v152, 4294901760
    %459 = vmatpush.msra.mxu0 %v458
    %v460 = vand.u32 %v150, 4294901760
    %461 = vmatpush.msra.mxu0 %v460
    %v462 = vand.u32 %v148, 4294901760
    %463 = vmatpush.msra.mxu0 %v462
    %v464 = vand.u32 %v146, 4294901760
    %465 = vmatpush.msra.mxu0 %v464
    %v466 = vand.u32 %v159, 4294901760
    %v467 = vsub.f32 %v159, %v466
    %v468 = vand.u32 %v467, 4294901760
    %469 = vmatmul.f32.gmra.mxu0 %v468
    %v470 = vpop.f32.mrf.mxu0
    %v471 = vadd.f32 %v444, %v470
    %472 = vdwg.mxu0
    %473 = vmatpush.msra.mxu0 0.0
    %474 = vmatpush.msra.mxu0 0.0
    %475 = vmatpush.msra.mxu0 0.0
    %476 = vmatpush.msra.mxu0 0.0
    %477 = vmatpush.msra.mxu0 0.0
    %478 = vmatpush.msra.mxu0 0.0
    %479 = vmatpush.msra.mxu0 0.0
    %480 = vmatpush.msra.mxu0 0.0
    %481 = vmatpush.msra.mxu0 0.0
    %482 = vmatpush.msra.mxu0 0.0
    %483 = vmatpush.msra.mxu0 0.0
    %484 = vmatpush.msra.mxu0 0.0
    %v485 = vand.u32 %v152, 4294901760
    %v486 = vsub.f32 %v152, %v485
    %v487 = vand.u32 %v486, 4294901760
    %488 = vmatpush.msra.mxu0 %v487
    %v489 = vand.u32 %v150, 4294901760
    %v490 = vsub.f32 %v150, %v489
    %v491 = vand.u32 %v490, 4294901760
    %492 = vmatpush.msra.mxu0 %v491
    %v493 = vand.u32 %v148, 4294901760
    %v494 = vsub.f32 %v148, %v493
    %v495 = vand.u32 %v494, 4294901760
    %496 = vmatpush.msra.mxu0 %v495
    %v497 = vand.u32 %v146, 4294901760
    %v498 = vsub.f32 %v146, %v497
    %v499 = vand.u32 %v498, 4294901760
    %500 = vmatpush.msra.mxu0 %v499
    %v501 = vand.u32 %v159, 4294901760
    %502 = vmatmul.f32.gmra.mxu0 %v501
    %v503 = vpop.f32.mrf.mxu0
    %v504 = vadd.f32 %v471, %v503
    %505 = vdwg.mxu0
    %506 = vmatpush.msra.mxu0 0.0
    %507 = vmatpush.msra.mxu0 0.0
    %508 = vmatpush.msra.mxu0 0.0
    %509 = vmatpush.msra.mxu0 0.0
    %510 = vmatpush.msra.mxu0 0.0
    %511 = vmatpush.msra.mxu0 0.0
    %512 = vmatpush.msra.mxu0 0.0
    %513 = vmatpush.msra.mxu0 0.0
    %514 = vmatpush.msra.mxu0 0.0
    %515 = vmatpush.msra.mxu0 0.0
    %516 = vmatpush.msra.mxu0 0.0
    %517 = vmatpush.msra.mxu0 0.0
    %v518 = vand.u32 %v152, 4294901760
    %519 = vmatpush.msra.mxu0 %v518
    %v520 = vand.u32 %v150, 4294901760
    %521 = vmatpush.msra.mxu0 %v520
    %v522 = vand.u32 %v148, 4294901760
    %523 = vmatpush.msra.mxu0 %v522
    %v524 = vand.u32 %v146, 4294901760
    %525 = vmatpush.msra.mxu0 %v524
    %v526 = vand.u32 %v159, 4294901760
    %527 = vmatmul.f32.gmra.mxu0 %v526
    %v528 = vpop.f32.mrf.mxu0
    %v529 = vadd.f32 %v504, %v528
    %530 = vdwg.mxu0
    %vm531 = vcmask 1046528
    %v532 = vsel %vm531, %v344, -inf
    %v533 = vrot.slane %v532, 4
    %v534 = vmax.f32 %v532, %v533
    %v535 = vrot.slane %v534, 2
    %v536 = vmax.f32 %v534, %v535
    %v537 = vrot.slane %v536, 1
    %v538 = vmax.f32 %v536, %v537
    %v539 = vsel %vm531, %v529, -inf
    %v540 = vrot.slane %v539, 4
    %v541 = vmax.f32 %v539, %v540
    %v542 = vrot.slane %v541, 2
    %v543 = vmax.f32 %v541, %v542
    %v544 = vrot.slane %v543, 1
    %v545 = vmax.f32 %v543, %v544
    %v546 = vsub.f32 %v344, %v538
    %v547 = vsub.f32 %v529, %v545
    %v548 = vmul.f32 %v546, 1.442695
    %v549 = vpow.pop %v548
    %v550 = vmul.f32 %v547, 1.442695
    %v551 = vpow.pop %v550
    %v552 = vsel %vm531, %v549, 0.0
    %v553 = vrot.slane %v552, 4
    %v554 = vadd.f32 %v552, %v553
    %v555 = vrot.slane %v554, 2
    %v556 = vadd.f32 %v554, %v555
    %v557 = vrot.slane %v556, 1
    %v558 = vadd.f32 %v556, %v557
    %v559 = vsel %vm531, %v551, 0.0
    %v560 = vrot.slane %v559, 4
    %v561 = vadd.f32 %v559, %v560
    %v562 = vrot.slane %v561, 2
    %v563 = vadd.f32 %v561, %v562
    %v564 = vrot.slane %v563, 1
    %v565 = vadd.f32 %v563, %v564
    %v566 = vrcp.pop %v558
    %v567 = vmul.f32 %v558, %v566
    %v568 = vsub.f32 1.0, %v567
    %v569 = vmul.f32 %v566, %v568
    %v570 = vadd.f32 %v566, %v569
    %vm571 = vweird.f32 %v558
    %vm572 = vweird.f32 %v566
    %vm573 = vmor %vm571, %vm572
    %v574 = vsel %vm573, %v566, %v570
    %v575 = vand.u32 2147483647, %v558
    %vm576 = vcmp.eq.f32.partialorder %v575, 8.507059e+37
    %v577 = vand.u32 %v558, 2147483648
    %v578 = vor.u32 1.1754944e-38, %v577
    %v579 = vsel %vm576, %v578, %v574
    %v580 = vmul.f32 1.0, %v579
    %v581 = vrcp.pop %v565
    %v582 = vmul.f32 %v565, %v581
    %v583 = vsub.f32 1.0, %v582
    %v584 = vmul.f32 %v581, %v583
    %v585 = vadd.f32 %v581, %v584
    %vm586 = vweird.f32 %v565
    %vm587 = vweird.f32 %v581
    %vm588 = vmor %vm586, %vm587
    %v589 = vsel %vm588, %v581, %v585
    %v590 = vand.u32 2147483647, %v565
    %vm591 = vcmp.eq.f32.partialorder %v590, 8.507059e+37
    %v592 = vand.u32 %v565, 2147483648
    %v593 = vor.u32 1.1754944e-38, %v592
    %v594 = vsel %vm591, %v593, %v589
    %v595 = vmul.f32 1.0, %v594
    %v596 = vmul.f32 %v549, %v580
    %v597 = vmul.f32 %v551, %v595
    %598 = vset.pattern.permute.xlu0 32
    %599 = vperm.xlu0 %598, %v43
    %v600 = vpop.permute.xlu0 %599
    %602 = vset.pattern.permute.xlu0 32
    %603 = vperm.xlu0 %602, %v44
    %v604 = vpop.permute.xlu0 %603
    %606 = vset.pattern.permute.xlu0 32
    %607 = vperm.xlu0 %606, %v45
    %v608 = vpop.permute.xlu0 %607
    %610 = vset.pattern.permute.xlu0 32
    %611 = vperm.xlu0 %610, %v46
    %v612 = vpop.permute.xlu0 %611
    %v614 = vmul.f32 %v600, %v73
    %v615 = vmul.f32 %v600, %v74
    %v616 = vmul.f32 %v604, %v73
    %v617 = vmul.f32 %v604, %v74
    %v618 = vmul.f32 %v608, %v73
    %v619 = vmul.f32 %v608, %v74
    %v620 = vmul.f32 %v612, %v73
    %v621 = vmul.f32 %v612, %v74
    %622 = vset.pattern.permute.xlu0 33
    %623 = vperm.xlu0 %622, %v43
    %v624 = vpop.permute.xlu0 %623
    %626 = vset.pattern.permute.xlu0 33
    %627 = vperm.xlu0 %626, %v44
    %v628 = vpop.permute.xlu0 %627
    %630 = vset.pattern.permute.xlu0 33
    %631 = vperm.xlu0 %630, %v45
    %v632 = vpop.permute.xlu0 %631
    %634 = vset.pattern.permute.xlu0 33
    %635 = vperm.xlu0 %634, %v46
    %v636 = vpop.permute.xlu0 %635
    %v638 = vmul.f32 %v624, %v103
    %v639 = vmul.f32 %v624, %v104
    %v640 = vmul.f32 %v628, %v103
    %v641 = vmul.f32 %v628, %v104
    %v642 = vmul.f32 %v632, %v103
    %v643 = vmul.f32 %v632, %v104
    %v644 = vmul.f32 %v636, %v103
    %v645 = vmul.f32 %v636, %v104
    %v646 = vadd.f32 %v614, %v638
    %v647 = vadd.f32 %v615, %v639
    %v648 = vadd.f32 %v616, %v640
    %v649 = vadd.f32 %v617, %v641
    %v650 = vadd.f32 %v618, %v642
    %v651 = vadd.f32 %v619, %v643
    %v652 = vadd.f32 %v620, %v644
    %v653 = vadd.f32 %v621, %v645
    %654 = vset.pattern.permute.xlu0 34
    %655 = vperm.xlu0 %654, %v43
    %v656 = vpop.permute.xlu0 %655
    %658 = vset.pattern.permute.xlu0 34
    %659 = vperm.xlu0 %658, %v44
    %v660 = vpop.permute.xlu0 %659
    %662 = vset.pattern.permute.xlu0 34
    %663 = vperm.xlu0 %662, %v45
    %v664 = vpop.permute.xlu0 %663
    %666 = vset.pattern.permute.xlu0 34
    %667 = vperm.xlu0 %666, %v46
    %v668 = vpop.permute.xlu0 %667
    %v670 = vadd.f32 %v646, %v656
    %v671 = vadd.f32 %v647, %v656
    %v672 = vadd.f32 %v648, %v660
    %v673 = vadd.f32 %v649, %v660
    %v674 = vadd.f32 %v650, %v664
    %v675 = vadd.f32 %v651, %v664
    %v676 = vadd.f32 %v652, %v668
    %v677 = vadd.f32 %v653, %v668
    %v678 = vmax.f32 %v670, 0.0
    %v679 = vmax.f32 %v671, 0.0
    %v680 = vmax.f32 %v672, 0.0
    %v681 = vmax.f32 %v673, 0.0
    %v682 = vmax.f32 %v674, 0.0
    %v683 = vmax.f32 %v675, 0.0
    %v684 = vmax.f32 %v676, 0.0
    %v685 = vmax.f32 %v677, 0.0
    %686 = vset.pattern.permute.xlu0 41
    %687 = vperm.xlu0 %686, %v43
    %v688 = vpop.permute.xlu0 %687
    %690 = vset.pattern.permute.xlu0 41
    %691 = vperm.xlu0 %690, %v44
    %v692 = vpop.permute.xlu0 %691
    %694 = vset.pattern.permute.xlu0 41
    %695 = vperm.xlu0 %694, %v45
    %v696 = vpop.permute.xlu0 %695
    %698 = vset.pattern.permute.xlu0 41
    %699 = vperm.xlu0 %698, %v46
    %v700 = vpop.permute.xlu0 %699
    %v702 = vsel %vm158, %v43, 0
    %v704 = vsel %vm158, %v44, 0
    %v706 = vsel %vm158, %v45, 0
    %v708 = vsel %vm158, %v46, 0
    %710 = vmatpush.msra.mxu0 0.0
    %711 = vmatpush.msra.mxu0 0.0
    %712 = vmatpush.msra.mxu0 0.0
    %713 = vmatpush.msra.mxu0 0.0
    %714 = vmatpush.msra.mxu0 0.0
    %715 = vmatpush.msra.mxu0 0.0
    %716 = vmatpush.msra.mxu0 0.0
    %717 = vmatpush.msra.mxu0 0.0
    %718 = vmatpush.msra.mxu0 0.0
    %719 = vmatpush.msra.mxu0 0.0
    %720 = vmatpush.msra.mxu0 0.0
    %721 = vmatpush.msra.mxu0 0.0
    %v722 = vand.u32 %v684, 4294901760
    %723 = vmatpush.msra.mxu0 %v722
    %v724 = vand.u32 %v682, 4294901760
    %725 = vmatpush.msra.mxu0 %v724
    %v726 = vand.u32 %v680, 4294901760
    %727 = vmatpush.msra.mxu0 %v726
    %v728 = vand.u32 %v678, 4294901760
    %729 = vmatpush.msra.mxu0 %v728
    %v730 = vand.u32 %v702, 4294901760
    %v731 = vsub.f32 %v702, %v730
    %v732 = vand.u32 %v731, 4294901760
    %v733 = vsub.f32 %v731, %v732
    %v734 = vand.u32 %v733, 4294901760
    %735 = vmatmul.f32.gmra.mxu0 %v734
    %v736 = vpop.f32.mrf.mxu0
    %v737 = vadd.f32 %v688, %v736
    %v738 = vand.u32 %v704, 4294901760
    %v739 = vsub.f32 %v704, %v738
    %v740 = vand.u32 %v739, 4294901760
    %v741 = vsub.f32 %v739, %v740
    %v742 = vand.u32 %v741, 4294901760
    %743 = vmatmul.f32.gmra.mxu0 %v742
    %v744 = vpop.f32.mrf.mxu0
    %v745 = vadd.f32 %v692, %v744
    %v746 = vand.u32 %v706, 4294901760
    %v747 = vsub.f32 %v706, %v746
    %v748 = vand.u32 %v747, 4294901760
    %v749 = vsub.f32 %v747, %v748
    %v750 = vand.u32 %v749, 4294901760
    %751 = vmatmul.f32.gmra.mxu0 %v750
    %v752 = vpop.f32.mrf.mxu0
    %v753 = vadd.f32 %v696, %v752
    %v754 = vand.u32 %v708, 4294901760
    %v755 = vsub.f32 %v708, %v754
    %v756 = vand.u32 %v755, 4294901760
    %v757 = vsub.f32 %v755, %v756
    %v758 = vand.u32 %v757, 4294901760
    %759 = vmatmul.f32.gmra.mxu0 %v758
    %v760 = vpop.f32.mrf.mxu0
    %v761 = vadd.f32 %v700, %v760
    %762 = vdwg.mxu0
    %763 = vmatpush.msra.mxu0 0.0
    %764 = vmatpush.msra.mxu0 0.0
    %765 = vmatpush.msra.mxu0 0.0
    %766 = vmatpush.msra.mxu0 0.0
    %767 = vmatpush.msra.mxu0 0.0
    %768 = vmatpush.msra.mxu0 0.0
    %769 = vmatpush.msra.mxu0 0.0
    %770 = vmatpush.msra.mxu0 0.0
    %771 = vmatpush.msra.mxu0 0.0
    %772 = vmatpush.msra.mxu0 0.0
    %773 = vmatpush.msra.mxu0 0.0
    %774 = vmatpush.msra.mxu0 0.0
    %v775 = vand.u32 %v684, 4294901760
    %v776 = vsub.f32 %v684, %v775
    %v777 = vand.u32 %v776, 4294901760
    %v778 = vsub.f32 %v776, %v777
    %v779 = vand.u32 %v778, 4294901760
    %780 = vmatpush.msra.mxu0 %v779
    %v781 = vand.u32 %v682, 4294901760
    %v782 = vsub.f32 %v682, %v781
    %v783 = vand.u32 %v782, 4294901760
    %v784 = vsub.f32 %v782, %v783
    %v785 = vand.u32 %v784, 4294901760
    %786 = vmatpush.msra.mxu0 %v785
    %v787 = vand.u32 %v680, 4294901760
    %v788 = vsub.f32 %v680, %v787
    %v789 = vand.u32 %v788, 4294901760
    %v790 = vsub.f32 %v788, %v789
    %v791 = vand.u32 %v790, 4294901760
    %792 = vmatpush.msra.mxu0 %v791
    %v793 = vand.u32 %v678, 4294901760
    %v794 = vsub.f32 %v678, %v793
    %v795 = vand.u32 %v794, 4294901760
    %v796 = vsub.f32 %v794, %v795
    %v797 = vand.u32 %v796, 4294901760
    %798 = vmatpush.msra.mxu0 %v797
    %v799 = vand.u32 %v702, 4294901760
    %800 = vmatmul.f32.gmra.mxu0 %v799
    %v801 = vpop.f32.mrf.mxu0
    %v802 = vadd.f32 %v737, %v801
    %v803 = vand.u32 %v704, 4294901760
    %804 = vmatmul.f32.gmra.mxu0 %v803
    %v805 = vpop.f32.mrf.mxu0
    %v806 = vadd.f32 %v745, %v805
    %v807 = vand.u32 %v706, 4294901760
    %808 = vmatmul.f32.gmra.mxu0 %v807
    %v809 = vpop.f32.mrf.mxu0
    %v810 = vadd.f32 %v753, %v809
    %v811 = vand.u32 %v708, 4294901760
    %812 = vmatmul.f32.gmra.mxu0 %v811
    %v813 = vpop.f32.mrf.mxu0
    %v814 = vadd.f32 %v761, %v813
    %815 = vdwg.mxu0
    %816 = vmatpush.msra.mxu0 0.0
    %817 = vmatpush.msra.mxu0 0.0
    %818 = vmatpush.msra.mxu0 0.0
    %819 = vmatpush.msra.mxu0 0.0
    %820 = vmatpush.msra.mxu0 0.0
    %821 = vmatpush.msra.mxu0 0.0
    %822 = vmatpush.msra.mxu0 0.0
    %823 = vmatpush.msra.mxu0 0.0
    %824 = vmatpush.msra.mxu0 0.0
    %825 = vmatpush.msra.mxu0 0.0
    %826 = vmatpush.msra.mxu0 0.0
    %827 = vmatpush.msra.mxu0 0.0
    %v828 = vand.u32 %v684, 4294901760
    %v829 = vsub.f32 %v684, %v828
    %830 = vmatpush.msra.mxu0 %v829
    %v831 = vand.u32 %v682, 4294901760
    %v832 = vsub.f32 %v682, %v831
    %833 = vmatpush.msra.mxu0 %v832
    %v834 = vand.u32 %v680, 4294901760
    %v835 = vsub.f32 %v680, %v834
    %836 = vmatpush.msra.mxu0 %v835
    %v837 = vand.u32 %v678, 4294901760
    %v838 = vsub.f32 %v678, %v837
    %839 = vmatpush.msra.mxu0 %v838
    %v840 = vand.u32 %v702, 4294901760
    %v841 = vsub.f32 %v702, %v840
    %842 = vmatmul.f32.gmra.mxu0 %v841
    %v843 = vpop.f32.mrf.mxu0
    %v844 = vadd.f32 %v802, %v843
    %v845 = vand.u32 %v704, 4294901760
    %v846 = vsub.f32 %v704, %v845
    %847 = vmatmul.f32.gmra.mxu0 %v846
    %v848 = vpop.f32.mrf.mxu0
    %v849 = vadd.f32 %v806, %v848
    %v850 = vand.u32 %v706, 4294901760
    %v851 = vsub.f32 %v706, %v850
    %852 = vmatmul.f32.gmra.mxu0 %v851
    %v853 = vpop.f32.mrf.mxu0
    %v854 = vadd.f32 %v810, %v853
    %v855 = vand.u32 %v708, 4294901760
    %v856 = vsub.f32 %v708, %v855
    %857 = vmatmul.f32.gmra.mxu0 %v856
    %v858 = vpop.f32.mrf.mxu0
    %v859 = vadd.f32 %v814, %v858
    %860 = vdwg.mxu0
    %861 = vmatpush.msra.mxu0 0.0
    %862 = vmatpush.msra.mxu0 0.0
    %863 = vmatpush.msra.mxu0 0.0
    %864 = vmatpush.msra.mxu0 0.0
    %865 = vmatpush.msra.mxu0 0.0
    %866 = vmatpush.msra.mxu0 0.0
    %867 = vmatpush.msra.mxu0 0.0
    %868 = vmatpush.msra.mxu0 0.0
    %869 = vmatpush.msra.mxu0 0.0
    %870 = vmatpush.msra.mxu0 0.0
    %871 = vmatpush.msra.mxu0 0.0
    %872 = vmatpush.msra.mxu0 0.0
    %v873 = vand.u32 %v684, 4294901760
    %874 = vmatpush.msra.mxu0 %v873
    %v875 = vand.u32 %v682, 4294901760
    %876 = vmatpush.msra.mxu0 %v875
    %v877 = vand.u32 %v680, 4294901760
    %878 = vmatpush.msra.mxu0 %v877
    %v879 = vand.u32 %v678, 4294901760
    %880 = vmatpush.msra.mxu0 %v879
    %v881 = vand.u32 %v702, 4294901760
    %v882 = vsub.f32 %v702, %v881
    %v883 = vand.u32 %v882, 4294901760
    %884 = vmatmul.f32.gmra.mxu0 %v883
    %v885 = vpop.f32.mrf.mxu0
    %v886 = vadd.f32 %v844, %v885
    %v887 = vand.u32 %v704, 4294901760
    %v888 = vsub.f32 %v704, %v887
    %v889 = vand.u32 %v888, 4294901760
    %890 = vmatmul.f32.gmra.mxu0 %v889
    %v891 = vpop.f32.mrf.mxu0
    %v892 = vadd.f32 %v849, %v891
    %v893 = vand.u32 %v706, 4294901760
    %v894 = vsub.f32 %v706, %v893
    %v895 = vand.u32 %v894, 4294901760
    %896 = vmatmul.f32.gmra.mxu0 %v895
    %v897 = vpop.f32.mrf.mxu0
    %v898 = vadd.f32 %v854, %v897
    %v899 = vand.u32 %v708, 4294901760
    %v900 = vsub.f32 %v708, %v899
    %v901 = vand.u32 %v900, 4294901760
    %902 = vmatmul.f32.gmra.mxu0 %v901
    %v903 = vpop.f32.mrf.mxu0
    %v904 = vadd.f32 %v859, %v903
    %905 = vdwg.mxu0
    %906 = vmatpush.msra.mxu0 0.0
    %907 = vmatpush.msra.mxu0 0.0
    %908 = vmatpush.msra.mxu0 0.0
    %909 = vmatpush.msra.mxu0 0.0
    %910 = vmatpush.msra.mxu0 0.0
    %911 = vmatpush.msra.mxu0 0.0
    %912 = vmatpush.msra.mxu0 0.0
    %913 = vmatpush.msra.mxu0 0.0
    %914 = vmatpush.msra.mxu0 0.0
    %915 = vmatpush.msra.mxu0 0.0
    %916 = vmatpush.msra.mxu0 0.0
    %917 = vmatpush.msra.mxu0 0.0
    %v918 = vand.u32 %v684, 4294901760
    %v919 = vsub.f32 %v684, %v918
    %v920 = vand.u32 %v919, 4294901760
    %921 = vmatpush.msra.mxu0 %v920
    %v922 = vand.u32 %v682, 4294901760
    %v923 = vsub.f32 %v682, %v922
    %v924 = vand.u32 %v923, 4294901760
    %925 = vmatpush.msra.mxu0 %v924
    %v926 = vand.u32 %v680, 4294901760
    %v927 = vsub.f32 %v680, %v926
    %v928 = vand.u32 %v927, 4294901760
    %929 = vmatpush.msra.mxu0 %v928
    %v930 = vand.u32 %v678, 4294901760
    %v931 = vsub.f32 %v678, %v930
    %v932 = vand.u32 %v931, 4294901760
    %933 = vmatpush.msra.mxu0 %v932
    %v934 = vand.u32 %v702, 4294901760
    %935 = vmatmul.f32.gmra.mxu0 %v934
    %v936 = vpop.f32.mrf.mxu0
    %v937 = vadd.f32 %v886, %v936
    %v938 = vand.u32 %v704, 4294901760
    %939 = vmatmul.f32.gmra.mxu0 %v938
    %v940 = vpop.f32.mrf.mxu0
    %v941 = vadd.f32 %v892, %v940
    %v942 = vand.u32 %v706, 4294901760
    %943 = vmatmul.f32.gmra.mxu0 %v942
    %v944 = vpop.f32.mrf.mxu0
    %v945 = vadd.f32 %v898, %v944
    %v946 = vand.u32 %v708, 4294901760
    %947 = vmatmul.f32.gmra.mxu0 %v946
    %v948 = vpop.f32.mrf.mxu0
    %v949 = vadd.f32 %v904, %v948
    %950 = vdwg.mxu0
    %951 = vmatpush.msra.mxu0 0.0
    %952 = vmatpush.msra.mxu0 0.0
    %953 = vmatpush.msra.mxu0 0.0
    %954 = vmatpush.msra.mxu0 0.0
    %955 = vmatpush.msra.mxu0 0.0
    %956 = vmatpush.msra.mxu0 0.0
    %957 = vmatpush.msra.mxu0 0.0
    %958 = vmatpush.msra.mxu0 0.0
    %959 = vmatpush.msra.mxu0 0.0
    %960 = vmatpush.msra.mxu0 0.0
    %961 = vmatpush.msra.mxu0 0.0
    %962 = vmatpush.msra.mxu0 0.0
    %v963 = vand.u32 %v684, 4294901760
    %964 = vmatpush.msra.mxu0 %v963
    %v965 = vand.u32 %v682, 4294901760
    %966 = vmatpush.msra.mxu0 %v965
    %v967 = vand.u32 %v680, 4294901760
    %968 = vmatpush.msra.mxu0 %v967
    %v969 = vand.u32 %v678, 4294901760
    %970 = vmatpush.msra.mxu0 %v969
    %v971 = vand.u32 %v702, 4294901760
    %972 = vmatmul.f32.gmra.mxu0 %v971
    %v973 = vpop.f32.mrf.mxu0
    %v974 = vadd.f32 %v937, %v973
    %v975 = vand.u32 %v704, 4294901760
    %976 = vmatmul.f32.gmra.mxu0 %v975
    %v977 = vpop.f32.mrf.mxu0
    %v978 = vadd.f32 %v941, %v977
    %v979 = vand.u32 %v706, 4294901760
    %980 = vmatmul.f32.gmra.mxu0 %v979
    %v981 = vpop.f32.mrf.mxu0
    %v982 = vadd.f32 %v945, %v981
    %v983 = vand.u32 %v708, 4294901760
    %984 = vmatmul.f32.gmra.mxu0 %v983
    %v985 = vpop.f32.mrf.mxu0
    %v986 = vadd.f32 %v949, %v985
    %987 = vdwg.mxu0
    %988 = vmatpush.msra.mxu0 0.0
    %989 = vmatpush.msra.mxu0 0.0
    %990 = vmatpush.msra.mxu0 0.0
    %991 = vmatpush.msra.mxu0 0.0
    %992 = vmatpush.msra.mxu0 0.0
    %993 = vmatpush.msra.mxu0 0.0
    %994 = vmatpush.msra.mxu0 0.0
    %995 = vmatpush.msra.mxu0 0.0
    %996 = vmatpush.msra.mxu0 0.0
    %997 = vmatpush.msra.mxu0 0.0
    %998 = vmatpush.msra.mxu0 0.0
    %999 = vmatpush.msra.mxu0 0.0
    %v1000 = vand.u32 %v685, 4294901760
    %1001 = vmatpush.msra.mxu0 %v1000
    %v1002 = vand.u32 %v683, 4294901760
    %1003 = vmatpush.msra.mxu0 %v1002
    %v1004 = vand.u32 %v681, 4294901760
    %1005 = vmatpush.msra.mxu0 %v1004
    %v1006 = vand.u32 %v679, 4294901760
    %1007 = vmatpush.msra.mxu0 %v1006
    %v1008 = vand.u32 %v702, 4294901760
    %v1009 = vsub.f32 %v702, %v1008
    %v1010 = vand.u32 %v1009, 4294901760
    %v1011 = vsub.f32 %v1009, %v1010
    %v1012 = vand.u32 %v1011, 4294901760
    %1013 = vmatmul.f32.gmra.mxu0 %v1012
    %v1014 = vpop.f32.mrf.mxu0
    %v1015 = vadd.f32 %v688, %v1014
    %v1016 = vand.u32 %v704, 4294901760
    %v1017 = vsub.f32 %v704, %v1016
    %v1018 = vand.u32 %v1017, 4294901760
    %v1019 = vsub.f32 %v1017, %v1018
    %v1020 = vand.u32 %v1019, 4294901760
    %1021 = vmatmul.f32.gmra.mxu0 %v1020
    %v1022 = vpop.f32.mrf.mxu0
    %v1023 = vadd.f32 %v692, %v1022
    %v1024 = vand.u32 %v706, 4294901760
    %v1025 = vsub.f32 %v706, %v1024
    %v1026 = vand.u32 %v1025, 4294901760
    %v1027 = vsub.f32 %v1025, %v1026
    %v1028 = vand.u32 %v1027, 4294901760
    %1029 = vmatmul.f32.gmra.mxu0 %v1028
    %v1030 = vpop.f32.mrf.mxu0
    %v1031 = vadd.f32 %v696, %v1030
    %v1032 = vand.u32 %v708, 4294901760
    %v1033 = vsub.f32 %v708, %v1032
    %v1034 = vand.u32 %v1033, 4294901760
    %v1035 = vsub.f32 %v1033, %v1034
    %v1036 = vand.u32 %v1035, 4294901760
    %1037 = vmatmul.f32.gmra.mxu0 %v1036
    %v1038 = vpop.f32.mrf.mxu0
    %v1039 = vadd.f32 %v700, %v1038
    %1040 = vdwg.mxu0
    %1041 = vmatpush.msra.mxu0 0.0
    %1042 = vmatpush.msra.mxu0 0.0
    %1043 = vmatpush.msra.mxu0 0.0
    %1044 = vmatpush.msra.mxu0 0.0
    %1045 = vmatpush.msra.mxu0 0.0
    %1046 = vmatpush.msra.mxu0 0.0
    %1047 = vmatpush.msra.mxu0 0.0
    %1048 = vmatpush.msra.mxu0 0.0
    %1049 = vmatpush.msra.mxu0 0.0
    %1050 = vmatpush.msra.mxu0 0.0
    %1051 = vmatpush.msra.mxu0 0.0
    %1052 = vmatpush.msra.mxu0 0.0
    %v1053 = vand.u32 %v685, 4294901760
    %v1054 = vsub.f32 %v685, %v1053
    %v1055 = vand.u32 %v1054, 4294901760
    %v1056 = vsub.f32 %v1054, %v1055
    %v1057 = vand.u32 %v1056, 4294901760
    %1058 = vmatpush.msra.mxu0 %v1057
    %v1059 = vand.u32 %v683, 4294901760
    %v1060 = vsub.f32 %v683, %v1059
    %v1061 = vand.u32 %v1060, 4294901760
    %v1062 = vsub.f32 %v1060, %v1061
    %v1063 = vand.u32 %v1062, 4294901760
    %1064 = vmatpush.msra.mxu0 %v1063
    %v1065 = vand.u32 %v681, 4294901760
    %v1066 = vsub.f32 %v681, %v1065
    %v1067 = vand.u32 %v1066, 4294901760
    %v1068 = vsub.f32 %v1066, %v1067
    %v1069 = vand.u32 %v1068, 4294901760
    %1070 = vmatpush.msra.mxu0 %v1069
    %v1071 = vand.u32 %v679, 4294901760
    %v1072 = vsub.f32 %v679, %v1071
    %v1073 = vand.u32 %v1072, 4294901760
    %v1074 = vsub.f32 %v1072, %v1073
    %v1075 = vand.u32 %v1074, 4294901760
    %1076 = vmatpush.msra.mxu0 %v1075
    %v1077 = vand.u32 %v702, 4294901760
    %1078 = vmatmul.f32.gmra.mxu0 %v1077
    %v1079 = vpop.f32.mrf.mxu0
    %v1080 = vadd.f32 %v1015, %v1079
    %v1081 = vand.u32 %v704, 4294901760
    %1082 = vmatmul.f32.gmra.mxu0 %v1081
    %v1083 = vpop.f32.mrf.mxu0
    %v1084 = vadd.f32 %v1023, %v1083
    %v1085 = vand.u32 %v706, 4294901760
    %1086 = vmatmul.f32.gmra.mxu0 %v1085
    %v1087 = vpop.f32.mrf.mxu0
    %v1088 = vadd.f32 %v1031, %v1087
    %v1089 = vand.u32 %v708, 4294901760
    %1090 = vmatmul.f32.gmra.mxu0 %v1089
    %v1091 = vpop.f32.mrf.mxu0
    %v1092 = vadd.f32 %v1039, %v1091
    %1093 = vdwg.mxu0
    %1094 = vmatpush.msra.mxu0 0.0
    %1095 = vmatpush.msra.mxu0 0.0
    %1096 = vmatpush.msra.mxu0 0.0
    %1097 = vmatpush.msra.mxu0 0.0
    %1098 = vmatpush.msra.mxu0 0.0
    %1099 = vmatpush.msra.mxu0 0.0
    %1100 = vmatpush.msra.mxu0 0.0
    %1101 = vmatpush.msra.mxu0 0.0
    %1102 = vmatpush.msra.mxu0 0.0
    %1103 = vmatpush.msra.mxu0 0.0
    %1104 = vmatpush.msra.mxu0 0.0
    %1105 = vmatpush.msra.mxu0 0.0
    %v1106 = vand.u32 %v685, 4294901760
    %v1107 = vsub.f32 %v685, %v1106
    %1108 = vmatpush.msra.mxu0 %v1107
    %v1109 = vand.u32 %v683, 4294901760
    %v1110 = vsub.f32 %v683, %v1109
    %1111 = vmatpush.msra.mxu0 %v1110
    %v1112 = vand.u32 %v681, 4294901760
    %v1113 = vsub.f32 %v681, %v1112
    %1114 = vmatpush.msra.mxu0 %v1113
    %v1115 = vand.u32 %v679, 4294901760
    %v1116 = vsub.f32 %v679, %v1115
    %1117 = vmatpush.msra.mxu0 %v1116
    %v1118 = vand.u32 %v702, 4294901760
    %v1119 = vsub.f32 %v702, %v1118
    %1120 = vmatmul.f32.gmra.mxu0 %v1119
    %v1121 = vpop.f32.mrf.mxu0
    %v1122 = vadd.f32 %v1080, %v1121
    %v1123 = vand.u32 %v704, 4294901760
    %v1124 = vsub.f32 %v704, %v1123
    %1125 = vmatmul.f32.gmra.mxu0 %v1124
    %v1126 = vpop.f32.mrf.mxu0
    %v1127 = vadd.f32 %v1084, %v1126
    %v1128 = vand.u32 %v706, 4294901760
    %v1129 = vsub.f32 %v706, %v1128
    %1130 = vmatmul.f32.gmra.mxu0 %v1129
    %v1131 = vpop.f32.mrf.mxu0
    %v1132 = vadd.f32 %v1088, %v1131
    %v1133 = vand.u32 %v708, 4294901760
    %v1134 = vsub.f32 %v708, %v1133
    %1135 = vmatmul.f32.gmra.mxu0 %v1134
    %v1136 = vpop.f32.mrf.mxu0
    %v1137 = vadd.f32 %v1092, %v1136
    %1138 = vdwg.mxu0
    %1139 = vmatpush.msra.mxu0 0.0
    %1140 = vmatpush.msra.mxu0 0.0
    %1141 = vmatpush.msra.mxu0 0.0
    %1142 = vmatpush.msra.mxu0 0.0
    %1143 = vmatpush.msra.mxu0 0.0
    %1144 = vmatpush.msra.mxu0 0.0
    %1145 = vmatpush.msra.mxu0 0.0
    %1146 = vmatpush.msra.mxu0 0.0
    %1147 = vmatpush.msra.mxu0 0.0
    %1148 = vmatpush.msra.mxu0 0.0
    %1149 = vmatpush.msra.mxu0 0.0
    %1150 = vmatpush.msra.mxu0 0.0
    %v1151 = vand.u32 %v685, 4294901760
    %1152 = vmatpush.msra.mxu0 %v1151
    %v1153 = vand.u32 %v683, 4294901760
    %1154 = vmatpush.msra.mxu0 %v1153
    %v1155 = vand.u32 %v681, 4294901760
    %1156 = vmatpush.msra.mxu0 %v1155
    %v1157 = vand.u32 %v679, 4294901760
    %1158 = vmatpush.msra.mxu0 %v1157
    %v1159 = vand.u32 %v702, 4294901760
    %v1160 = vsub.f32 %v702, %v1159
    %v1161 = vand.u32 %v1160, 4294901760
    %1162 = vmatmul.f32.gmra.mxu0 %v1161
    %v1163 = vpop.f32.mrf.mxu0
    %v1164 = vadd.f32 %v1122, %v1163
    %v1165 = vand.u32 %v704, 4294901760
    %v1166 = vsub.f32 %v704, %v1165
    %v1167 = vand.u32 %v1166, 4294901760
    %1168 = vmatmul.f32.gmra.mxu0 %v1167
    %v1169 = vpop.f32.mrf.mxu0
    %v1170 = vadd.f32 %v1127, %v1169
    %v1171 = vand.u32 %v706, 4294901760
    %v1172 = vsub.f32 %v706, %v1171
    %v1173 = vand.u32 %v1172, 4294901760
    %1174 = vmatmul.f32.gmra.mxu0 %v1173
    %v1175 = vpop.f32.mrf.mxu0
    %v1176 = vadd.f32 %v1132, %v1175
    %v1177 = vand.u32 %v708, 4294901760
    %v1178 = vsub.f32 %v708, %v1177
    %v1179 = vand.u32 %v1178, 4294901760
    %1180 = vmatmul.f32.gmra.mxu0 %v1179
    %v1181 = vpop.f32.mrf.mxu0
    %v1182 = vadd.f32 %v1137, %v1181
    %1183 = vdwg.mxu0
    %1184 = vmatpush.msra.mxu0 0.0
    %1185 = vmatpush.msra.mxu0 0.0
    %1186 = vmatpush.msra.mxu0 0.0
    %1187 = vmatpush.msra.mxu0 0.0
    %1188 = vmatpush.msra.mxu0 0.0
    %1189 = vmatpush.msra.mxu0 0.0
    %1190 = vmatpush.msra.mxu0 0.0
    %1191 = vmatpush.msra.mxu0 0.0
    %1192 = vmatpush.msra.mxu0 0.0
    %1193 = vmatpush.msra.mxu0 0.0
    %1194 = vmatpush.msra.mxu0 0.0
    %1195 = vmatpush.msra.mxu0 0.0
    %v1196 = vand.u32 %v685, 4294901760
    %v1197 = vsub.f32 %v685, %v1196
    %v1198 = vand.u32 %v1197, 4294901760
    %1199 = vmatpush.msra.mxu0 %v1198
    %v1200 = vand.u32 %v683, 4294901760
    %v1201 = vsub.f32 %v683, %v1200
    %v1202 = vand.u32 %v1201, 4294901760
    %1203 = vmatpush.msra.mxu0 %v1202
    %v1204 = vand.u32 %v681, 4294901760
    %v1205 = vsub.f32 %v681, %v1204
    %v1206 = vand.u32 %v1205, 4294901760
    %1207 = vmatpush.msra.mxu0 %v1206
    %v1208 = vand.u32 %v679, 4294901760
    %v1209 = vsub.f32 %v679, %v1208
    %v1210 = vand.u32 %v1209, 4294901760
    %1211 = vmatpush.msra.mxu0 %v1210
    %v1212 = vand.u32 %v702, 4294901760
    %1213 = vmatmul.f32.gmra.mxu0 %v1212
    %v1214 = vpop.f32.mrf.mxu0
    %v1215 = vadd.f32 %v1164, %v1214
    %v1216 = vand.u32 %v704, 4294901760
    %1217 = vmatmul.f32.gmra.mxu0 %v1216
    %v1218 = vpop.f32.mrf.mxu0
    %v1219 = vadd.f32 %v1170, %v1218
    %v1220 = vand.u32 %v706, 4294901760
    %1221 = vmatmul.f32.gmra.mxu0 %v1220
    %v1222 = vpop.f32.mrf.mxu0
    %v1223 = vadd.f32 %v1176, %v1222
    %v1224 = vand.u32 %v708, 4294901760
    %1225 = vmatmul.f32.gmra.mxu0 %v1224
    %v1226 = vpop.f32.mrf.mxu0
    %v1227 = vadd.f32 %v1182, %v1226
    %1228 = vdwg.mxu0
    %1229 = vmatpush.msra.mxu0 0.0
    %1230 = vmatpush.msra.mxu0 0.0
    %1231 = vmatpush.msra.mxu0 0.0
    %1232 = vmatpush.msra.mxu0 0.0
    %1233 = vmatpush.msra.mxu0 0.0
    %1234 = vmatpush.msra.mxu0 0.0
    %1235 = vmatpush.msra.mxu0 0.0
    %1236 = vmatpush.msra.mxu0 0.0
    %1237 = vmatpush.msra.mxu0 0.0
    %1238 = vmatpush.msra.mxu0 0.0
    %1239 = vmatpush.msra.mxu0 0.0
    %1240 = vmatpush.msra.mxu0 0.0
    %v1241 = vand.u32 %v685, 4294901760
    %1242 = vmatpush.msra.mxu0 %v1241
    %v1243 = vand.u32 %v683, 4294901760
    %1244 = vmatpush.msra.mxu0 %v1243
    %v1245 = vand.u32 %v681, 4294901760
    %1246 = vmatpush.msra.mxu0 %v1245
    %v1247 = vand.u32 %v679, 4294901760
    %1248 = vmatpush.msra.mxu0 %v1247
    %v1249 = vand.u32 %v702, 4294901760
    %1250 = vmatmul.f32.gmra.mxu0 %v1249
    %v1251 = vpop.f32.mrf.mxu0
    %v1252 = vadd.f32 %v1215, %v1251
    %v1253 = vand.u32 %v704, 4294901760
    %1254 = vmatmul.f32.gmra.mxu0 %v1253
    %v1255 = vpop.f32.mrf.mxu0
    %v1256 = vadd.f32 %v1219, %v1255
    %v1257 = vand.u32 %v706, 4294901760
    %1258 = vmatmul.f32.gmra.mxu0 %v1257
    %v1259 = vpop.f32.mrf.mxu0
    %v1260 = vadd.f32 %v1223, %v1259
    %v1261 = vand.u32 %v708, 4294901760
    %1262 = vmatmul.f32.gmra.mxu0 %v1261
    %v1263 = vpop.f32.mrf.mxu0
    %v1264 = vadd.f32 %v1227, %v1263
    %1265 = vdwg.mxu0
    %v1266 = vmax.f32 %v974, 0.0
    %v1267 = vmax.f32 %v1252, 0.0
    %v1268 = vmax.f32 %v978, 0.0
    %v1269 = vmax.f32 %v1256, 0.0
    %v1270 = vmax.f32 %v982, 0.0
    %v1271 = vmax.f32 %v1260, 0.0
    %v1272 = vmax.f32 %v986, 0.0
    %v1273 = vmax.f32 %v1264, 0.0
    %v1274 = vperm.slane %v596, 0
    %v1275 = vperm.slane %v597, 0
    %v1276 = vmul.f32 %v1266, %v1274
    %v1277 = vmul.f32 %v1267, %v1275
    %v1278 = vmul.f32 %v1268, %v1274
    %v1279 = vmul.f32 %v1269, %v1275
    %v1280 = vmul.f32 %v1270, %v1274
    %v1281 = vmul.f32 %v1271, %v1275
    %v1282 = vmul.f32 %v1272, %v1274
    %v1283 = vmul.f32 %v1273, %v1275
    %1284 = vset.pattern.permute.xlu0 35
    %1285 = vperm.xlu0 %1284, %v43
    %v1286 = vpop.permute.xlu0 %1285
    %1288 = vset.pattern.permute.xlu0 35
    %1289 = vperm.xlu0 %1288, %v44
    %v1290 = vpop.permute.xlu0 %1289
    %1292 = vset.pattern.permute.xlu0 35
    %1293 = vperm.xlu0 %1292, %v45
    %v1294 = vpop.permute.xlu0 %1293
    %1296 = vset.pattern.permute.xlu0 35
    %1297 = vperm.xlu0 %1296, %v46
    %v1298 = vpop.permute.xlu0 %1297
    %v1300 = vadd.f32 %v646, %v1286
    %v1301 = vadd.f32 %v647, %v1286
    %v1302 = vadd.f32 %v648, %v1290
    %v1303 = vadd.f32 %v649, %v1290
    %v1304 = vadd.f32 %v650, %v1294
    %v1305 = vadd.f32 %v651, %v1294
    %v1306 = vadd.f32 %v652, %v1298
    %v1307 = vadd.f32 %v653, %v1298
    %v1308 = vmax.f32 %v1300, 0.0
    %v1309 = vmax.f32 %v1301, 0.0
    %v1310 = vmax.f32 %v1302, 0.0
    %v1311 = vmax.f32 %v1303, 0.0
    %v1312 = vmax.f32 %v1304, 0.0
    %v1313 = vmax.f32 %v1305, 0.0
    %v1314 = vmax.f32 %v1306, 0.0
    %v1315 = vmax.f32 %v1307, 0.0
    %1316 = vmatpush.msra.mxu0 0.0
    %1317 = vmatpush.msra.mxu0 0.0
    %1318 = vmatpush.msra.mxu0 0.0
    %1319 = vmatpush.msra.mxu0 0.0
    %1320 = vmatpush.msra.mxu0 0.0
    %1321 = vmatpush.msra.mxu0 0.0
    %1322 = vmatpush.msra.mxu0 0.0
    %1323 = vmatpush.msra.mxu0 0.0
    %1324 = vmatpush.msra.mxu0 0.0
    %1325 = vmatpush.msra.mxu0 0.0
    %1326 = vmatpush.msra.mxu0 0.0
    %1327 = vmatpush.msra.mxu0 0.0
    %v1328 = vand.u32 %v1314, 4294901760
    %1329 = vmatpush.msra.mxu0 %v1328
    %v1330 = vand.u32 %v1312, 4294901760
    %1331 = vmatpush.msra.mxu0 %v1330
    %v1332 = vand.u32 %v1310, 4294901760
    %1333 = vmatpush.msra.mxu0 %v1332
    %v1334 = vand.u32 %v1308, 4294901760
    %1335 = vmatpush.msra.mxu0 %v1334
    %v1336 = vand.u32 %v702, 4294901760
    %v1337 = vsub.f32 %v702, %v1336
    %v1338 = vand.u32 %v1337, 4294901760
    %v1339 = vsub.f32 %v1337, %v1338
    %v1340 = vand.u32 %v1339, 4294901760
    %1341 = vmatmul.f32.gmra.mxu0 %v1340
    %v1342 = vpop.f32.mrf.mxu0
    %v1343 = vadd.f32 %v688, %v1342
    %v1344 = vand.u32 %v704, 4294901760
    %v1345 = vsub.f32 %v704, %v1344
    %v1346 = vand.u32 %v1345, 4294901760
    %v1347 = vsub.f32 %v1345, %v1346
    %v1348 = vand.u32 %v1347, 4294901760
    %1349 = vmatmul.f32.gmra.mxu0 %v1348
    %v1350 = vpop.f32.mrf.mxu0
    %v1351 = vadd.f32 %v692, %v1350
    %v1352 = vand.u32 %v706, 4294901760
    %v1353 = vsub.f32 %v706, %v1352
    %v1354 = vand.u32 %v1353, 4294901760
    %v1355 = vsub.f32 %v1353, %v1354
    %v1356 = vand.u32 %v1355, 4294901760
    %1357 = vmatmul.f32.gmra.mxu0 %v1356
    %v1358 = vpop.f32.mrf.mxu0
    %v1359 = vadd.f32 %v696, %v1358
    %v1360 = vand.u32 %v708, 4294901760
    %v1361 = vsub.f32 %v708, %v1360
    %v1362 = vand.u32 %v1361, 4294901760
    %v1363 = vsub.f32 %v1361, %v1362
    %v1364 = vand.u32 %v1363, 4294901760
    %1365 = vmatmul.f32.gmra.mxu0 %v1364
    %v1366 = vpop.f32.mrf.mxu0
    %v1367 = vadd.f32 %v700, %v1366
    %1368 = vdwg.mxu0
    %1369 = vmatpush.msra.mxu0 0.0
    %1370 = vmatpush.msra.mxu0 0.0
    %1371 = vmatpush.msra.mxu0 0.0
    %1372 = vmatpush.msra.mxu0 0.0
    %1373 = vmatpush.msra.mxu0 0.0
    %1374 = vmatpush.msra.mxu0 0.0
    %1375 = vmatpush.msra.mxu0 0.0
    %1376 = vmatpush.msra.mxu0 0.0
    %1377 = vmatpush.msra.mxu0 0.0
    %1378 = vmatpush.msra.mxu0 0.0
    %1379 = vmatpush.msra.mxu0 0.0
    %1380 = vmatpush.msra.mxu0 0.0
    %v1381 = vand.u32 %v1314, 4294901760
    %v1382 = vsub.f32 %v1314, %v1381
    %v1383 = vand.u32 %v1382, 4294901760
    %v1384 = vsub.f32 %v1382, %v1383
    %v1385 = vand.u32 %v1384, 4294901760
    %1386 = vmatpush.msra.mxu0 %v1385
    %v1387 = vand.u32 %v1312, 4294901760
    %v1388 = vsub.f32 %v1312, %v1387
    %v1389 = vand.u32 %v1388, 4294901760
    %v1390 = vsub.f32 %v1388, %v1389
    %v1391 = vand.u32 %v1390, 4294901760
    %1392 = vmatpush.msra.mxu0 %v1391
    %v1393 = vand.u32 %v1310, 4294901760
    %v1394 = vsub.f32 %v1310, %v1393
    %v1395 = vand.u32 %v1394, 4294901760
    %v1396 = vsub.f32 %v1394, %v1395
    %v1397 = vand.u32 %v1396, 4294901760
    %1398 = vmatpush.msra.mxu0 %v1397
    %v1399 = vand.u32 %v1308, 4294901760
    %v1400 = vsub.f32 %v1308, %v1399
    %v1401 = vand.u32 %v1400, 4294901760
    %v1402 = vsub.f32 %v1400, %v1401
    %v1403 = vand.u32 %v1402, 4294901760
    %1404 = vmatpush.msra.mxu0 %v1403
    %v1405 = vand.u32 %v702, 4294901760
    %1406 = vmatmul.f32.gmra.mxu0 %v1405
    %v1407 = vpop.f32.mrf.mxu0
    %v1408 = vadd.f32 %v1343, %v1407
    %v1409 = vand.u32 %v704, 4294901760
    %1410 = vmatmul.f32.gmra.mxu0 %v1409
    %v1411 = vpop.f32.mrf.mxu0
    %v1412 = vadd.f32 %v1351, %v1411
    %v1413 = vand.u32 %v706, 4294901760
    %1414 = vmatmul.f32.gmra.mxu0 %v1413
    %v1415 = vpop.f32.mrf.mxu0
    %v1416 = vadd.f32 %v1359, %v1415
    %v1417 = vand.u32 %v708, 4294901760
    %1418 = vmatmul.f32.gmra.mxu0 %v1417
    %v1419 = vpop.f32.mrf.mxu0
    %v1420 = vadd.f32 %v1367, %v1419
    %1421 = vdwg.mxu0
    %1422 = vmatpush.msra.mxu0 0.0
    %1423 = vmatpush.msra.mxu0 0.0
    %1424 = vmatpush.msra.mxu0 0.0
    %1425 = vmatpush.msra.mxu0 0.0
    %1426 = vmatpush.msra.mxu0 0.0
    %1427 = vmatpush.msra.mxu0 0.0
    %1428 = vmatpush.msra.mxu0 0.0
    %1429 = vmatpush.msra.mxu0 0.0
    %1430 = vmatpush.msra.mxu0 0.0
    %1431 = vmatpush.msra.mxu0 0.0
    %1432 = vmatpush.msra.mxu0 0.0
    %1433 = vmatpush.msra.mxu0 0.0
    %v1434 = vand.u32 %v1314, 4294901760
    %v1435 = vsub.f32 %v1314, %v1434
    %1436 = vmatpush.msra.mxu0 %v1435
    %v1437 = vand.u32 %v1312, 4294901760
    %v1438 = vsub.f32 %v1312, %v1437
    %1439 = vmatpush.msra.mxu0 %v1438
    %v1440 = vand.u32 %v1310, 4294901760
    %v1441 = vsub.f32 %v1310, %v1440
    %1442 = vmatpush.msra.mxu0 %v1441
    %v1443 = vand.u32 %v1308, 4294901760
    %v1444 = vsub.f32 %v1308, %v1443
    %1445 = vmatpush.msra.mxu0 %v1444
    %v1446 = vand.u32 %v702, 4294901760
    %v1447 = vsub.f32 %v702, %v1446
    %1448 = vmatmul.f32.gmra.mxu0 %v1447
    %v1449 = vpop.f32.mrf.mxu0
    %v1450 = vadd.f32 %v1408, %v1449
    %v1451 = vand.u32 %v704, 4294901760
    %v1452 = vsub.f32 %v704, %v1451
    %1453 = vmatmul.f32.gmra.mxu0 %v1452
    %v1454 = vpop.f32.mrf.mxu0
    %v1455 = vadd.f32 %v1412, %v1454
    %v1456 = vand.u32 %v706, 4294901760
    %v1457 = vsub.f32 %v706, %v1456
    %1458 = vmatmul.f32.gmra.mxu0 %v1457
    %v1459 = vpop.f32.mrf.mxu0
    %v1460 = vadd.f32 %v1416, %v1459
    %v1461 = vand.u32 %v708, 4294901760
    %v1462 = vsub.f32 %v708, %v1461
    %1463 = vmatmul.f32.gmra.mxu0 %v1462
    %v1464 = vpop.f32.mrf.mxu0
    %v1465 = vadd.f32 %v1420, %v1464
    %1466 = vdwg.mxu0
    %1467 = vmatpush.msra.mxu0 0.0
    %1468 = vmatpush.msra.mxu0 0.0
    %1469 = vmatpush.msra.mxu0 0.0
    %1470 = vmatpush.msra.mxu0 0.0
    %1471 = vmatpush.msra.mxu0 0.0
    %1472 = vmatpush.msra.mxu0 0.0
    %1473 = vmatpush.msra.mxu0 0.0
    %1474 = vmatpush.msra.mxu0 0.0
    %1475 = vmatpush.msra.mxu0 0.0
    %1476 = vmatpush.msra.mxu0 0.0
    %1477 = vmatpush.msra.mxu0 0.0
    %1478 = vmatpush.msra.mxu0 0.0
    %v1479 = vand.u32 %v1314, 4294901760
    %1480 = vmatpush.msra.mxu0 %v1479
    %v1481 = vand.u32 %v1312, 4294901760
    %1482 = vmatpush.msra.mxu0 %v1481
    %v1483 = vand.u32 %v1310, 4294901760
    %1484 = vmatpush.msra.mxu0 %v1483
    %v1485 = vand.u32 %v1308, 4294901760
    %1486 = vmatpush.msra.mxu0 %v1485
    %v1487 = vand.u32 %v702, 4294901760
    %v1488 = vsub.f32 %v702, %v1487
    %v1489 = vand.u32 %v1488, 4294901760
    %1490 = vmatmul.f32.gmra.mxu0 %v1489
    %v1491 = vpop.f32.mrf.mxu0
    %v1492 = vadd.f32 %v1450, %v1491
    %v1493 = vand.u32 %v704, 4294901760
    %v1494 = vsub.f32 %v704, %v1493
    %v1495 = vand.u32 %v1494, 4294901760
    %1496 = vmatmul.f32.gmra.mxu0 %v1495
    %v1497 = vpop.f32.mrf.mxu0
    %v1498 = vadd.f32 %v1455, %v1497
    %v1499 = vand.u32 %v706, 4294901760
    %v1500 = vsub.f32 %v706, %v1499
    %v1501 = vand.u32 %v1500, 4294901760
    %1502 = vmatmul.f32.gmra.mxu0 %v1501
    %v1503 = vpop.f32.mrf.mxu0
    %v1504 = vadd.f32 %v1460, %v1503
    %v1505 = vand.u32 %v708, 4294901760
    %v1506 = vsub.f32 %v708, %v1505
    %v1507 = vand.u32 %v1506, 4294901760
    %1508 = vmatmul.f32.gmra.mxu0 %v1507
    %v1509 = vpop.f32.mrf.mxu0
    %v1510 = vadd.f32 %v1465, %v1509
    %1511 = vdwg.mxu0
    %1512 = vmatpush.msra.mxu0 0.0
    %1513 = vmatpush.msra.mxu0 0.0
    %1514 = vmatpush.msra.mxu0 0.0
    %1515 = vmatpush.msra.mxu0 0.0
    %1516 = vmatpush.msra.mxu0 0.0
    %1517 = vmatpush.msra.mxu0 0.0
    %1518 = vmatpush.msra.mxu0 0.0
    %1519 = vmatpush.msra.mxu0 0.0
    %1520 = vmatpush.msra.mxu0 0.0
    %1521 = vmatpush.msra.mxu0 0.0
    %1522 = vmatpush.msra.mxu0 0.0
    %1523 = vmatpush.msra.mxu0 0.0
    %v1524 = vand.u32 %v1314, 4294901760
    %v1525 = vsub.f32 %v1314, %v1524
    %v1526 = vand.u32 %v1525, 4294901760
    %1527 = vmatpush.msra.mxu0 %v1526
    %v1528 = vand.u32 %v1312, 4294901760
    %v1529 = vsub.f32 %v1312, %v1528
    %v1530 = vand.u32 %v1529, 4294901760
    %1531 = vmatpush.msra.mxu0 %v1530
    %v1532 = vand.u32 %v1310, 4294901760
    %v1533 = vsub.f32 %v1310, %v1532
    %v1534 = vand.u32 %v1533, 4294901760
    %1535 = vmatpush.msra.mxu0 %v1534
    %v1536 = vand.u32 %v1308, 4294901760
    %v1537 = vsub.f32 %v1308, %v1536
    %v1538 = vand.u32 %v1537, 4294901760
    %1539 = vmatpush.msra.mxu0 %v1538
    %v1540 = vand.u32 %v702, 4294901760
    %1541 = vmatmul.f32.gmra.mxu0 %v1540
    %v1542 = vpop.f32.mrf.mxu0
    %v1543 = vadd.f32 %v1492, %v1542
    %v1544 = vand.u32 %v704, 4294901760
    %1545 = vmatmul.f32.gmra.mxu0 %v1544
    %v1546 = vpop.f32.mrf.mxu0
    %v1547 = vadd.f32 %v1498, %v1546
    %v1548 = vand.u32 %v706, 4294901760
    %1549 = vmatmul.f32.gmra.mxu0 %v1548
    %v1550 = vpop.f32.mrf.mxu0
    %v1551 = vadd.f32 %v1504, %v1550
    %v1552 = vand.u32 %v708, 4294901760
    %1553 = vmatmul.f32.gmra.mxu0 %v1552
    %v1554 = vpop.f32.mrf.mxu0
    %v1555 = vadd.f32 %v1510, %v1554
    %1556 = vdwg.mxu0
    %1557 = vmatpush.msra.mxu0 0.0
    %1558 = vmatpush.msra.mxu0 0.0
    %1559 = vmatpush.msra.mxu0 0.0
    %1560 = vmatpush.msra.mxu0 0.0
    %1561 = vmatpush.msra.mxu0 0.0
    %1562 = vmatpush.msra.mxu0 0.0
    %1563 = vmatpush.msra.mxu0 0.0
    %1564 = vmatpush.msra.mxu0 0.0
    %1565 = vmatpush.msra.mxu0 0.0
    %1566 = vmatpush.msra.mxu0 0.0
    %1567 = vmatpush.msra.mxu0 0.0
    %1568 = vmatpush.msra.mxu0 0.0
    %v1569 = vand.u32 %v1314, 4294901760
    %1570 = vmatpush.msra.mxu0 %v1569
    %v1571 = vand.u32 %v1312, 4294901760
    %1572 = vmatpush.msra.mxu0 %v1571
    %v1573 = vand.u32 %v1310, 4294901760
    %1574 = vmatpush.msra.mxu0 %v1573
    %v1575 = vand.u32 %v1308, 4294901760
    %1576 = vmatpush.msra.mxu0 %v1575
    %v1577 = vand.u32 %v702, 4294901760
    %1578 = vmatmul.f32.gmra.mxu0 %v1577
    %v1579 = vpop.f32.mrf.mxu0
    %v1580 = vadd.f32 %v1543, %v1579
    %v1581 = vand.u32 %v704, 4294901760
    %1582 = vmatmul.f32.gmra.mxu0 %v1581
    %v1583 = vpop.f32.mrf.mxu0
    %v1584 = vadd.f32 %v1547, %v1583
    %v1585 = vand.u32 %v706, 4294901760
    %1586 = vmatmul.f32.gmra.mxu0 %v1585
    %v1587 = vpop.f32.mrf.mxu0
    %v1588 = vadd.f32 %v1551, %v1587
    %v1589 = vand.u32 %v708, 4294901760
    %1590 = vmatmul.f32.gmra.mxu0 %v1589
    %v1591 = vpop.f32.mrf.mxu0
    %v1592 = vadd.f32 %v1555, %v1591
    %1593 = vdwg.mxu0
    %1594 = vmatpush.msra.mxu0 0.0
    %1595 = vmatpush.msra.mxu0 0.0
    %1596 = vmatpush.msra.mxu0 0.0
    %1597 = vmatpush.msra.mxu0 0.0
    %1598 = vmatpush.msra.mxu0 0.0
    %1599 = vmatpush.msra.mxu0 0.0
    %1600 = vmatpush.msra.mxu0 0.0
    %1601 = vmatpush.msra.mxu0 0.0
    %1602 = vmatpush.msra.mxu0 0.0
    %1603 = vmatpush.msra.mxu0 0.0
    %1604 = vmatpush.msra.mxu0 0.0
    %1605 = vmatpush.msra.mxu0 0.0
    %v1606 = vand.u32 %v1315, 4294901760
    %1607 = vmatpush.msra.mxu0 %v1606
    %v1608 = vand.u32 %v1313, 4294901760
    %1609 = vmatpush.msra.mxu0 %v1608
    %v1610 = vand.u32 %v1311, 4294901760
    %1611 = vmatpush.msra.mxu0 %v1610
    %v1612 = vand.u32 %v1309, 4294901760
    %1613 = vmatpush.msra.mxu0 %v1612
    %v1614 = vand.u32 %v702, 4294901760
    %v1615 = vsub.f32 %v702, %v1614
    %v1616 = vand.u32 %v1615, 4294901760
    %v1617 = vsub.f32 %v1615, %v1616
    %v1618 = vand.u32 %v1617, 4294901760
    %1619 = vmatmul.f32.gmra.mxu0 %v1618
    %v1620 = vpop.f32.mrf.mxu0
    %v1621 = vadd.f32 %v688, %v1620
    %v1622 = vand.u32 %v704, 4294901760
    %v1623 = vsub.f32 %v704, %v1622
    %v1624 = vand.u32 %v1623, 4294901760
    %v1625 = vsub.f32 %v1623, %v1624
    %v1626 = vand.u32 %v1625, 4294901760
    %1627 = vmatmul.f32.gmra.mxu0 %v1626
    %v1628 = vpop.f32.mrf.mxu0
    %v1629 = vadd.f32 %v692, %v1628
    %v1630 = vand.u32 %v706, 4294901760
    %v1631 = vsub.f32 %v706, %v1630
    %v1632 = vand.u32 %v1631, 4294901760
    %v1633 = vsub.f32 %v1631, %v1632
    %v1634 = vand.u32 %v1633, 4294901760
    %1635 = vmatmul.f32.gmra.mxu0 %v1634
    %v1636 = vpop.f32.mrf.mxu0
    %v1637 = vadd.f32 %v696, %v1636
    %v1638 = vand.u32 %v708, 4294901760
    %v1639 = vsub.f32 %v708, %v1638
    %v1640 = vand.u32 %v1639, 4294901760
    %v1641 = vsub.f32 %v1639, %v1640
    %v1642 = vand.u32 %v1641, 4294901760
    %1643 = vmatmul.f32.gmra.mxu0 %v1642
    %v1644 = vpop.f32.mrf.mxu0
    %v1645 = vadd.f32 %v700, %v1644
    %1646 = vdwg.mxu0
    %1647 = vmatpush.msra.mxu0 0.0
    %1648 = vmatpush.msra.mxu0 0.0
    %1649 = vmatpush.msra.mxu0 0.0
    %1650 = vmatpush.msra.mxu0 0.0
    %1651 = vmatpush.msra.mxu0 0.0
    %1652 = vmatpush.msra.mxu0 0.0
    %1653 = vmatpush.msra.mxu0 0.0
    %1654 = vmatpush.msra.mxu0 0.0
    %1655 = vmatpush.msra.mxu0 0.0
    %1656 = vmatpush.msra.mxu0 0.0
    %1657 = vmatpush.msra.mxu0 0.0
    %1658 = vmatpush.msra.mxu0 0.0
    %v1659 = vand.u32 %v1315, 4294901760
    %v1660 = vsub.f32 %v1315, %v1659
    %v1661 = vand.u32 %v1660, 4294901760
    %v1662 = vsub.f32 %v1660, %v1661
    %v1663 = vand.u32 %v1662, 4294901760
    %1664 = vmatpush.msra.mxu0 %v1663
    %v1665 = vand.u32 %v1313, 4294901760
    %v1666 = vsub.f32 %v1313, %v1665
    %v1667 = vand.u32 %v1666, 4294901760
    %v1668 = vsub.f32 %v1666, %v1667
    %v1669 = vand.u32 %v1668, 4294901760
    %1670 = vmatpush.msra.mxu0 %v1669
    %v1671 = vand.u32 %v1311, 4294901760
    %v1672 = vsub.f32 %v1311, %v1671
    %v1673 = vand.u32 %v1672, 4294901760
    %v1674 = vsub.f32 %v1672, %v1673
    %v1675 = vand.u32 %v1674, 4294901760
    %1676 = vmatpush.msra.mxu0 %v1675
    %v1677 = vand.u32 %v1309, 4294901760
    %v1678 = vsub.f32 %v1309, %v1677
    %v1679 = vand.u32 %v1678, 4294901760
    %v1680 = vsub.f32 %v1678, %v1679
    %v1681 = vand.u32 %v1680, 4294901760
    %1682 = vmatpush.msra.mxu0 %v1681
    %v1683 = vand.u32 %v702, 4294901760
    %1684 = vmatmul.f32.gmra.mxu0 %v1683
    %v1685 = vpop.f32.mrf.mxu0
    %v1686 = vadd.f32 %v1621, %v1685
    %v1687 = vand.u32 %v704, 4294901760
    %1688 = vmatmul.f32.gmra.mxu0 %v1687
    %v1689 = vpop.f32.mrf.mxu0
    %v1690 = vadd.f32 %v1629, %v1689
    %v1691 = vand.u32 %v706, 4294901760
    %1692 = vmatmul.f32.gmra.mxu0 %v1691
    %v1693 = vpop.f32.mrf.mxu0
    %v1694 = vadd.f32 %v1637, %v1693
    %v1695 = vand.u32 %v708, 4294901760
    %1696 = vmatmul.f32.gmra.mxu0 %v1695
    %v1697 = vpop.f32.mrf.mxu0
    %v1698 = vadd.f32 %v1645, %v1697
    %1699 = vdwg.mxu0
    %1700 = vmatpush.msra.mxu0 0.0
    %1701 = vmatpush.msra.mxu0 0.0
    %1702 = vmatpush.msra.mxu0 0.0
    %1703 = vmatpush.msra.mxu0 0.0
    %1704 = vmatpush.msra.mxu0 0.0
    %1705 = vmatpush.msra.mxu0 0.0
    %1706 = vmatpush.msra.mxu0 0.0
    %1707 = vmatpush.msra.mxu0 0.0
    %1708 = vmatpush.msra.mxu0 0.0
    %1709 = vmatpush.msra.mxu0 0.0
    %1710 = vmatpush.msra.mxu0 0.0
    %1711 = vmatpush.msra.mxu0 0.0
    %v1712 = vand.u32 %v1315, 4294901760
    %v1713 = vsub.f32 %v1315, %v1712
    %1714 = vmatpush.msra.mxu0 %v1713
    %v1715 = vand.u32 %v1313, 4294901760
    %v1716 = vsub.f32 %v1313, %v1715
    %1717 = vmatpush.msra.mxu0 %v1716
    %v1718 = vand.u32 %v1311, 4294901760
    %v1719 = vsub.f32 %v1311, %v1718
    %1720 = vmatpush.msra.mxu0 %v1719
    %v1721 = vand.u32 %v1309, 4294901760
    %v1722 = vsub.f32 %v1309, %v1721
    %1723 = vmatpush.msra.mxu0 %v1722
    %v1724 = vand.u32 %v702, 4294901760
    %v1725 = vsub.f32 %v702, %v1724
    %1726 = vmatmul.f32.gmra.mxu0 %v1725
    %v1727 = vpop.f32.mrf.mxu0
    %v1728 = vadd.f32 %v1686, %v1727
    %v1729 = vand.u32 %v704, 4294901760
    %v1730 = vsub.f32 %v704, %v1729
    %1731 = vmatmul.f32.gmra.mxu0 %v1730
    %v1732 = vpop.f32.mrf.mxu0
    %v1733 = vadd.f32 %v1690, %v1732
    %v1734 = vand.u32 %v706, 4294901760
    %v1735 = vsub.f32 %v706, %v1734
    %1736 = vmatmul.f32.gmra.mxu0 %v1735
    %v1737 = vpop.f32.mrf.mxu0
    %v1738 = vadd.f32 %v1694, %v1737
    %v1739 = vand.u32 %v708, 4294901760
    %v1740 = vsub.f32 %v708, %v1739
    %1741 = vmatmul.f32.gmra.mxu0 %v1740
    %v1742 = vpop.f32.mrf.mxu0
    %v1743 = vadd.f32 %v1698, %v1742
    %1744 = vdwg.mxu0
    %1745 = vmatpush.msra.mxu0 0.0
    %1746 = vmatpush.msra.mxu0 0.0
    %1747 = vmatpush.msra.mxu0 0.0
    %1748 = vmatpush.msra.mxu0 0.0
    %1749 = vmatpush.msra.mxu0 0.0
    %1750 = vmatpush.msra.mxu0 0.0
    %1751 = vmatpush.msra.mxu0 0.0
    %1752 = vmatpush.msra.mxu0 0.0
    %1753 = vmatpush.msra.mxu0 0.0
    %1754 = vmatpush.msra.mxu0 0.0
    %1755 = vmatpush.msra.mxu0 0.0
    %1756 = vmatpush.msra.mxu0 0.0
    %v1757 = vand.u32 %v1315, 4294901760
    %1758 = vmatpush.msra.mxu0 %v1757
    %v1759 = vand.u32 %v1313, 4294901760
    %1760 = vmatpush.msra.mxu0 %v1759
    %v1761 = vand.u32 %v1311, 4294901760
    %1762 = vmatpush.msra.mxu0 %v1761
    %v1763 = vand.u32 %v1309, 4294901760
    %1764 = vmatpush.msra.mxu0 %v1763
    %v1765 = vand.u32 %v702, 4294901760
    %v1766 = vsub.f32 %v702, %v1765
    %v1767 = vand.u32 %v1766, 4294901760
    %1768 = vmatmul.f32.gmra.mxu0 %v1767
    %v1769 = vpop.f32.mrf.mxu0
    %v1770 = vadd.f32 %v1728, %v1769
    %v1771 = vand.u32 %v704, 4294901760
    %v1772 = vsub.f32 %v704, %v1771
    %v1773 = vand.u32 %v1772, 4294901760
    %1774 = vmatmul.f32.gmra.mxu0 %v1773
    %v1775 = vpop.f32.mrf.mxu0
    %v1776 = vadd.f32 %v1733, %v1775
    %v1777 = vand.u32 %v706, 4294901760
    %v1778 = vsub.f32 %v706, %v1777
    %v1779 = vand.u32 %v1778, 4294901760
    %1780 = vmatmul.f32.gmra.mxu0 %v1779
    %v1781 = vpop.f32.mrf.mxu0
    %v1782 = vadd.f32 %v1738, %v1781
    %v1783 = vand.u32 %v708, 4294901760
    %v1784 = vsub.f32 %v708, %v1783
    %v1785 = vand.u32 %v1784, 4294901760
    %1786 = vmatmul.f32.gmra.mxu0 %v1785
    %v1787 = vpop.f32.mrf.mxu0
    %v1788 = vadd.f32 %v1743, %v1787
    %1789 = vdwg.mxu0
    %1790 = vmatpush.msra.mxu0 0.0
    %1791 = vmatpush.msra.mxu0 0.0
    %1792 = vmatpush.msra.mxu0 0.0
    %1793 = vmatpush.msra.mxu0 0.0
    %1794 = vmatpush.msra.mxu0 0.0
    %1795 = vmatpush.msra.mxu0 0.0
    %1796 = vmatpush.msra.mxu0 0.0
    %1797 = vmatpush.msra.mxu0 0.0
    %1798 = vmatpush.msra.mxu0 0.0
    %1799 = vmatpush.msra.mxu0 0.0
    %1800 = vmatpush.msra.mxu0 0.0
    %1801 = vmatpush.msra.mxu0 0.0
    %v1802 = vand.u32 %v1315, 4294901760
    %v1803 = vsub.f32 %v1315, %v1802
    %v1804 = vand.u32 %v1803, 4294901760
    %1805 = vmatpush.msra.mxu0 %v1804
    %v1806 = vand.u32 %v1313, 4294901760
    %v1807 = vsub.f32 %v1313, %v1806
    %v1808 = vand.u32 %v1807, 4294901760
    %1809 = vmatpush.msra.mxu0 %v1808
    %v1810 = vand.u32 %v1311, 4294901760
    %v1811 = vsub.f32 %v1311, %v1810
    %v1812 = vand.u32 %v1811, 4294901760
    %1813 = vmatpush.msra.mxu0 %v1812
    %v1814 = vand.u32 %v1309, 4294901760
    %v1815 = vsub.f32 %v1309, %v1814
    %v1816 = vand.u32 %v1815, 4294901760
    %1817 = vmatpush.msra.mxu0 %v1816
    %v1818 = vand.u32 %v702, 4294901760
    %1819 = vmatmul.f32.gmra.mxu0 %v1818
    %v1820 = vpop.f32.mrf.mxu0
    %v1821 = vadd.f32 %v1770, %v1820
    %v1822 = vand.u32 %v704, 4294901760
    %1823 = vmatmul.f32.gmra.mxu0 %v1822
    %v1824 = vpop.f32.mrf.mxu0
    %v1825 = vadd.f32 %v1776, %v1824
    %v1826 = vand.u32 %v706, 4294901760
    %1827 = vmatmul.f32.gmra.mxu0 %v1826
    %v1828 = vpop.f32.mrf.mxu0
    %v1829 = vadd.f32 %v1782, %v1828
    %v1830 = vand.u32 %v708, 4294901760
    %1831 = vmatmul.f32.gmra.mxu0 %v1830
    %v1832 = vpop.f32.mrf.mxu0
    %v1833 = vadd.f32 %v1788, %v1832
    %1834 = vdwg.mxu0
    %1835 = vmatpush.msra.mxu0 0.0
    %1836 = vmatpush.msra.mxu0 0.0
    %1837 = vmatpush.msra.mxu0 0.0
    %1838 = vmatpush.msra.mxu0 0.0
    %1839 = vmatpush.msra.mxu0 0.0
    %1840 = vmatpush.msra.mxu0 0.0
    %1841 = vmatpush.msra.mxu0 0.0
    %1842 = vmatpush.msra.mxu0 0.0
    %1843 = vmatpush.msra.mxu0 0.0
    %1844 = vmatpush.msra.mxu0 0.0
    %1845 = vmatpush.msra.mxu0 0.0
    %1846 = vmatpush.msra.mxu0 0.0
    %v1847 = vand.u32 %v1315, 4294901760
    %1848 = vmatpush.msra.mxu0 %v1847
    %v1849 = vand.u32 %v1313, 4294901760
    %1850 = vmatpush.msra.mxu0 %v1849
    %v1851 = vand.u32 %v1311, 4294901760
    %1852 = vmatpush.msra.mxu0 %v1851
    %v1853 = vand.u32 %v1309, 4294901760
    %1854 = vmatpush.msra.mxu0 %v1853
    %v1855 = vand.u32 %v702, 4294901760
    %1856 = vmatmul.f32.gmra.mxu0 %v1855
    %v1857 = vpop.f32.mrf.mxu0
    %v1858 = vadd.f32 %v1821, %v1857
    %v1859 = vand.u32 %v704, 4294901760
    %1860 = vmatmul.f32.gmra.mxu0 %v1859
    %v1861 = vpop.f32.mrf.mxu0
    %v1862 = vadd.f32 %v1825, %v1861
    %v1863 = vand.u32 %v706, 4294901760
    %1864 = vmatmul.f32.gmra.mxu0 %v1863
    %v1865 = vpop.f32.mrf.mxu0
    %v1866 = vadd.f32 %v1829, %v1865
    %v1867 = vand.u32 %v708, 4294901760
    %1868 = vmatmul.f32.gmra.mxu0 %v1867
    %v1869 = vpop.f32.mrf.mxu0
    %v1870 = vadd.f32 %v1833, %v1869
    %1871 = vdwg.mxu0
    %v1872 = vmax.f32 %v1580, 0.0
    %v1873 = vmax.f32 %v1858, 0.0
    %v1874 = vmax.f32 %v1584, 0.0
    %v1875 = vmax.f32 %v1862, 0.0
    %v1876 = vmax.f32 %v1588, 0.0
    %v1877 = vmax.f32 %v1866, 0.0
    %v1878 = vmax.f32 %v1592, 0.0
    %v1879 = vmax.f32 %v1870, 0.0
    %v1880 = vperm.slane %v596, 1
    %v1881 = vperm.slane %v597, 1
    %v1882 = vmul.f32 %v1872, %v1880
    %v1883 = vmul.f32 %v1873, %v1881
    %v1884 = vmul.f32 %v1874, %v1880
    %v1885 = vmul.f32 %v1875, %v1881
    %v1886 = vmul.f32 %v1876, %v1880
    %v1887 = vmul.f32 %v1877, %v1881
    %v1888 = vmul.f32 %v1878, %v1880
    %v1889 = vmul.f32 %v1879, %v1881
    %v1890 = vadd.f32 %v1276, %v1882
    %v1891 = vadd.f32 %v1277, %v1883
    %v1892 = vadd.f32 %v1278, %v1884
    %v1893 = vadd.f32 %v1279, %v1885
    %v1894 = vadd.f32 %v1280, %v1886
    %v1895 = vadd.f32 %v1281, %v1887
    %v1896 = vadd.f32 %v1282, %v1888
    %v1897 = vadd.f32 %v1283, %v1889
    %1898 = vset.pattern.permute.xlu0 36
    %1899 = vperm.xlu0 %1898, %v43
    %v1900 = vpop.permute.xlu0 %1899
    %1902 = vset.pattern.permute.xlu0 36
    %1903 = vperm.xlu0 %1902, %v44
    %v1904 = vpop.permute.xlu0 %1903
    %1906 = vset.pattern.permute.xlu0 36
    %1907 = vperm.xlu0 %1906, %v45
    %v1908 = vpop.permute.xlu0 %1907
    %1910 = vset.pattern.permute.xlu0 36
    %1911 = vperm.xlu0 %1910, %v46
    %v1912 = vpop.permute.xlu0 %1911
    %v1914 = vadd.f32 %v646, %v1900
    %v1915 = vadd.f32 %v647, %v1900
    %v1916 = vadd.f32 %v648, %v1904
    %v1917 = vadd.f32 %v649, %v1904
    %v1918 = vadd.f32 %v650, %v1908
    %v1919 = vadd.f32 %v651, %v1908
    %v1920 = vadd.f32 %v652, %v1912
    %v1921 = vadd.f32 %v653, %v1912
    %v1922 = vmax.f32 %v1914, 0.0
    %v1923 = vmax.f32 %v1915, 0.0
    %v1924 = vmax.f32 %v1916, 0.0
    %v1925 = vmax.f32 %v1917, 0.0
    %v1926 = vmax.f32 %v1918, 0.0
    %v1927 = vmax.f32 %v1919, 0.0
    %v1928 = vmax.f32 %v1920, 0.0
    %v1929 = vmax.f32 %v1921, 0.0
    %1930 = vmatpush.msra.mxu0 0.0
    %1931 = vmatpush.msra.mxu0 0.0
    %1932 = vmatpush.msra.mxu0 0.0
    %1933 = vmatpush.msra.mxu0 0.0
    %1934 = vmatpush.msra.mxu0 0.0
    %1935 = vmatpush.msra.mxu0 0.0
    %1936 = vmatpush.msra.mxu0 0.0
    %1937 = vmatpush.msra.mxu0 0.0
    %1938 = vmatpush.msra.mxu0 0.0
    %1939 = vmatpush.msra.mxu0 0.0
    %1940 = vmatpush.msra.mxu0 0.0
    %1941 = vmatpush.msra.mxu0 0.0
    %v1942 = vand.u32 %v1928, 4294901760
    %1943 = vmatpush.msra.mxu0 %v1942
    %v1944 = vand.u32 %v1926, 4294901760
    %1945 = vmatpush.msra.mxu0 %v1944
    %v1946 = vand.u32 %v1924, 4294901760
    %1947 = vmatpush.msra.mxu0 %v1946
    %v1948 = vand.u32 %v1922, 4294901760
    %1949 = vmatpush.msra.mxu0 %v1948
    %v1950 = vand.u32 %v702, 4294901760
    %v1951 = vsub.f32 %v702, %v1950
    %v1952 = vand.u32 %v1951, 4294901760
    %v1953 = vsub.f32 %v1951, %v1952
    %v1954 = vand.u32 %v1953, 4294901760
    %1955 = vmatmul.f32.gmra.mxu0 %v1954
    %v1956 = vpop.f32.mrf.mxu0
    %v1957 = vadd.f32 %v688, %v1956
    %v1958 = vand.u32 %v704, 4294901760
    %v1959 = vsub.f32 %v704, %v1958
    %v1960 = vand.u32 %v1959, 4294901760
    %v1961 = vsub.f32 %v1959, %v1960
    %v1962 = vand.u32 %v1961, 4294901760
    %1963 = vmatmul.f32.gmra.mxu0 %v1962
    %v1964 = vpop.f32.mrf.mxu0
    %v1965 = vadd.f32 %v692, %v1964
    %v1966 = vand.u32 %v706, 4294901760
    %v1967 = vsub.f32 %v706, %v1966
    %v1968 = vand.u32 %v1967, 4294901760
    %v1969 = vsub.f32 %v1967, %v1968
    %v1970 = vand.u32 %v1969, 4294901760
    %1971 = vmatmul.f32.gmra.mxu0 %v1970
    %v1972 = vpop.f32.mrf.mxu0
    %v1973 = vadd.f32 %v696, %v1972
    %v1974 = vand.u32 %v708, 4294901760
    %v1975 = vsub.f32 %v708, %v1974
    %v1976 = vand.u32 %v1975, 4294901760
    %v1977 = vsub.f32 %v1975, %v1976
    %v1978 = vand.u32 %v1977, 4294901760
    %1979 = vmatmul.f32.gmra.mxu0 %v1978
    %v1980 = vpop.f32.mrf.mxu0
    %v1981 = vadd.f32 %v700, %v1980
    %1982 = vdwg.mxu0
    %1983 = vmatpush.msra.mxu0 0.0
    %1984 = vmatpush.msra.mxu0 0.0
    %1985 = vmatpush.msra.mxu0 0.0
    %1986 = vmatpush.msra.mxu0 0.0
    %1987 = vmatpush.msra.mxu0 0.0
    %1988 = vmatpush.msra.mxu0 0.0
    %1989 = vmatpush.msra.mxu0 0.0
    %1990 = vmatpush.msra.mxu0 0.0
    %1991 = vmatpush.msra.mxu0 0.0
    %1992 = vmatpush.msra.mxu0 0.0
    %1993 = vmatpush.msra.mxu0 0.0
    %1994 = vmatpush.msra.mxu0 0.0
    %v1995 = vand.u32 %v1928, 4294901760
    %v1996 = vsub.f32 %v1928, %v1995
    %v1997 = vand.u32 %v1996, 4294901760
    %v1998 = vsub.f32 %v1996, %v1997
    %v1999 = vand.u32 %v1998, 4294901760
    %2000 = vmatpush.msra.mxu0 %v1999
    %v2001 = vand.u32 %v1926, 4294901760
    %v2002 = vsub.f32 %v1926, %v2001
    %v2003 = vand.u32 %v2002, 4294901760
    %v2004 = vsub.f32 %v2002, %v2003
    %v2005 = vand.u32 %v2004, 4294901760
    %2006 = vmatpush.msra.mxu0 %v2005
    %v2007 = vand.u32 %v1924, 4294901760
    %v2008 = vsub.f32 %v1924, %v2007
    %v2009 = vand.u32 %v2008, 4294901760
    %v2010 = vsub.f32 %v2008, %v2009
    %v2011 = vand.u32 %v2010, 4294901760
    %2012 = vmatpush.msra.mxu0 %v2011
    %v2013 = vand.u32 %v1922, 4294901760
    %v2014 = vsub.f32 %v1922, %v2013
    %v2015 = vand.u32 %v2014, 4294901760
    %v2016 = vsub.f32 %v2014, %v2015
    %v2017 = vand.u32 %v2016, 4294901760
    %2018 = vmatpush.msra.mxu0 %v2017
    %v2019 = vand.u32 %v702, 4294901760
    %2020 = vmatmul.f32.gmra.mxu0 %v2019
    %v2021 = vpop.f32.mrf.mxu0
    %v2022 = vadd.f32 %v1957, %v2021
    %v2023 = vand.u32 %v704, 4294901760
    %2024 = vmatmul.f32.gmra.mxu0 %v2023
    %v2025 = vpop.f32.mrf.mxu0
    %v2026 = vadd.f32 %v1965, %v2025
    %v2027 = vand.u32 %v706, 4294901760
    %2028 = vmatmul.f32.gmra.mxu0 %v2027
    %v2029 = vpop.f32.mrf.mxu0
    %v2030 = vadd.f32 %v1973, %v2029
    %v2031 = vand.u32 %v708, 4294901760
    %2032 = vmatmul.f32.gmra.mxu0 %v2031
    %v2033 = vpop.f32.mrf.mxu0
    %v2034 = vadd.f32 %v1981, %v2033
    %2035 = vdwg.mxu0
    %2036 = vmatpush.msra.mxu0 0.0
    %2037 = vmatpush.msra.mxu0 0.0
    %2038 = vmatpush.msra.mxu0 0.0
    %2039 = vmatpush.msra.mxu0 0.0
    %2040 = vmatpush.msra.mxu0 0.0
    %2041 = vmatpush.msra.mxu0 0.0
    %2042 = vmatpush.msra.mxu0 0.0
    %2043 = vmatpush.msra.mxu0 0.0
    %2044 = vmatpush.msra.mxu0 0.0
    %2045 = vmatpush.msra.mxu0 0.0
    %2046 = vmatpush.msra.mxu0 0.0
    %2047 = vmatpush.msra.mxu0 0.0
    %v2048 = vand.u32 %v1928, 4294901760
    %v2049 = vsub.f32 %v1928, %v2048
    %2050 = vmatpush.msra.mxu0 %v2049
    %v2051 = vand.u32 %v1926, 4294901760
    %v2052 = vsub.f32 %v1926, %v2051
    %2053 = vmatpush.msra.mxu0 %v2052
    %v2054 = vand.u32 %v1924, 4294901760
    %v2055 = vsub.f32 %v1924, %v2054
    %2056 = vmatpush.msra.mxu0 %v2055
    %v2057 = vand.u32 %v1922, 4294901760
    %v2058 = vsub.f32 %v1922, %v2057
    %2059 = vmatpush.msra.mxu0 %v2058
    %v2060 = vand.u32 %v702, 4294901760
    %v2061 = vsub.f32 %v702, %v2060
    %2062 = vmatmul.f32.gmra.mxu0 %v2061
    %v2063 = vpop.f32.mrf.mxu0
    %v2064 = vadd.f32 %v2022, %v2063
    %v2065 = vand.u32 %v704, 4294901760
    %v2066 = vsub.f32 %v704, %v2065
    %2067 = vmatmul.f32.gmra.mxu0 %v2066
    %v2068 = vpop.f32.mrf.mxu0
    %v2069 = vadd.f32 %v2026, %v2068
    %v2070 = vand.u32 %v706, 4294901760
    %v2071 = vsub.f32 %v706, %v2070
    %2072 = vmatmul.f32.gmra.mxu0 %v2071
    %v2073 = vpop.f32.mrf.mxu0
    %v2074 = vadd.f32 %v2030, %v2073
    %v2075 = vand.u32 %v708, 4294901760
    %v2076 = vsub.f32 %v708, %v2075
    %2077 = vmatmul.f32.gmra.mxu0 %v2076
    %v2078 = vpop.f32.mrf.mxu0
    %v2079 = vadd.f32 %v2034, %v2078
    %2080 = vdwg.mxu0
    %2081 = vmatpush.msra.mxu0 0.0
    %2082 = vmatpush.msra.mxu0 0.0
    %2083 = vmatpush.msra.mxu0 0.0
    %2084 = vmatpush.msra.mxu0 0.0
    %2085 = vmatpush.msra.mxu0 0.0
    %2086 = vmatpush.msra.mxu0 0.0
    %2087 = vmatpush.msra.mxu0 0.0
    %2088 = vmatpush.msra.mxu0 0.0
    %2089 = vmatpush.msra.mxu0 0.0
    %2090 = vmatpush.msra.mxu0 0.0
    %2091 = vmatpush.msra.mxu0 0.0
    %2092 = vmatpush.msra.mxu0 0.0
    %v2093 = vand.u32 %v1928, 4294901760
    %2094 = vmatpush.msra.mxu0 %v2093
    %v2095 = vand.u32 %v1926, 4294901760
    %2096 = vmatpush.msra.mxu0 %v2095
    %v2097 = vand.u32 %v1924, 4294901760
    %2098 = vmatpush.msra.mxu0 %v2097
    %v2099 = vand.u32 %v1922, 4294901760
    %2100 = vmatpush.msra.mxu0 %v2099
    %v2101 = vand.u32 %v702, 4294901760
    %v2102 = vsub.f32 %v702, %v2101
    %v2103 = vand.u32 %v2102, 4294901760
    %2104 = vmatmul.f32.gmra.mxu0 %v2103
    %v2105 = vpop.f32.mrf.mxu0
    %v2106 = vadd.f32 %v2064, %v2105
    %v2107 = vand.u32 %v704, 4294901760
    %v2108 = vsub.f32 %v704, %v2107
    %v2109 = vand.u32 %v2108, 4294901760
    %2110 = vmatmul.f32.gmra.mxu0 %v2109
    %v2111 = vpop.f32.mrf.mxu0
    %v2112 = vadd.f32 %v2069, %v2111
    %v2113 = vand.u32 %v706, 4294901760
    %v2114 = vsub.f32 %v706, %v2113
    %v2115 = vand.u32 %v2114, 4294901760
    %2116 = vmatmul.f32.gmra.mxu0 %v2115
    %v2117 = vpop.f32.mrf.mxu0
    %v2118 = vadd.f32 %v2074, %v2117
    %v2119 = vand.u32 %v708, 4294901760
    %v2120 = vsub.f32 %v708, %v2119
    %v2121 = vand.u32 %v2120, 4294901760
    %2122 = vmatmul.f32.gmra.mxu0 %v2121
    %v2123 = vpop.f32.mrf.mxu0
    %v2124 = vadd.f32 %v2079, %v2123
    %2125 = vdwg.mxu0
    %2126 = vmatpush.msra.mxu0 0.0
    %2127 = vmatpush.msra.mxu0 0.0
    %2128 = vmatpush.msra.mxu0 0.0
    %2129 = vmatpush.msra.mxu0 0.0
    %2130 = vmatpush.msra.mxu0 0.0
    %2131 = vmatpush.msra.mxu0 0.0
    %2132 = vmatpush.msra.mxu0 0.0
    %2133 = vmatpush.msra.mxu0 0.0
    %2134 = vmatpush.msra.mxu0 0.0
    %2135 = vmatpush.msra.mxu0 0.0
    %2136 = vmatpush.msra.mxu0 0.0
    %2137 = vmatpush.msra.mxu0 0.0
    %v2138 = vand.u32 %v1928, 4294901760
    %v2139 = vsub.f32 %v1928, %v2138
    %v2140 = vand.u32 %v2139, 4294901760
    %2141 = vmatpush.msra.mxu0 %v2140
    %v2142 = vand.u32 %v1926, 4294901760
    %v2143 = vsub.f32 %v1926, %v2142
    %v2144 = vand.u32 %v2143, 4294901760
    %2145 = vmatpush.msra.mxu0 %v2144
    %v2146 = vand.u32 %v1924, 4294901760
    %v2147 = vsub.f32 %v1924, %v2146
    %v2148 = vand.u32 %v2147, 4294901760
    %2149 = vmatpush.msra.mxu0 %v2148
    %v2150 = vand.u32 %v1922, 4294901760
    %v2151 = vsub.f32 %v1922, %v2150
    %v2152 = vand.u32 %v2151, 4294901760
    %2153 = vmatpush.msra.mxu0 %v2152
    %v2154 = vand.u32 %v702, 4294901760
    %2155 = vmatmul.f32.gmra.mxu0 %v2154
    %v2156 = vpop.f32.mrf.mxu0
    %v2157 = vadd.f32 %v2106, %v2156
    %v2158 = vand.u32 %v704, 4294901760
    %2159 = vmatmul.f32.gmra.mxu0 %v2158
    %v2160 = vpop.f32.mrf.mxu0
    %v2161 = vadd.f32 %v2112, %v2160
    %v2162 = vand.u32 %v706, 4294901760
    %2163 = vmatmul.f32.gmra.mxu0 %v2162
    %v2164 = vpop.f32.mrf.mxu0
    %v2165 = vadd.f32 %v2118, %v2164
    %v2166 = vand.u32 %v708, 4294901760
    %2167 = vmatmul.f32.gmra.mxu0 %v2166
    %v2168 = vpop.f32.mrf.mxu0
    %v2169 = vadd.f32 %v2124, %v2168
    %2170 = vdwg.mxu0
    %2171 = vmatpush.msra.mxu0 0.0
    %2172 = vmatpush.msra.mxu0 0.0
    %2173 = vmatpush.msra.mxu0 0.0
    %2174 = vmatpush.msra.mxu0 0.0
    %2175 = vmatpush.msra.mxu0 0.0
    %2176 = vmatpush.msra.mxu0 0.0
    %2177 = vmatpush.msra.mxu0 0.0
    %2178 = vmatpush.msra.mxu0 0.0
    %2179 = vmatpush.msra.mxu0 0.0
    %2180 = vmatpush.msra.mxu0 0.0
    %2181 = vmatpush.msra.mxu0 0.0
    %2182 = vmatpush.msra.mxu0 0.0
    %v2183 = vand.u32 %v1928, 4294901760
    %2184 = vmatpush.msra.mxu0 %v2183
    %v2185 = vand.u32 %v1926, 4294901760
    %2186 = vmatpush.msra.mxu0 %v2185
    %v2187 = vand.u32 %v1924, 4294901760
    %2188 = vmatpush.msra.mxu0 %v2187
    %v2189 = vand.u32 %v1922, 4294901760
    %2190 = vmatpush.msra.mxu0 %v2189
    %v2191 = vand.u32 %v702, 4294901760
    %2192 = vmatmul.f32.gmra.mxu0 %v2191
    %v2193 = vpop.f32.mrf.mxu0
    %v2194 = vadd.f32 %v2157, %v2193
    %v2195 = vand.u32 %v704, 4294901760
    %2196 = vmatmul.f32.gmra.mxu0 %v2195
    %v2197 = vpop.f32.mrf.mxu0
    %v2198 = vadd.f32 %v2161, %v2197
    %v2199 = vand.u32 %v706, 4294901760
    %2200 = vmatmul.f32.gmra.mxu0 %v2199
    %v2201 = vpop.f32.mrf.mxu0
    %v2202 = vadd.f32 %v2165, %v2201
    %v2203 = vand.u32 %v708, 4294901760
    %2204 = vmatmul.f32.gmra.mxu0 %v2203
    %v2205 = vpop.f32.mrf.mxu0
    %v2206 = vadd.f32 %v2169, %v2205
    %2207 = vdwg.mxu0
    %2208 = vmatpush.msra.mxu0 0.0
    %2209 = vmatpush.msra.mxu0 0.0
    %2210 = vmatpush.msra.mxu0 0.0
    %2211 = vmatpush.msra.mxu0 0.0
    %2212 = vmatpush.msra.mxu0 0.0
    %2213 = vmatpush.msra.mxu0 0.0
    %2214 = vmatpush.msra.mxu0 0.0
    %2215 = vmatpush.msra.mxu0 0.0
    %2216 = vmatpush.msra.mxu0 0.0
    %2217 = vmatpush.msra.mxu0 0.0
    %2218 = vmatpush.msra.mxu0 0.0
    %2219 = vmatpush.msra.mxu0 0.0
    %v2220 = vand.u32 %v1929, 4294901760
    %2221 = vmatpush.msra.mxu0 %v2220
    %v2222 = vand.u32 %v1927, 4294901760
    %2223 = vmatpush.msra.mxu0 %v2222
    %v2224 = vand.u32 %v1925, 4294901760
    %2225 = vmatpush.msra.mxu0 %v2224
    %v2226 = vand.u32 %v1923, 4294901760
    %2227 = vmatpush.msra.mxu0 %v2226
    %v2228 = vand.u32 %v702, 4294901760
    %v2229 = vsub.f32 %v702, %v2228
    %v2230 = vand.u32 %v2229, 4294901760
    %v2231 = vsub.f32 %v2229, %v2230
    %v2232 = vand.u32 %v2231, 4294901760
    %2233 = vmatmul.f32.gmra.mxu0 %v2232
    %v2234 = vpop.f32.mrf.mxu0
    %v2235 = vadd.f32 %v688, %v2234
    %v2236 = vand.u32 %v704, 4294901760
    %v2237 = vsub.f32 %v704, %v2236
    %v2238 = vand.u32 %v2237, 4294901760
    %v2239 = vsub.f32 %v2237, %v2238
    %v2240 = vand.u32 %v2239, 4294901760
    %2241 = vmatmul.f32.gmra.mxu0 %v2240
    %v2242 = vpop.f32.mrf.mxu0
    %v2243 = vadd.f32 %v692, %v2242
    %v2244 = vand.u32 %v706, 4294901760
    %v2245 = vsub.f32 %v706, %v2244
    %v2246 = vand.u32 %v2245, 4294901760
    %v2247 = vsub.f32 %v2245, %v2246
    %v2248 = vand.u32 %v2247, 4294901760
    %2249 = vmatmul.f32.gmra.mxu0 %v2248
    %v2250 = vpop.f32.mrf.mxu0
    %v2251 = vadd.f32 %v696, %v2250
    %v2252 = vand.u32 %v708, 4294901760
    %v2253 = vsub.f32 %v708, %v2252
    %v2254 = vand.u32 %v2253, 4294901760
    %v2255 = vsub.f32 %v2253, %v2254
    %v2256 = vand.u32 %v2255, 4294901760
    %2257 = vmatmul.f32.gmra.mxu0 %v2256
    %v2258 = vpop.f32.mrf.mxu0
    %v2259 = vadd.f32 %v700, %v2258
    %2260 = vdwg.mxu0
    %2261 = vmatpush.msra.mxu0 0.0
    %2262 = vmatpush.msra.mxu0 0.0
    %2263 = vmatpush.msra.mxu0 0.0
    %2264 = vmatpush.msra.mxu0 0.0
    %2265 = vmatpush.msra.mxu0 0.0
    %2266 = vmatpush.msra.mxu0 0.0
    %2267 = vmatpush.msra.mxu0 0.0
    %2268 = vmatpush.msra.mxu0 0.0
    %2269 = vmatpush.msra.mxu0 0.0
    %2270 = vmatpush.msra.mxu0 0.0
    %2271 = vmatpush.msra.mxu0 0.0
    %2272 = vmatpush.msra.mxu0 0.0
    %v2273 = vand.u32 %v1929, 4294901760
    %v2274 = vsub.f32 %v1929, %v2273
    %v2275 = vand.u32 %v2274, 4294901760
    %v2276 = vsub.f32 %v2274, %v2275
    %v2277 = vand.u32 %v2276, 4294901760
    %2278 = vmatpush.msra.mxu0 %v2277
    %v2279 = vand.u32 %v1927, 4294901760
    %v2280 = vsub.f32 %v1927, %v2279
    %v2281 = vand.u32 %v2280, 4294901760
    %v2282 = vsub.f32 %v2280, %v2281
    %v2283 = vand.u32 %v2282, 4294901760
    %2284 = vmatpush.msra.mxu0 %v2283
    %v2285 = vand.u32 %v1925, 4294901760
    %v2286 = vsub.f32 %v1925, %v2285
    %v2287 = vand.u32 %v2286, 4294901760
    %v2288 = vsub.f32 %v2286, %v2287
    %v2289 = vand.u32 %v2288, 4294901760
    %2290 = vmatpush.msra.mxu0 %v2289
    %v2291 = vand.u32 %v1923, 4294901760
    %v2292 = vsub.f32 %v1923, %v2291
    %v2293 = vand.u32 %v2292, 4294901760
    %v2294 = vsub.f32 %v2292, %v2293
    %v2295 = vand.u32 %v2294, 4294901760
    %2296 = vmatpush.msra.mxu0 %v2295
    %v2297 = vand.u32 %v702, 4294901760
    %2298 = vmatmul.f32.gmra.mxu0 %v2297
    %v2299 = vpop.f32.mrf.mxu0
    %v2300 = vadd.f32 %v2235, %v2299
    %v2301 = vand.u32 %v704, 4294901760
    %2302 = vmatmul.f32.gmra.mxu0 %v2301
    %v2303 = vpop.f32.mrf.mxu0
    %v2304 = vadd.f32 %v2243, %v2303
    %v2305 = vand.u32 %v706, 4294901760
    %2306 = vmatmul.f32.gmra.mxu0 %v2305
    %v2307 = vpop.f32.mrf.mxu0
    %v2308 = vadd.f32 %v2251, %v2307
    %v2309 = vand.u32 %v708, 4294901760
    %2310 = vmatmul.f32.gmra.mxu0 %v2309
    %v2311 = vpop.f32.mrf.mxu0
    %v2312 = vadd.f32 %v2259, %v2311
    %2313 = vdwg.mxu0
    %2314 = vmatpush.msra.mxu0 0.0
    %2315 = vmatpush.msra.mxu0 0.0
    %2316 = vmatpush.msra.mxu0 0.0
    %2317 = vmatpush.msra.mxu0 0.0
    %2318 = vmatpush.msra.mxu0 0.0
    %2319 = vmatpush.msra.mxu0 0.0
    %2320 = vmatpush.msra.mxu0 0.0
    %2321 = vmatpush.msra.mxu0 0.0
    %2322 = vmatpush.msra.mxu0 0.0
    %2323 = vmatpush.msra.mxu0 0.0
    %2324 = vmatpush.msra.mxu0 0.0
    %2325 = vmatpush.msra.mxu0 0.0
    %v2326 = vand.u32 %v1929, 4294901760
    %v2327 = vsub.f32 %v1929, %v2326
    %2328 = vmatpush.msra.mxu0 %v2327
    %v2329 = vand.u32 %v1927, 4294901760
    %v2330 = vsub.f32 %v1927, %v2329
    %2331 = vmatpush.msra.mxu0 %v2330
    %v2332 = vand.u32 %v1925, 4294901760
    %v2333 = vsub.f32 %v1925, %v2332
    %2334 = vmatpush.msra.mxu0 %v2333
    %v2335 = vand.u32 %v1923, 4294901760
    %v2336 = vsub.f32 %v1923, %v2335
    %2337 = vmatpush.msra.mxu0 %v2336
    %v2338 = vand.u32 %v702, 4294901760
    %v2339 = vsub.f32 %v702, %v2338
    %2340 = vmatmul.f32.gmra.mxu0 %v2339
    %v2341 = vpop.f32.mrf.mxu0
    %v2342 = vadd.f32 %v2300, %v2341
    %v2343 = vand.u32 %v704, 4294901760
    %v2344 = vsub.f32 %v704, %v2343
    %2345 = vmatmul.f32.gmra.mxu0 %v2344
    %v2346 = vpop.f32.mrf.mxu0
    %v2347 = vadd.f32 %v2304, %v2346
    %v2348 = vand.u32 %v706, 4294901760
    %v2349 = vsub.f32 %v706, %v2348
    %2350 = vmatmul.f32.gmra.mxu0 %v2349
    %v2351 = vpop.f32.mrf.mxu0
    %v2352 = vadd.f32 %v2308, %v2351
    %v2353 = vand.u32 %v708, 4294901760
    %v2354 = vsub.f32 %v708, %v2353
    %2355 = vmatmul.f32.gmra.mxu0 %v2354
    %v2356 = vpop.f32.mrf.mxu0
    %v2357 = vadd.f32 %v2312, %v2356
    %2358 = vdwg.mxu0
    %2359 = vmatpush.msra.mxu0 0.0
    %2360 = vmatpush.msra.mxu0 0.0
    %2361 = vmatpush.msra.mxu0 0.0
    %2362 = vmatpush.msra.mxu0 0.0
    %2363 = vmatpush.msra.mxu0 0.0
    %2364 = vmatpush.msra.mxu0 0.0
    %2365 = vmatpush.msra.mxu0 0.0
    %2366 = vmatpush.msra.mxu0 0.0
    %2367 = vmatpush.msra.mxu0 0.0
    %2368 = vmatpush.msra.mxu0 0.0
    %2369 = vmatpush.msra.mxu0 0.0
    %2370 = vmatpush.msra.mxu0 0.0
    %v2371 = vand.u32 %v1929, 4294901760
    %2372 = vmatpush.msra.mxu0 %v2371
    %v2373 = vand.u32 %v1927, 4294901760
    %2374 = vmatpush.msra.mxu0 %v2373
    %v2375 = vand.u32 %v1925, 4294901760
    %2376 = vmatpush.msra.mxu0 %v2375
    %v2377 = vand.u32 %v1923, 4294901760
    %2378 = vmatpush.msra.mxu0 %v2377
    %v2379 = vand.u32 %v702, 4294901760
    %v2380 = vsub.f32 %v702, %v2379
    %v2381 = vand.u32 %v2380, 4294901760
    %2382 = vmatmul.f32.gmra.mxu0 %v2381
    %v2383 = vpop.f32.mrf.mxu0
    %v2384 = vadd.f32 %v2342, %v2383
    %v2385 = vand.u32 %v704, 4294901760
    %v2386 = vsub.f32 %v704, %v2385
    %v2387 = vand.u32 %v2386, 4294901760
    %2388 = vmatmul.f32.gmra.mxu0 %v2387
    %v2389 = vpop.f32.mrf.mxu0
    %v2390 = vadd.f32 %v2347, %v2389
    %v2391 = vand.u32 %v706, 4294901760
    %v2392 = vsub.f32 %v706, %v2391
    %v2393 = vand.u32 %v2392, 4294901760
    %2394 = vmatmul.f32.gmra.mxu0 %v2393
    %v2395 = vpop.f32.mrf.mxu0
    %v2396 = vadd.f32 %v2352, %v2395
    %v2397 = vand.u32 %v708, 4294901760
    %v2398 = vsub.f32 %v708, %v2397
    %v2399 = vand.u32 %v2398, 4294901760
    %2400 = vmatmul.f32.gmra.mxu0 %v2399
    %v2401 = vpop.f32.mrf.mxu0
    %v2402 = vadd.f32 %v2357, %v2401
    %2403 = vdwg.mxu0
    %2404 = vmatpush.msra.mxu0 0.0
    %2405 = vmatpush.msra.mxu0 0.0
    %2406 = vmatpush.msra.mxu0 0.0
    %2407 = vmatpush.msra.mxu0 0.0
    %2408 = vmatpush.msra.mxu0 0.0
    %2409 = vmatpush.msra.mxu0 0.0
    %2410 = vmatpush.msra.mxu0 0.0
    %2411 = vmatpush.msra.mxu0 0.0
    %2412 = vmatpush.msra.mxu0 0.0
    %2413 = vmatpush.msra.mxu0 0.0
    %2414 = vmatpush.msra.mxu0 0.0
    %2415 = vmatpush.msra.mxu0 0.0
    %v2416 = vand.u32 %v1929, 4294901760
    %v2417 = vsub.f32 %v1929, %v2416
    %v2418 = vand.u32 %v2417, 4294901760
    %2419 = vmatpush.msra.mxu0 %v2418
    %v2420 = vand.u32 %v1927, 4294901760
    %v2421 = vsub.f32 %v1927, %v2420
    %v2422 = vand.u32 %v2421, 4294901760
    %2423 = vmatpush.msra.mxu0 %v2422
    %v2424 = vand.u32 %v1925, 4294901760
    %v2425 = vsub.f32 %v1925, %v2424
    %v2426 = vand.u32 %v2425, 4294901760
    %2427 = vmatpush.msra.mxu0 %v2426
    %v2428 = vand.u32 %v1923, 4294901760
    %v2429 = vsub.f32 %v1923, %v2428
    %v2430 = vand.u32 %v2429, 4294901760
    %2431 = vmatpush.msra.mxu0 %v2430
    %v2432 = vand.u32 %v702, 4294901760
    %2433 = vmatmul.f32.gmra.mxu0 %v2432
    %v2434 = vpop.f32.mrf.mxu0
    %v2435 = vadd.f32 %v2384, %v2434
    %v2436 = vand.u32 %v704, 4294901760
    %2437 = vmatmul.f32.gmra.mxu0 %v2436
    %v2438 = vpop.f32.mrf.mxu0
    %v2439 = vadd.f32 %v2390, %v2438
    %v2440 = vand.u32 %v706, 4294901760
    %2441 = vmatmul.f32.gmra.mxu0 %v2440
    %v2442 = vpop.f32.mrf.mxu0
    %v2443 = vadd.f32 %v2396, %v2442
    %v2444 = vand.u32 %v708, 4294901760
    %2445 = vmatmul.f32.gmra.mxu0 %v2444
    %v2446 = vpop.f32.mrf.mxu0
    %v2447 = vadd.f32 %v2402, %v2446
    %2448 = vdwg.mxu0
    %2449 = vmatpush.msra.mxu0 0.0
    %2450 = vmatpush.msra.mxu0 0.0
    %2451 = vmatpush.msra.mxu0 0.0
    %2452 = vmatpush.msra.mxu0 0.0
    %2453 = vmatpush.msra.mxu0 0.0
    %2454 = vmatpush.msra.mxu0 0.0
    %2455 = vmatpush.msra.mxu0 0.0
    %2456 = vmatpush.msra.mxu0 0.0
    %2457 = vmatpush.msra.mxu0 0.0
    %2458 = vmatpush.msra.mxu0 0.0
    %2459 = vmatpush.msra.mxu0 0.0
    %2460 = vmatpush.msra.mxu0 0.0
    %v2461 = vand.u32 %v1929, 4294901760
    %2462 = vmatpush.msra.mxu0 %v2461
    %v2463 = vand.u32 %v1927, 4294901760
    %2464 = vmatpush.msra.mxu0 %v2463
    %v2465 = vand.u32 %v1925, 4294901760
    %2466 = vmatpush.msra.mxu0 %v2465
    %v2467 = vand.u32 %v1923, 4294901760
    %2468 = vmatpush.msra.mxu0 %v2467
    %v2469 = vand.u32 %v702, 4294901760
    %2470 = vmatmul.f32.gmra.mxu0 %v2469
    %v2471 = vpop.f32.mrf.mxu0
    %v2472 = vadd.f32 %v2435, %v2471
    %v2473 = vand.u32 %v704, 4294901760
    %2474 = vmatmul.f32.gmra.mxu0 %v2473
    %v2475 = vpop.f32.mrf.mxu0
    %v2476 = vadd.f32 %v2439, %v2475
    %v2477 = vand.u32 %v706, 4294901760
    %2478 = vmatmul.f32.gmra.mxu0 %v2477
    %v2479 = vpop.f32.mrf.mxu0
    %v2480 = vadd.f32 %v2443, %v2479
    %v2481 = vand.u32 %v708, 4294901760
    %2482 = vmatmul.f32.gmra.mxu0 %v2481
    %v2483 = vpop.f32.mrf.mxu0
    %v2484 = vadd.f32 %v2447, %v2483
    %2485 = vdwg.mxu0
    %v2486 = vmax.f32 %v2194, 0.0
    %v2487 = vmax.f32 %v2472, 0.0
    %v2488 = vmax.f32 %v2198, 0.0
    %v2489 = vmax.f32 %v2476, 0.0
    %v2490 = vmax.f32 %v2202, 0.0
    %v2491 = vmax.f32 %v2480, 0.0
    %v2492 = vmax.f32 %v2206, 0.0
    %v2493 = vmax.f32 %v2484, 0.0
    %v2494 = vperm.slane %v596, 2
    %v2495 = vperm.slane %v597, 2
    %v2496 = vmul.f32 %v2486, %v2494
    %v2497 = vmul.f32 %v2487, %v2495
    %v2498 = vmul.f32 %v2488, %v2494
    %v2499 = vmul.f32 %v2489, %v2495
    %v2500 = vmul.f32 %v2490, %v2494
    %v2501 = vmul.f32 %v2491, %v2495
    %v2502 = vmul.f32 %v2492, %v2494
    %v2503 = vmul.f32 %v2493, %v2495
    %v2504 = vadd.f32 %v1890, %v2496
    %v2505 = vadd.f32 %v1891, %v2497
    %v2506 = vadd.f32 %v1892, %v2498
    %v2507 = vadd.f32 %v1893, %v2499
    %v2508 = vadd.f32 %v1894, %v2500
    %v2509 = vadd.f32 %v1895, %v2501
    %v2510 = vadd.f32 %v1896, %v2502
    %v2511 = vadd.f32 %v1897, %v2503
    %2512 = vset.pattern.permute.xlu0 37
    %2513 = vperm.xlu0 %2512, %v43
    %v2514 = vpop.permute.xlu0 %2513
    %2516 = vset.pattern.permute.xlu0 37
    %2517 = vperm.xlu0 %2516, %v44
    %v2518 = vpop.permute.xlu0 %2517
    %2520 = vset.pattern.permute.xlu0 37
    %2521 = vperm.xlu0 %2520, %v45
    %v2522 = vpop.permute.xlu0 %2521
    %2524 = vset.pattern.permute.xlu0 37
    %2525 = vperm.xlu0 %2524, %v46
    %v2526 = vpop.permute.xlu0 %2525
    %v2528 = vadd.f32 %v646, %v2514
    %v2529 = vadd.f32 %v647, %v2514
    %v2530 = vadd.f32 %v648, %v2518
    %v2531 = vadd.f32 %v649, %v2518
    %v2532 = vadd.f32 %v650, %v2522
    %v2533 = vadd.f32 %v651, %v2522
    %v2534 = vadd.f32 %v652, %v2526
    %v2535 = vadd.f32 %v653, %v2526
    %v2536 = vmax.f32 %v2528, 0.0
    %v2537 = vmax.f32 %v2529, 0.0
    %v2538 = vmax.f32 %v2530, 0.0
    %v2539 = vmax.f32 %v2531, 0.0
    %v2540 = vmax.f32 %v2532, 0.0
    %v2541 = vmax.f32 %v2533, 0.0
    %v2542 = vmax.f32 %v2534, 0.0
    %v2543 = vmax.f32 %v2535, 0.0
    %2544 = vmatpush.msra.mxu0 0.0
    %2545 = vmatpush.msra.mxu0 0.0
    %2546 = vmatpush.msra.mxu0 0.0
    %2547 = vmatpush.msra.mxu0 0.0
    %2548 = vmatpush.msra.mxu0 0.0
    %2549 = vmatpush.msra.mxu0 0.0
    %2550 = vmatpush.msra.mxu0 0.0
    %2551 = vmatpush.msra.mxu0 0.0
    %2552 = vmatpush.msra.mxu0 0.0
    %2553 = vmatpush.msra.mxu0 0.0
    %2554 = vmatpush.msra.mxu0 0.0
    %2555 = vmatpush.msra.mxu0 0.0
    %v2556 = vand.u32 %v2542, 4294901760
    %2557 = vmatpush.msra.mxu0 %v2556
    %v2558 = vand.u32 %v2540, 4294901760
    %2559 = vmatpush.msra.mxu0 %v2558
    %v2560 = vand.u32 %v2538, 4294901760
    %2561 = vmatpush.msra.mxu0 %v2560
    %v2562 = vand.u32 %v2536, 4294901760
    %2563 = vmatpush.msra.mxu0 %v2562
    %v2564 = vand.u32 %v702, 4294901760
    %v2565 = vsub.f32 %v702, %v2564
    %v2566 = vand.u32 %v2565, 4294901760
    %v2567 = vsub.f32 %v2565, %v2566
    %v2568 = vand.u32 %v2567, 4294901760
    %2569 = vmatmul.f32.gmra.mxu0 %v2568
    %v2570 = vpop.f32.mrf.mxu0
    %v2571 = vadd.f32 %v688, %v2570
    %v2572 = vand.u32 %v704, 4294901760
    %v2573 = vsub.f32 %v704, %v2572
    %v2574 = vand.u32 %v2573, 4294901760
    %v2575 = vsub.f32 %v2573, %v2574
    %v2576 = vand.u32 %v2575, 4294901760
    %2577 = vmatmul.f32.gmra.mxu0 %v2576
    %v2578 = vpop.f32.mrf.mxu0
    %v2579 = vadd.f32 %v692, %v2578
    %v2580 = vand.u32 %v706, 4294901760
    %v2581 = vsub.f32 %v706, %v2580
    %v2582 = vand.u32 %v2581, 4294901760
    %v2583 = vsub.f32 %v2581, %v2582
    %v2584 = vand.u32 %v2583, 4294901760
    %2585 = vmatmul.f32.gmra.mxu0 %v2584
    %v2586 = vpop.f32.mrf.mxu0
    %v2587 = vadd.f32 %v696, %v2586
    %v2588 = vand.u32 %v708, 4294901760
    %v2589 = vsub.f32 %v708, %v2588
    %v2590 = vand.u32 %v2589, 4294901760
    %v2591 = vsub.f32 %v2589, %v2590
    %v2592 = vand.u32 %v2591, 4294901760
    %2593 = vmatmul.f32.gmra.mxu0 %v2592
    %v2594 = vpop.f32.mrf.mxu0
    %v2595 = vadd.f32 %v700, %v2594
    %2596 = vdwg.mxu0
    %2597 = vmatpush.msra.mxu0 0.0
    %2598 = vmatpush.msra.mxu0 0.0
    %2599 = vmatpush.msra.mxu0 0.0
    %2600 = vmatpush.msra.mxu0 0.0
    %2601 = vmatpush.msra.mxu0 0.0
    %2602 = vmatpush.msra.mxu0 0.0
    %2603 = vmatpush.msra.mxu0 0.0
    %2604 = vmatpush.msra.mxu0 0.0
    %2605 = vmatpush.msra.mxu0 0.0
    %2606 = vmatpush.msra.mxu0 0.0
    %2607 = vmatpush.msra.mxu0 0.0
    %2608 = vmatpush.msra.mxu0 0.0
    %v2609 = vand.u32 %v2542, 4294901760
    %v2610 = vsub.f32 %v2542, %v2609
    %v2611 = vand.u32 %v2610, 4294901760
    %v2612 = vsub.f32 %v2610, %v2611
    %v2613 = vand.u32 %v2612, 4294901760
    %2614 = vmatpush.msra.mxu0 %v2613
    %v2615 = vand.u32 %v2540, 4294901760
    %v2616 = vsub.f32 %v2540, %v2615
    %v2617 = vand.u32 %v2616, 4294901760
    %v2618 = vsub.f32 %v2616, %v2617
    %v2619 = vand.u32 %v2618, 4294901760
    %2620 = vmatpush.msra.mxu0 %v2619
    %v2621 = vand.u32 %v2538, 4294901760
    %v2622 = vsub.f32 %v2538, %v2621
    %v2623 = vand.u32 %v2622, 4294901760
    %v2624 = vsub.f32 %v2622, %v2623
    %v2625 = vand.u32 %v2624, 4294901760
    %2626 = vmatpush.msra.mxu0 %v2625
    %v2627 = vand.u32 %v2536, 4294901760
    %v2628 = vsub.f32 %v2536, %v2627
    %v2629 = vand.u32 %v2628, 4294901760
    %v2630 = vsub.f32 %v2628, %v2629
    %v2631 = vand.u32 %v2630, 4294901760
    %2632 = vmatpush.msra.mxu0 %v2631
    %v2633 = vand.u32 %v702, 4294901760
    %2634 = vmatmul.f32.gmra.mxu0 %v2633
    %v2635 = vpop.f32.mrf.mxu0
    %v2636 = vadd.f32 %v2571, %v2635
    %v2637 = vand.u32 %v704, 4294901760
    %2638 = vmatmul.f32.gmra.mxu0 %v2637
    %v2639 = vpop.f32.mrf.mxu0
    %v2640 = vadd.f32 %v2579, %v2639
    %v2641 = vand.u32 %v706, 4294901760
    %2642 = vmatmul.f32.gmra.mxu0 %v2641
    %v2643 = vpop.f32.mrf.mxu0
    %v2644 = vadd.f32 %v2587, %v2643
    %v2645 = vand.u32 %v708, 4294901760
    %2646 = vmatmul.f32.gmra.mxu0 %v2645
    %v2647 = vpop.f32.mrf.mxu0
    %v2648 = vadd.f32 %v2595, %v2647
    %2649 = vdwg.mxu0
    %2650 = vmatpush.msra.mxu0 0.0
    %2651 = vmatpush.msra.mxu0 0.0
    %2652 = vmatpush.msra.mxu0 0.0
    %2653 = vmatpush.msra.mxu0 0.0
    %2654 = vmatpush.msra.mxu0 0.0
    %2655 = vmatpush.msra.mxu0 0.0
    %2656 = vmatpush.msra.mxu0 0.0
    %2657 = vmatpush.msra.mxu0 0.0
    %2658 = vmatpush.msra.mxu0 0.0
    %2659 = vmatpush.msra.mxu0 0.0
    %2660 = vmatpush.msra.mxu0 0.0
    %2661 = vmatpush.msra.mxu0 0.0
    %v2662 = vand.u32 %v2542, 4294901760
    %v2663 = vsub.f32 %v2542, %v2662
    %2664 = vmatpush.msra.mxu0 %v2663
    %v2665 = vand.u32 %v2540, 4294901760
    %v2666 = vsub.f32 %v2540, %v2665
    %2667 = vmatpush.msra.mxu0 %v2666
    %v2668 = vand.u32 %v2538, 4294901760
    %v2669 = vsub.f32 %v2538, %v2668
    %2670 = vmatpush.msra.mxu0 %v2669
    %v2671 = vand.u32 %v2536, 4294901760
    %v2672 = vsub.f32 %v2536, %v2671
    %2673 = vmatpush.msra.mxu0 %v2672
    %v2674 = vand.u32 %v702, 4294901760
    %v2675 = vsub.f32 %v702, %v2674
    %2676 = vmatmul.f32.gmra.mxu0 %v2675
    %v2677 = vpop.f32.mrf.mxu0
    %v2678 = vadd.f32 %v2636, %v2677
    %v2679 = vand.u32 %v704, 4294901760
    %v2680 = vsub.f32 %v704, %v2679
    %2681 = vmatmul.f32.gmra.mxu0 %v2680
    %v2682 = vpop.f32.mrf.mxu0
    %v2683 = vadd.f32 %v2640, %v2682
    %v2684 = vand.u32 %v706, 4294901760
    %v2685 = vsub.f32 %v706, %v2684
    %2686 = vmatmul.f32.gmra.mxu0 %v2685
    %v2687 = vpop.f32.mrf.mxu0
    %v2688 = vadd.f32 %v2644, %v2687
    %v2689 = vand.u32 %v708, 4294901760
    %v2690 = vsub.f32 %v708, %v2689
    %2691 = vmatmul.f32.gmra.mxu0 %v2690
    %v2692 = vpop.f32.mrf.mxu0
    %v2693 = vadd.f32 %v2648, %v2692
    %2694 = vdwg.mxu0
    %2695 = vmatpush.msra.mxu0 0.0
    %2696 = vmatpush.msra.mxu0 0.0
    %2697 = vmatpush.msra.mxu0 0.0
    %2698 = vmatpush.msra.mxu0 0.0
    %2699 = vmatpush.msra.mxu0 0.0
    %2700 = vmatpush.msra.mxu0 0.0
    %2701 = vmatpush.msra.mxu0 0.0
    %2702 = vmatpush.msra.mxu0 0.0
    %2703 = vmatpush.msra.mxu0 0.0
    %2704 = vmatpush.msra.mxu0 0.0
    %2705 = vmatpush.msra.mxu0 0.0
    %2706 = vmatpush.msra.mxu0 0.0
    %v2707 = vand.u32 %v2542, 4294901760
    %2708 = vmatpush.msra.mxu0 %v2707
    %v2709 = vand.u32 %v2540, 4294901760
    %2710 = vmatpush.msra.mxu0 %v2709
    %v2711 = vand.u32 %v2538, 4294901760
    %2712 = vmatpush.msra.mxu0 %v2711
    %v2713 = vand.u32 %v2536, 4294901760
    %2714 = vmatpush.msra.mxu0 %v2713
    %v2715 = vand.u32 %v702, 4294901760
    %v2716 = vsub.f32 %v702, %v2715
    %v2717 = vand.u32 %v2716, 4294901760
    %2718 = vmatmul.f32.gmra.mxu0 %v2717
    %v2719 = vpop.f32.mrf.mxu0
    %v2720 = vadd.f32 %v2678, %v2719
    %v2721 = vand.u32 %v704, 4294901760
    %v2722 = vsub.f32 %v704, %v2721
    %v2723 = vand.u32 %v2722, 4294901760
    %2724 = vmatmul.f32.gmra.mxu0 %v2723
    %v2725 = vpop.f32.mrf.mxu0
    %v2726 = vadd.f32 %v2683, %v2725
    %v2727 = vand.u32 %v706, 4294901760
    %v2728 = vsub.f32 %v706, %v2727
    %v2729 = vand.u32 %v2728, 4294901760
    %2730 = vmatmul.f32.gmra.mxu0 %v2729
    %v2731 = vpop.f32.mrf.mxu0
    %v2732 = vadd.f32 %v2688, %v2731
    %v2733 = vand.u32 %v708, 4294901760
    %v2734 = vsub.f32 %v708, %v2733
    %v2735 = vand.u32 %v2734, 4294901760
    %2736 = vmatmul.f32.gmra.mxu0 %v2735
    %v2737 = vpop.f32.mrf.mxu0
    %v2738 = vadd.f32 %v2693, %v2737
    %2739 = vdwg.mxu0
    %2740 = vmatpush.msra.mxu0 0.0
    %2741 = vmatpush.msra.mxu0 0.0
    %2742 = vmatpush.msra.mxu0 0.0
    %2743 = vmatpush.msra.mxu0 0.0
    %2744 = vmatpush.msra.mxu0 0.0
    %2745 = vmatpush.msra.mxu0 0.0
    %2746 = vmatpush.msra.mxu0 0.0
    %2747 = vmatpush.msra.mxu0 0.0
    %2748 = vmatpush.msra.mxu0 0.0
    %2749 = vmatpush.msra.mxu0 0.0
    %2750 = vmatpush.msra.mxu0 0.0
    %2751 = vmatpush.msra.mxu0 0.0
    %v2752 = vand.u32 %v2542, 4294901760
    %v2753 = vsub.f32 %v2542, %v2752
    %v2754 = vand.u32 %v2753, 4294901760
    %2755 = vmatpush.msra.mxu0 %v2754
    %v2756 = vand.u32 %v2540, 4294901760
    %v2757 = vsub.f32 %v2540, %v2756
    %v2758 = vand.u32 %v2757, 4294901760
    %2759 = vmatpush.msra.mxu0 %v2758
    %v2760 = vand.u32 %v2538, 4294901760
    %v2761 = vsub.f32 %v2538, %v2760
    %v2762 = vand.u32 %v2761, 4294901760
    %2763 = vmatpush.msra.mxu0 %v2762
    %v2764 = vand.u32 %v2536, 4294901760
    %v2765 = vsub.f32 %v2536, %v2764
    %v2766 = vand.u32 %v2765, 4294901760
    %2767 = vmatpush.msra.mxu0 %v2766
    %v2768 = vand.u32 %v702, 4294901760
    %2769 = vmatmul.f32.gmra.mxu0 %v2768
    %v2770 = vpop.f32.mrf.mxu0
    %v2771 = vadd.f32 %v2720, %v2770
    %v2772 = vand.u32 %v704, 4294901760
    %2773 = vmatmul.f32.gmra.mxu0 %v2772
    %v2774 = vpop.f32.mrf.mxu0
    %v2775 = vadd.f32 %v2726, %v2774
    %v2776 = vand.u32 %v706, 4294901760
    %2777 = vmatmul.f32.gmra.mxu0 %v2776
    %v2778 = vpop.f32.mrf.mxu0
    %v2779 = vadd.f32 %v2732, %v2778
    %v2780 = vand.u32 %v708, 4294901760
    %2781 = vmatmul.f32.gmra.mxu0 %v2780
    %v2782 = vpop.f32.mrf.mxu0
    %v2783 = vadd.f32 %v2738, %v2782
    %2784 = vdwg.mxu0
    %2785 = vmatpush.msra.mxu0 0.0
    %2786 = vmatpush.msra.mxu0 0.0
    %2787 = vmatpush.msra.mxu0 0.0
    %2788 = vmatpush.msra.mxu0 0.0
    %2789 = vmatpush.msra.mxu0 0.0
    %2790 = vmatpush.msra.mxu0 0.0
    %2791 = vmatpush.msra.mxu0 0.0
    %2792 = vmatpush.msra.mxu0 0.0
    %2793 = vmatpush.msra.mxu0 0.0
    %2794 = vmatpush.msra.mxu0 0.0
    %2795 = vmatpush.msra.mxu0 0.0
    %2796 = vmatpush.msra.mxu0 0.0
    %v2797 = vand.u32 %v2542, 4294901760
    %2798 = vmatpush.msra.mxu0 %v2797
    %v2799 = vand.u32 %v2540, 4294901760
    %2800 = vmatpush.msra.mxu0 %v2799
    %v2801 = vand.u32 %v2538, 4294901760
    %2802 = vmatpush.msra.mxu0 %v2801
    %v2803 = vand.u32 %v2536, 4294901760
    %2804 = vmatpush.msra.mxu0 %v2803
    %v2805 = vand.u32 %v702, 4294901760
    %2806 = vmatmul.f32.gmra.mxu0 %v2805
    %v2807 = vpop.f32.mrf.mxu0
    %v2808 = vadd.f32 %v2771, %v2807
    %v2809 = vand.u32 %v704, 4294901760
    %2810 = vmatmul.f32.gmra.mxu0 %v2809
    %v2811 = vpop.f32.mrf.mxu0
    %v2812 = vadd.f32 %v2775, %v2811
    %v2813 = vand.u32 %v706, 4294901760
    %2814 = vmatmul.f32.gmra.mxu0 %v2813
    %v2815 = vpop.f32.mrf.mxu0
    %v2816 = vadd.f32 %v2779, %v2815
    %v2817 = vand.u32 %v708, 4294901760
    %2818 = vmatmul.f32.gmra.mxu0 %v2817
    %v2819 = vpop.f32.mrf.mxu0
    %v2820 = vadd.f32 %v2783, %v2819
    %2821 = vdwg.mxu0
    %2822 = vmatpush.msra.mxu0 0.0
    %2823 = vmatpush.msra.mxu0 0.0
    %2824 = vmatpush.msra.mxu0 0.0
    %2825 = vmatpush.msra.mxu0 0.0
    %2826 = vmatpush.msra.mxu0 0.0
    %2827 = vmatpush.msra.mxu0 0.0
    %2828 = vmatpush.msra.mxu0 0.0
    %2829 = vmatpush.msra.mxu0 0.0
    %2830 = vmatpush.msra.mxu0 0.0
    %2831 = vmatpush.msra.mxu0 0.0
    %2832 = vmatpush.msra.mxu0 0.0
    %2833 = vmatpush.msra.mxu0 0.0
    %v2834 = vand.u32 %v2543, 4294901760
    %2835 = vmatpush.msra.mxu0 %v2834
    %v2836 = vand.u32 %v2541, 4294901760
    %2837 = vmatpush.msra.mxu0 %v2836
    %v2838 = vand.u32 %v2539, 4294901760
    %2839 = vmatpush.msra.mxu0 %v2838
    %v2840 = vand.u32 %v2537, 4294901760
    %2841 = vmatpush.msra.mxu0 %v2840
    %v2842 = vand.u32 %v702, 4294901760
    %v2843 = vsub.f32 %v702, %v2842
    %v2844 = vand.u32 %v2843, 4294901760
    %v2845 = vsub.f32 %v2843, %v2844
    %v2846 = vand.u32 %v2845, 4294901760
    %2847 = vmatmul.f32.gmra.mxu0 %v2846
    %v2848 = vpop.f32.mrf.mxu0
    %v2849 = vadd.f32 %v688, %v2848
    %v2850 = vand.u32 %v704, 4294901760
    %v2851 = vsub.f32 %v704, %v2850
    %v2852 = vand.u32 %v2851, 4294901760
    %v2853 = vsub.f32 %v2851, %v2852
    %v2854 = vand.u32 %v2853, 4294901760
    %2855 = vmatmul.f32.gmra.mxu0 %v2854
    %v2856 = vpop.f32.mrf.mxu0
    %v2857 = vadd.f32 %v692, %v2856
    %v2858 = vand.u32 %v706, 4294901760
    %v2859 = vsub.f32 %v706, %v2858
    %v2860 = vand.u32 %v2859, 4294901760
    %v2861 = vsub.f32 %v2859, %v2860
    %v2862 = vand.u32 %v2861, 4294901760
    %2863 = vmatmul.f32.gmra.mxu0 %v2862
    %v2864 = vpop.f32.mrf.mxu0
    %v2865 = vadd.f32 %v696, %v2864
    %v2866 = vand.u32 %v708, 4294901760
    %v2867 = vsub.f32 %v708, %v2866
    %v2868 = vand.u32 %v2867, 4294901760
    %v2869 = vsub.f32 %v2867, %v2868
    %v2870 = vand.u32 %v2869, 4294901760
    %2871 = vmatmul.f32.gmra.mxu0 %v2870
    %v2872 = vpop.f32.mrf.mxu0
    %v2873 = vadd.f32 %v700, %v2872
    %2874 = vdwg.mxu0
    %2875 = vmatpush.msra.mxu0 0.0
    %2876 = vmatpush.msra.mxu0 0.0
    %2877 = vmatpush.msra.mxu0 0.0
    %2878 = vmatpush.msra.mxu0 0.0
    %2879 = vmatpush.msra.mxu0 0.0
    %2880 = vmatpush.msra.mxu0 0.0
    %2881 = vmatpush.msra.mxu0 0.0
    %2882 = vmatpush.msra.mxu0 0.0
    %2883 = vmatpush.msra.mxu0 0.0
    %2884 = vmatpush.msra.mxu0 0.0
    %2885 = vmatpush.msra.mxu0 0.0
    %2886 = vmatpush.msra.mxu0 0.0
    %v2887 = vand.u32 %v2543, 4294901760
    %v2888 = vsub.f32 %v2543, %v2887
    %v2889 = vand.u32 %v2888, 4294901760
    %v2890 = vsub.f32 %v2888, %v2889
    %v2891 = vand.u32 %v2890, 4294901760
    %2892 = vmatpush.msra.mxu0 %v2891
    %v2893 = vand.u32 %v2541, 4294901760
    %v2894 = vsub.f32 %v2541, %v2893
    %v2895 = vand.u32 %v2894, 4294901760
    %v2896 = vsub.f32 %v2894, %v2895
    %v2897 = vand.u32 %v2896, 4294901760
    %2898 = vmatpush.msra.mxu0 %v2897
    %v2899 = vand.u32 %v2539, 4294901760
    %v2900 = vsub.f32 %v2539, %v2899
    %v2901 = vand.u32 %v2900, 4294901760
    %v2902 = vsub.f32 %v2900, %v2901
    %v2903 = vand.u32 %v2902, 4294901760
    %2904 = vmatpush.msra.mxu0 %v2903
    %v2905 = vand.u32 %v2537, 4294901760
    %v2906 = vsub.f32 %v2537, %v2905
    %v2907 = vand.u32 %v2906, 4294901760
    %v2908 = vsub.f32 %v2906, %v2907
    %v2909 = vand.u32 %v2908, 4294901760
    %2910 = vmatpush.msra.mxu0 %v2909
    %v2911 = vand.u32 %v702, 4294901760
    %2912 = vmatmul.f32.gmra.mxu0 %v2911
    %v2913 = vpop.f32.mrf.mxu0
    %v2914 = vadd.f32 %v2849, %v2913
    %v2915 = vand.u32 %v704, 4294901760
    %2916 = vmatmul.f32.gmra.mxu0 %v2915
    %v2917 = vpop.f32.mrf.mxu0
    %v2918 = vadd.f32 %v2857, %v2917
    %v2919 = vand.u32 %v706, 4294901760
    %2920 = vmatmul.f32.gmra.mxu0 %v2919
    %v2921 = vpop.f32.mrf.mxu0
    %v2922 = vadd.f32 %v2865, %v2921
    %v2923 = vand.u32 %v708, 4294901760
    %2924 = vmatmul.f32.gmra.mxu0 %v2923
    %v2925 = vpop.f32.mrf.mxu0
    %v2926 = vadd.f32 %v2873, %v2925
    %2927 = vdwg.mxu0
    %2928 = vmatpush.msra.mxu0 0.0
    %2929 = vmatpush.msra.mxu0 0.0
    %2930 = vmatpush.msra.mxu0 0.0
    %2931 = vmatpush.msra.mxu0 0.0
    %2932 = vmatpush.msra.mxu0 0.0
    %2933 = vmatpush.msra.mxu0 0.0
    %2934 = vmatpush.msra.mxu0 0.0
    %2935 = vmatpush.msra.mxu0 0.0
    %2936 = vmatpush.msra.mxu0 0.0
    %2937 = vmatpush.msra.mxu0 0.0
    %2938 = vmatpush.msra.mxu0 0.0
    %2939 = vmatpush.msra.mxu0 0.0
    %v2940 = vand.u32 %v2543, 4294901760
    %v2941 = vsub.f32 %v2543, %v2940
    %2942 = vmatpush.msra.mxu0 %v2941
    %v2943 = vand.u32 %v2541, 4294901760
    %v2944 = vsub.f32 %v2541, %v2943
    %2945 = vmatpush.msra.mxu0 %v2944
    %v2946 = vand.u32 %v2539, 4294901760
    %v2947 = vsub.f32 %v2539, %v2946
    %2948 = vmatpush.msra.mxu0 %v2947
    %v2949 = vand.u32 %v2537, 4294901760
    %v2950 = vsub.f32 %v2537, %v2949
    %2951 = vmatpush.msra.mxu0 %v2950
    %v2952 = vand.u32 %v702, 4294901760
    %v2953 = vsub.f32 %v702, %v2952
    %2954 = vmatmul.f32.gmra.mxu0 %v2953
    %v2955 = vpop.f32.mrf.mxu0
    %v2956 = vadd.f32 %v2914, %v2955
    %v2957 = vand.u32 %v704, 4294901760
    %v2958 = vsub.f32 %v704, %v2957
    %2959 = vmatmul.f32.gmra.mxu0 %v2958
    %v2960 = vpop.f32.mrf.mxu0
    %v2961 = vadd.f32 %v2918, %v2960
    %v2962 = vand.u32 %v706, 4294901760
    %v2963 = vsub.f32 %v706, %v2962
    %2964 = vmatmul.f32.gmra.mxu0 %v2963
    %v2965 = vpop.f32.mrf.mxu0
    %v2966 = vadd.f32 %v2922, %v2965
    %v2967 = vand.u32 %v708, 4294901760
    %v2968 = vsub.f32 %v708, %v2967
    %2969 = vmatmul.f32.gmra.mxu0 %v2968
    %v2970 = vpop.f32.mrf.mxu0
    %v2971 = vadd.f32 %v2926, %v2970
    %2972 = vdwg.mxu0
    %2973 = vmatpush.msra.mxu0 0.0
    %2974 = vmatpush.msra.mxu0 0.0
    %2975 = vmatpush.msra.mxu0 0.0
    %2976 = vmatpush.msra.mxu0 0.0
    %2977 = vmatpush.msra.mxu0 0.0
    %2978 = vmatpush.msra.mxu0 0.0
    %2979 = vmatpush.msra.mxu0 0.0
    %2980 = vmatpush.msra.mxu0 0.0
    %2981 = vmatpush.msra.mxu0 0.0
    %2982 = vmatpush.msra.mxu0 0.0
    %2983 = vmatpush.msra.mxu0 0.0
    %2984 = vmatpush.msra.mxu0 0.0
    %v2985 = vand.u32 %v2543, 4294901760
    %2986 = vmatpush.msra.mxu0 %v2985
    %v2987 = vand.u32 %v2541, 4294901760
    %2988 = vmatpush.msra.mxu0 %v2987
    %v2989 = vand.u32 %v2539, 4294901760
    %2990 = vmatpush.msra.mxu0 %v2989
    %v2991 = vand.u32 %v2537, 4294901760
    %2992 = vmatpush.msra.mxu0 %v2991
    %v2993 = vand.u32 %v702, 4294901760
    %v2994 = vsub.f32 %v702, %v2993
    %v2995 = vand.u32 %v2994, 4294901760
    %2996 = vmatmul.f32.gmra.mxu0 %v2995
    %v2997 = vpop.f32.mrf.mxu0
    %v2998 = vadd.f32 %v2956, %v2997
    %v2999 = vand.u32 %v704, 4294901760
    %v3000 = vsub.f32 %v704, %v2999
    %v3001 = vand.u32 %v3000, 4294901760
    %3002 = vmatmul.f32.gmra.mxu0 %v3001
    %v3003 = vpop.f32.mrf.mxu0
    %v3004 = vadd.f32 %v2961, %v3003
    %v3005 = vand.u32 %v706, 4294901760
    %v3006 = vsub.f32 %v706, %v3005
    %v3007 = vand.u32 %v3006, 4294901760
    %3008 = vmatmul.f32.gmra.mxu0 %v3007
    %v3009 = vpop.f32.mrf.mxu0
    %v3010 = vadd.f32 %v2966, %v3009
    %v3011 = vand.u32 %v708, 4294901760
    %v3012 = vsub.f32 %v708, %v3011
    %v3013 = vand.u32 %v3012, 4294901760
    %3014 = vmatmul.f32.gmra.mxu0 %v3013
    %v3015 = vpop.f32.mrf.mxu0
    %v3016 = vadd.f32 %v2971, %v3015
    %3017 = vdwg.mxu0
    %3018 = vmatpush.msra.mxu0 0.0
    %3019 = vmatpush.msra.mxu0 0.0
    %3020 = vmatpush.msra.mxu0 0.0
    %3021 = vmatpush.msra.mxu0 0.0
    %3022 = vmatpush.msra.mxu0 0.0
    %3023 = vmatpush.msra.mxu0 0.0
    %3024 = vmatpush.msra.mxu0 0.0
    %3025 = vmatpush.msra.mxu0 0.0
    %3026 = vmatpush.msra.mxu0 0.0
    %3027 = vmatpush.msra.mxu0 0.0
    %3028 = vmatpush.msra.mxu0 0.0
    %3029 = vmatpush.msra.mxu0 0.0
    %v3030 = vand.u32 %v2543, 4294901760
    %v3031 = vsub.f32 %v2543, %v3030
    %v3032 = vand.u32 %v3031, 4294901760
    %3033 = vmatpush.msra.mxu0 %v3032
    %v3034 = vand.u32 %v2541, 4294901760
    %v3035 = vsub.f32 %v2541, %v3034
    %v3036 = vand.u32 %v3035, 4294901760
    %3037 = vmatpush.msra.mxu0 %v3036
    %v3038 = vand.u32 %v2539, 4294901760
    %v3039 = vsub.f32 %v2539, %v3038
    %v3040 = vand.u32 %v3039, 4294901760
    %3041 = vmatpush.msra.mxu0 %v3040
    %v3042 = vand.u32 %v2537, 4294901760
    %v3043 = vsub.f32 %v2537, %v3042
    %v3044 = vand.u32 %v3043, 4294901760
    %3045 = vmatpush.msra.mxu0 %v3044
    %v3046 = vand.u32 %v702, 4294901760
    %3047 = vmatmul.f32.gmra.mxu0 %v3046
    %v3048 = vpop.f32.mrf.mxu0
    %v3049 = vadd.f32 %v2998, %v3048
    %v3050 = vand.u32 %v704, 4294901760
    %3051 = vmatmul.f32.gmra.mxu0 %v3050
    %v3052 = vpop.f32.mrf.mxu0
    %v3053 = vadd.f32 %v3004, %v3052
    %v3054 = vand.u32 %v706, 4294901760
    %3055 = vmatmul.f32.gmra.mxu0 %v3054
    %v3056 = vpop.f32.mrf.mxu0
    %v3057 = vadd.f32 %v3010, %v3056
    %v3058 = vand.u32 %v708, 4294901760
    %3059 = vmatmul.f32.gmra.mxu0 %v3058
    %v3060 = vpop.f32.mrf.mxu0
    %v3061 = vadd.f32 %v3016, %v3060
    %3062 = vdwg.mxu0
    %3063 = vmatpush.msra.mxu0 0.0
    %3064 = vmatpush.msra.mxu0 0.0
    %3065 = vmatpush.msra.mxu0 0.0
    %3066 = vmatpush.msra.mxu0 0.0
    %3067 = vmatpush.msra.mxu0 0.0
    %3068 = vmatpush.msra.mxu0 0.0
    %3069 = vmatpush.msra.mxu0 0.0
    %3070 = vmatpush.msra.mxu0 0.0
    %3071 = vmatpush.msra.mxu0 0.0
    %3072 = vmatpush.msra.mxu0 0.0
    %3073 = vmatpush.msra.mxu0 0.0
    %3074 = vmatpush.msra.mxu0 0.0
    %v3075 = vand.u32 %v2543, 4294901760
    %3076 = vmatpush.msra.mxu0 %v3075
    %v3077 = vand.u32 %v2541, 4294901760
    %3078 = vmatpush.msra.mxu0 %v3077
    %v3079 = vand.u32 %v2539, 4294901760
    %3080 = vmatpush.msra.mxu0 %v3079
    %v3081 = vand.u32 %v2537, 4294901760
    %3082 = vmatpush.msra.mxu0 %v3081
    %v3083 = vand.u32 %v702, 4294901760
    %3084 = vmatmul.f32.gmra.mxu0 %v3083
    %v3085 = vpop.f32.mrf.mxu0
    %v3086 = vadd.f32 %v3049, %v3085
    %v3087 = vand.u32 %v704, 4294901760
    %3088 = vmatmul.f32.gmra.mxu0 %v3087
    %v3089 = vpop.f32.mrf.mxu0
    %v3090 = vadd.f32 %v3053, %v3089
    %v3091 = vand.u32 %v706, 4294901760
    %3092 = vmatmul.f32.gmra.mxu0 %v3091
    %v3093 = vpop.f32.mrf.mxu0
    %v3094 = vadd.f32 %v3057, %v3093
    %v3095 = vand.u32 %v708, 4294901760
    %3096 = vmatmul.f32.gmra.mxu0 %v3095
    %v3097 = vpop.f32.mrf.mxu0
    %v3098 = vadd.f32 %v3061, %v3097
    %3099 = vdwg.mxu0
    %v3100 = vmax.f32 %v2808, 0.0
    %v3101 = vmax.f32 %v3086, 0.0
    %v3102 = vmax.f32 %v2812, 0.0
    %v3103 = vmax.f32 %v3090, 0.0
    %v3104 = vmax.f32 %v2816, 0.0
    %v3105 = vmax.f32 %v3094, 0.0
    %v3106 = vmax.f32 %v2820, 0.0
    %v3107 = vmax.f32 %v3098, 0.0
    %v3108 = vperm.slane %v596, 3
    %v3109 = vperm.slane %v597, 3
    %v3110 = vmul.f32 %v3100, %v3108
    %v3111 = vmul.f32 %v3101, %v3109
    %v3112 = vmul.f32 %v3102, %v3108
    %v3113 = vmul.f32 %v3103, %v3109
    %v3114 = vmul.f32 %v3104, %v3108
    %v3115 = vmul.f32 %v3105, %v3109
    %v3116 = vmul.f32 %v3106, %v3108
    %v3117 = vmul.f32 %v3107, %v3109
    %v3118 = vadd.f32 %v2504, %v3110
    %v3119 = vadd.f32 %v2505, %v3111
    %v3120 = vadd.f32 %v2506, %v3112
    %v3121 = vadd.f32 %v2507, %v3113
    %v3122 = vadd.f32 %v2508, %v3114
    %v3123 = vadd.f32 %v2509, %v3115
    %v3124 = vadd.f32 %v2510, %v3116
    %v3125 = vadd.f32 %v2511, %v3117
    %3126 = vset.pattern.permute.xlu0 38
    %3127 = vperm.xlu0 %3126, %v43
    %v3128 = vpop.permute.xlu0 %3127
    %3130 = vset.pattern.permute.xlu0 38
    %3131 = vperm.xlu0 %3130, %v44
    %v3132 = vpop.permute.xlu0 %3131
    %3134 = vset.pattern.permute.xlu0 38
    %3135 = vperm.xlu0 %3134, %v45
    %v3136 = vpop.permute.xlu0 %3135
    %3138 = vset.pattern.permute.xlu0 38
    %3139 = vperm.xlu0 %3138, %v46
    %v3140 = vpop.permute.xlu0 %3139
    %v3142 = vadd.f32 %v646, %v3128
    %v3143 = vadd.f32 %v647, %v3128
    %v3144 = vadd.f32 %v648, %v3132
    %v3145 = vadd.f32 %v649, %v3132
    %v3146 = vadd.f32 %v650, %v3136
    %v3147 = vadd.f32 %v651, %v3136
    %v3148 = vadd.f32 %v652, %v3140
    %v3149 = vadd.f32 %v653, %v3140
    %v3150 = vmax.f32 %v3142, 0.0
    %v3151 = vmax.f32 %v3143, 0.0
    %v3152 = vmax.f32 %v3144, 0.0
    %v3153 = vmax.f32 %v3145, 0.0
    %v3154 = vmax.f32 %v3146, 0.0
    %v3155 = vmax.f32 %v3147, 0.0
    %v3156 = vmax.f32 %v3148, 0.0
    %v3157 = vmax.f32 %v3149, 0.0
    %3158 = vmatpush.msra.mxu0 0.0
    %3159 = vmatpush.msra.mxu0 0.0
    %3160 = vmatpush.msra.mxu0 0.0
    %3161 = vmatpush.msra.mxu0 0.0
    %3162 = vmatpush.msra.mxu0 0.0
    %3163 = vmatpush.msra.mxu0 0.0
    %3164 = vmatpush.msra.mxu0 0.0
    %3165 = vmatpush.msra.mxu0 0.0
    %3166 = vmatpush.msra.mxu0 0.0
    %3167 = vmatpush.msra.mxu0 0.0
    %3168 = vmatpush.msra.mxu0 0.0
    %3169 = vmatpush.msra.mxu0 0.0
    %v3170 = vand.u32 %v3156, 4294901760
    %3171 = vmatpush.msra.mxu0 %v3170
    %v3172 = vand.u32 %v3154, 4294901760
    %3173 = vmatpush.msra.mxu0 %v3172
    %v3174 = vand.u32 %v3152, 4294901760
    %3175 = vmatpush.msra.mxu0 %v3174
    %v3176 = vand.u32 %v3150, 4294901760
    %3177 = vmatpush.msra.mxu0 %v3176
    %v3178 = vand.u32 %v702, 4294901760
    %v3179 = vsub.f32 %v702, %v3178
    %v3180 = vand.u32 %v3179, 4294901760
    %v3181 = vsub.f32 %v3179, %v3180
    %v3182 = vand.u32 %v3181, 4294901760
    %3183 = vmatmul.f32.gmra.mxu0 %v3182
    %v3184 = vpop.f32.mrf.mxu0
    %v3185 = vadd.f32 %v688, %v3184
    %v3186 = vand.u32 %v704, 4294901760
    %v3187 = vsub.f32 %v704, %v3186
    %v3188 = vand.u32 %v3187, 4294901760
    %v3189 = vsub.f32 %v3187, %v3188
    %v3190 = vand.u32 %v3189, 4294901760
    %3191 = vmatmul.f32.gmra.mxu0 %v3190
    %v3192 = vpop.f32.mrf.mxu0
    %v3193 = vadd.f32 %v692, %v3192
    %v3194 = vand.u32 %v706, 4294901760
    %v3195 = vsub.f32 %v706, %v3194
    %v3196 = vand.u32 %v3195, 4294901760
    %v3197 = vsub.f32 %v3195, %v3196
    %v3198 = vand.u32 %v3197, 4294901760
    %3199 = vmatmul.f32.gmra.mxu0 %v3198
    %v3200 = vpop.f32.mrf.mxu0
    %v3201 = vadd.f32 %v696, %v3200
    %v3202 = vand.u32 %v708, 4294901760
    %v3203 = vsub.f32 %v708, %v3202
    %v3204 = vand.u32 %v3203, 4294901760
    %v3205 = vsub.f32 %v3203, %v3204
    %v3206 = vand.u32 %v3205, 4294901760
    %3207 = vmatmul.f32.gmra.mxu0 %v3206
    %v3208 = vpop.f32.mrf.mxu0
    %v3209 = vadd.f32 %v700, %v3208
    %3210 = vdwg.mxu0
    %3211 = vmatpush.msra.mxu0 0.0
    %3212 = vmatpush.msra.mxu0 0.0
    %3213 = vmatpush.msra.mxu0 0.0
    %3214 = vmatpush.msra.mxu0 0.0
    %3215 = vmatpush.msra.mxu0 0.0
    %3216 = vmatpush.msra.mxu0 0.0
    %3217 = vmatpush.msra.mxu0 0.0
    %3218 = vmatpush.msra.mxu0 0.0
    %3219 = vmatpush.msra.mxu0 0.0
    %3220 = vmatpush.msra.mxu0 0.0
    %3221 = vmatpush.msra.mxu0 0.0
    %3222 = vmatpush.msra.mxu0 0.0
    %v3223 = vand.u32 %v3156, 4294901760
    %v3224 = vsub.f32 %v3156, %v3223
    %v3225 = vand.u32 %v3224, 4294901760
    %v3226 = vsub.f32 %v3224, %v3225
    %v3227 = vand.u32 %v3226, 4294901760
    %3228 = vmatpush.msra.mxu0 %v3227
    %v3229 = vand.u32 %v3154, 4294901760
    %v3230 = vsub.f32 %v3154, %v3229
    %v3231 = vand.u32 %v3230, 4294901760
    %v3232 = vsub.f32 %v3230, %v3231
    %v3233 = vand.u32 %v3232, 4294901760
    %3234 = vmatpush.msra.mxu0 %v3233
    %v3235 = vand.u32 %v3152, 4294901760
    %v3236 = vsub.f32 %v3152, %v3235
    %v3237 = vand.u32 %v3236, 4294901760
    %v3238 = vsub.f32 %v3236, %v3237
    %v3239 = vand.u32 %v3238, 4294901760
    %3240 = vmatpush.msra.mxu0 %v3239
    %v3241 = vand.u32 %v3150, 4294901760
    %v3242 = vsub.f32 %v3150, %v3241
    %v3243 = vand.u32 %v3242, 4294901760
    %v3244 = vsub.f32 %v3242, %v3243
    %v3245 = vand.u32 %v3244, 4294901760
    %3246 = vmatpush.msra.mxu0 %v3245
    %v3247 = vand.u32 %v702, 4294901760
    %3248 = vmatmul.f32.gmra.mxu0 %v3247
    %v3249 = vpop.f32.mrf.mxu0
    %v3250 = vadd.f32 %v3185, %v3249
    %v3251 = vand.u32 %v704, 4294901760
    %3252 = vmatmul.f32.gmra.mxu0 %v3251
    %v3253 = vpop.f32.mrf.mxu0
    %v3254 = vadd.f32 %v3193, %v3253
    %v3255 = vand.u32 %v706, 4294901760
    %3256 = vmatmul.f32.gmra.mxu0 %v3255
    %v3257 = vpop.f32.mrf.mxu0
    %v3258 = vadd.f32 %v3201, %v3257
    %v3259 = vand.u32 %v708, 4294901760
    %3260 = vmatmul.f32.gmra.mxu0 %v3259
    %v3261 = vpop.f32.mrf.mxu0
    %v3262 = vadd.f32 %v3209, %v3261
    %3263 = vdwg.mxu0
    %3264 = vmatpush.msra.mxu0 0.0
    %3265 = vmatpush.msra.mxu0 0.0
    %3266 = vmatpush.msra.mxu0 0.0
    %3267 = vmatpush.msra.mxu0 0.0
    %3268 = vmatpush.msra.mxu0 0.0
    %3269 = vmatpush.msra.mxu0 0.0
    %3270 = vmatpush.msra.mxu0 0.0
    %3271 = vmatpush.msra.mxu0 0.0
    %3272 = vmatpush.msra.mxu0 0.0
    %3273 = vmatpush.msra.mxu0 0.0
    %3274 = vmatpush.msra.mxu0 0.0
    %3275 = vmatpush.msra.mxu0 0.0
    %v3276 = vand.u32 %v3156, 4294901760
    %v3277 = vsub.f32 %v3156, %v3276
    %3278 = vmatpush.msra.mxu0 %v3277
    %v3279 = vand.u32 %v3154, 4294901760
    %v3280 = vsub.f32 %v3154, %v3279
    %3281 = vmatpush.msra.mxu0 %v3280
    %v3282 = vand.u32 %v3152, 4294901760
    %v3283 = vsub.f32 %v3152, %v3282
    %3284 = vmatpush.msra.mxu0 %v3283
    %v3285 = vand.u32 %v3150, 4294901760
    %v3286 = vsub.f32 %v3150, %v3285
    %3287 = vmatpush.msra.mxu0 %v3286
    %v3288 = vand.u32 %v702, 4294901760
    %v3289 = vsub.f32 %v702, %v3288
    %3290 = vmatmul.f32.gmra.mxu0 %v3289
    %v3291 = vpop.f32.mrf.mxu0
    %v3292 = vadd.f32 %v3250, %v3291
    %v3293 = vand.u32 %v704, 4294901760
    %v3294 = vsub.f32 %v704, %v3293
    %3295 = vmatmul.f32.gmra.mxu0 %v3294
    %v3296 = vpop.f32.mrf.mxu0
    %v3297 = vadd.f32 %v3254, %v3296
    %v3298 = vand.u32 %v706, 4294901760
    %v3299 = vsub.f32 %v706, %v3298
    %3300 = vmatmul.f32.gmra.mxu0 %v3299
    %v3301 = vpop.f32.mrf.mxu0
    %v3302 = vadd.f32 %v3258, %v3301
    %v3303 = vand.u32 %v708, 4294901760
    %v3304 = vsub.f32 %v708, %v3303
    %3305 = vmatmul.f32.gmra.mxu0 %v3304
    %v3306 = vpop.f32.mrf.mxu0
    %v3307 = vadd.f32 %v3262, %v3306
    %3308 = vdwg.mxu0
    %3309 = vmatpush.msra.mxu0 0.0
    %3310 = vmatpush.msra.mxu0 0.0
    %3311 = vmatpush.msra.mxu0 0.0
    %3312 = vmatpush.msra.mxu0 0.0
    %3313 = vmatpush.msra.mxu0 0.0
    %3314 = vmatpush.msra.mxu0 0.0
    %3315 = vmatpush.msra.mxu0 0.0
    %3316 = vmatpush.msra.mxu0 0.0
    %3317 = vmatpush.msra.mxu0 0.0
    %3318 = vmatpush.msra.mxu0 0.0
    %3319 = vmatpush.msra.mxu0 0.0
    %3320 = vmatpush.msra.mxu0 0.0
    %v3321 = vand.u32 %v3156, 4294901760
    %3322 = vmatpush.msra.mxu0 %v3321
    %v3323 = vand.u32 %v3154, 4294901760
    %3324 = vmatpush.msra.mxu0 %v3323
    %v3325 = vand.u32 %v3152, 4294901760
    %3326 = vmatpush.msra.mxu0 %v3325
    %v3327 = vand.u32 %v3150, 4294901760
    %3328 = vmatpush.msra.mxu0 %v3327
    %v3329 = vand.u32 %v702, 4294901760
    %v3330 = vsub.f32 %v702, %v3329
    %v3331 = vand.u32 %v3330, 4294901760
    %3332 = vmatmul.f32.gmra.mxu0 %v3331
    %v3333 = vpop.f32.mrf.mxu0
    %v3334 = vadd.f32 %v3292, %v3333
    %v3335 = vand.u32 %v704, 4294901760
    %v3336 = vsub.f32 %v704, %v3335
    %v3337 = vand.u32 %v3336, 4294901760
    %3338 = vmatmul.f32.gmra.mxu0 %v3337
    %v3339 = vpop.f32.mrf.mxu0
    %v3340 = vadd.f32 %v3297, %v3339
    %v3341 = vand.u32 %v706, 4294901760
    %v3342 = vsub.f32 %v706, %v3341
    %v3343 = vand.u32 %v3342, 4294901760
    %3344 = vmatmul.f32.gmra.mxu0 %v3343
    %v3345 = vpop.f32.mrf.mxu0
    %v3346 = vadd.f32 %v3302, %v3345
    %v3347 = vand.u32 %v708, 4294901760
    %v3348 = vsub.f32 %v708, %v3347
    %v3349 = vand.u32 %v3348, 4294901760
    %3350 = vmatmul.f32.gmra.mxu0 %v3349
    %v3351 = vpop.f32.mrf.mxu0
    %v3352 = vadd.f32 %v3307, %v3351
    %3353 = vdwg.mxu0
    %3354 = vmatpush.msra.mxu0 0.0
    %3355 = vmatpush.msra.mxu0 0.0
    %3356 = vmatpush.msra.mxu0 0.0
    %3357 = vmatpush.msra.mxu0 0.0
    %3358 = vmatpush.msra.mxu0 0.0
    %3359 = vmatpush.msra.mxu0 0.0
    %3360 = vmatpush.msra.mxu0 0.0
    %3361 = vmatpush.msra.mxu0 0.0
    %3362 = vmatpush.msra.mxu0 0.0
    %3363 = vmatpush.msra.mxu0 0.0
    %3364 = vmatpush.msra.mxu0 0.0
    %3365 = vmatpush.msra.mxu0 0.0
    %v3366 = vand.u32 %v3156, 4294901760
    %v3367 = vsub.f32 %v3156, %v3366
    %v3368 = vand.u32 %v3367, 4294901760
    %3369 = vmatpush.msra.mxu0 %v3368
    %v3370 = vand.u32 %v3154, 4294901760
    %v3371 = vsub.f32 %v3154, %v3370
    %v3372 = vand.u32 %v3371, 4294901760
    %3373 = vmatpush.msra.mxu0 %v3372
    %v3374 = vand.u32 %v3152, 4294901760
    %v3375 = vsub.f32 %v3152, %v3374
    %v3376 = vand.u32 %v3375, 4294901760
    %3377 = vmatpush.msra.mxu0 %v3376
    %v3378 = vand.u32 %v3150, 4294901760
    %v3379 = vsub.f32 %v3150, %v3378
    %v3380 = vand.u32 %v3379, 4294901760
    %3381 = vmatpush.msra.mxu0 %v3380
    %v3382 = vand.u32 %v702, 4294901760
    %3383 = vmatmul.f32.gmra.mxu0 %v3382
    %v3384 = vpop.f32.mrf.mxu0
    %v3385 = vadd.f32 %v3334, %v3384
    %v3386 = vand.u32 %v704, 4294901760
    %3387 = vmatmul.f32.gmra.mxu0 %v3386
    %v3388 = vpop.f32.mrf.mxu0
    %v3389 = vadd.f32 %v3340, %v3388
    %v3390 = vand.u32 %v706, 4294901760
    %3391 = vmatmul.f32.gmra.mxu0 %v3390
    %v3392 = vpop.f32.mrf.mxu0
    %v3393 = vadd.f32 %v3346, %v3392
    %v3394 = vand.u32 %v708, 4294901760
    %3395 = vmatmul.f32.gmra.mxu0 %v3394
    %v3396 = vpop.f32.mrf.mxu0
    %v3397 = vadd.f32 %v3352, %v3396
    %3398 = vdwg.mxu0
    %3399 = vmatpush.msra.mxu0 0.0
    %3400 = vmatpush.msra.mxu0 0.0
    %3401 = vmatpush.msra.mxu0 0.0
    %3402 = vmatpush.msra.mxu0 0.0
    %3403 = vmatpush.msra.mxu0 0.0
    %3404 = vmatpush.msra.mxu0 0.0
    %3405 = vmatpush.msra.mxu0 0.0
    %3406 = vmatpush.msra.mxu0 0.0
    %3407 = vmatpush.msra.mxu0 0.0
    %3408 = vmatpush.msra.mxu0 0.0
    %3409 = vmatpush.msra.mxu0 0.0
    %3410 = vmatpush.msra.mxu0 0.0
    %v3411 = vand.u32 %v3156, 4294901760
    %3412 = vmatpush.msra.mxu0 %v3411
    %v3413 = vand.u32 %v3154, 4294901760
    %3414 = vmatpush.msra.mxu0 %v3413
    %v3415 = vand.u32 %v3152, 4294901760
    %3416 = vmatpush.msra.mxu0 %v3415
    %v3417 = vand.u32 %v3150, 4294901760
    %3418 = vmatpush.msra.mxu0 %v3417
    %v3419 = vand.u32 %v702, 4294901760
    %3420 = vmatmul.f32.gmra.mxu0 %v3419
    %v3421 = vpop.f32.mrf.mxu0
    %v3422 = vadd.f32 %v3385, %v3421
    %v3423 = vand.u32 %v704, 4294901760
    %3424 = vmatmul.f32.gmra.mxu0 %v3423
    %v3425 = vpop.f32.mrf.mxu0
    %v3426 = vadd.f32 %v3389, %v3425
    %v3427 = vand.u32 %v706, 4294901760
    %3428 = vmatmul.f32.gmra.mxu0 %v3427
    %v3429 = vpop.f32.mrf.mxu0
    %v3430 = vadd.f32 %v3393, %v3429
    %v3431 = vand.u32 %v708, 4294901760
    %3432 = vmatmul.f32.gmra.mxu0 %v3431
    %v3433 = vpop.f32.mrf.mxu0
    %v3434 = vadd.f32 %v3397, %v3433
    %3435 = vdwg.mxu0
    %3436 = vmatpush.msra.mxu0 0.0
    %3437 = vmatpush.msra.mxu0 0.0
    %3438 = vmatpush.msra.mxu0 0.0
    %3439 = vmatpush.msra.mxu0 0.0
    %3440 = vmatpush.msra.mxu0 0.0
    %3441 = vmatpush.msra.mxu0 0.0
    %3442 = vmatpush.msra.mxu0 0.0
    %3443 = vmatpush.msra.mxu0 0.0
    %3444 = vmatpush.msra.mxu0 0.0
    %3445 = vmatpush.msra.mxu0 0.0
    %3446 = vmatpush.msra.mxu0 0.0
    %3447 = vmatpush.msra.mxu0 0.0
    %v3448 = vand.u32 %v3157, 4294901760
    %3449 = vmatpush.msra.mxu0 %v3448
    %v3450 = vand.u32 %v3155, 4294901760
    %3451 = vmatpush.msra.mxu0 %v3450
    %v3452 = vand.u32 %v3153, 4294901760
    %3453 = vmatpush.msra.mxu0 %v3452
    %v3454 = vand.u32 %v3151, 4294901760
    %3455 = vmatpush.msra.mxu0 %v3454
    %v3456 = vand.u32 %v702, 4294901760
    %v3457 = vsub.f32 %v702, %v3456
    %v3458 = vand.u32 %v3457, 4294901760
    %v3459 = vsub.f32 %v3457, %v3458
    %v3460 = vand.u32 %v3459, 4294901760
    %3461 = vmatmul.f32.gmra.mxu0 %v3460
    %v3462 = vpop.f32.mrf.mxu0
    %v3463 = vadd.f32 %v688, %v3462
    %v3464 = vand.u32 %v704, 4294901760
    %v3465 = vsub.f32 %v704, %v3464
    %v3466 = vand.u32 %v3465, 4294901760
    %v3467 = vsub.f32 %v3465, %v3466
    %v3468 = vand.u32 %v3467, 4294901760
    %3469 = vmatmul.f32.gmra.mxu0 %v3468
    %v3470 = vpop.f32.mrf.mxu0
    %v3471 = vadd.f32 %v692, %v3470
    %v3472 = vand.u32 %v706, 4294901760
    %v3473 = vsub.f32 %v706, %v3472
    %v3474 = vand.u32 %v3473, 4294901760
    %v3475 = vsub.f32 %v3473, %v3474
    %v3476 = vand.u32 %v3475, 4294901760
    %3477 = vmatmul.f32.gmra.mxu0 %v3476
    %v3478 = vpop.f32.mrf.mxu0
    %v3479 = vadd.f32 %v696, %v3478
    %v3480 = vand.u32 %v708, 4294901760
    %v3481 = vsub.f32 %v708, %v3480
    %v3482 = vand.u32 %v3481, 4294901760
    %v3483 = vsub.f32 %v3481, %v3482
    %v3484 = vand.u32 %v3483, 4294901760
    %3485 = vmatmul.f32.gmra.mxu0 %v3484
    %v3486 = vpop.f32.mrf.mxu0
    %v3487 = vadd.f32 %v700, %v3486
    %3488 = vdwg.mxu0
    %3489 = vmatpush.msra.mxu0 0.0
    %3490 = vmatpush.msra.mxu0 0.0
    %3491 = vmatpush.msra.mxu0 0.0
    %3492 = vmatpush.msra.mxu0 0.0
    %3493 = vmatpush.msra.mxu0 0.0
    %3494 = vmatpush.msra.mxu0 0.0
    %3495 = vmatpush.msra.mxu0 0.0
    %3496 = vmatpush.msra.mxu0 0.0
    %3497 = vmatpush.msra.mxu0 0.0
    %3498 = vmatpush.msra.mxu0 0.0
    %3499 = vmatpush.msra.mxu0 0.0
    %3500 = vmatpush.msra.mxu0 0.0
    %v3501 = vand.u32 %v3157, 4294901760
    %v3502 = vsub.f32 %v3157, %v3501
    %v3503 = vand.u32 %v3502, 4294901760
    %v3504 = vsub.f32 %v3502, %v3503
    %v3505 = vand.u32 %v3504, 4294901760
    %3506 = vmatpush.msra.mxu0 %v3505
    %v3507 = vand.u32 %v3155, 4294901760
    %v3508 = vsub.f32 %v3155, %v3507
    %v3509 = vand.u32 %v3508, 4294901760
    %v3510 = vsub.f32 %v3508, %v3509
    %v3511 = vand.u32 %v3510, 4294901760
    %3512 = vmatpush.msra.mxu0 %v3511
    %v3513 = vand.u32 %v3153, 4294901760
    %v3514 = vsub.f32 %v3153, %v3513
    %v3515 = vand.u32 %v3514, 4294901760
    %v3516 = vsub.f32 %v3514, %v3515
    %v3517 = vand.u32 %v3516, 4294901760
    %3518 = vmatpush.msra.mxu0 %v3517
    %v3519 = vand.u32 %v3151, 4294901760
    %v3520 = vsub.f32 %v3151, %v3519
    %v3521 = vand.u32 %v3520, 4294901760
    %v3522 = vsub.f32 %v3520, %v3521
    %v3523 = vand.u32 %v3522, 4294901760
    %3524 = vmatpush.msra.mxu0 %v3523
    %v3525 = vand.u32 %v702, 4294901760
    %3526 = vmatmul.f32.gmra.mxu0 %v3525
    %v3527 = vpop.f32.mrf.mxu0
    %v3528 = vadd.f32 %v3463, %v3527
    %v3529 = vand.u32 %v704, 4294901760
    %3530 = vmatmul.f32.gmra.mxu0 %v3529
    %v3531 = vpop.f32.mrf.mxu0
    %v3532 = vadd.f32 %v3471, %v3531
    %v3533 = vand.u32 %v706, 4294901760
    %3534 = vmatmul.f32.gmra.mxu0 %v3533
    %v3535 = vpop.f32.mrf.mxu0
    %v3536 = vadd.f32 %v3479, %v3535
    %v3537 = vand.u32 %v708, 4294901760
    %3538 = vmatmul.f32.gmra.mxu0 %v3537
    %v3539 = vpop.f32.mrf.mxu0
    %v3540 = vadd.f32 %v3487, %v3539
    %3541 = vdwg.mxu0
    %3542 = vmatpush.msra.mxu0 0.0
    %3543 = vmatpush.msra.mxu0 0.0
    %3544 = vmatpush.msra.mxu0 0.0
    %3545 = vmatpush.msra.mxu0 0.0
    %3546 = vmatpush.msra.mxu0 0.0
    %3547 = vmatpush.msra.mxu0 0.0
    %3548 = vmatpush.msra.mxu0 0.0
    %3549 = vmatpush.msra.mxu0 0.0
    %3550 = vmatpush.msra.mxu0 0.0
    %3551 = vmatpush.msra.mxu0 0.0
    %3552 = vmatpush.msra.mxu0 0.0
    %3553 = vmatpush.msra.mxu0 0.0
    %v3554 = vand.u32 %v3157, 4294901760
    %v3555 = vsub.f32 %v3157, %v3554
    %3556 = vmatpush.msra.mxu0 %v3555
    %v3557 = vand.u32 %v3155, 4294901760
    %v3558 = vsub.f32 %v3155, %v3557
    %3559 = vmatpush.msra.mxu0 %v3558
    %v3560 = vand.u32 %v3153, 4294901760
    %v3561 = vsub.f32 %v3153, %v3560
    %3562 = vmatpush.msra.mxu0 %v3561
    %v3563 = vand.u32 %v3151, 4294901760
    %v3564 = vsub.f32 %v3151, %v3563
    %3565 = vmatpush.msra.mxu0 %v3564
    %v3566 = vand.u32 %v702, 4294901760
    %v3567 = vsub.f32 %v702, %v3566
    %3568 = vmatmul.f32.gmra.mxu0 %v3567
    %v3569 = vpop.f32.mrf.mxu0
    %v3570 = vadd.f32 %v3528, %v3569
    %v3571 = vand.u32 %v704, 4294901760
    %v3572 = vsub.f32 %v704, %v3571
    %3573 = vmatmul.f32.gmra.mxu0 %v3572
    %v3574 = vpop.f32.mrf.mxu0
    %v3575 = vadd.f32 %v3532, %v3574
    %v3576 = vand.u32 %v706, 4294901760
    %v3577 = vsub.f32 %v706, %v3576
    %3578 = vmatmul.f32.gmra.mxu0 %v3577
    %v3579 = vpop.f32.mrf.mxu0
    %v3580 = vadd.f32 %v3536, %v3579
    %v3581 = vand.u32 %v708, 4294901760
    %v3582 = vsub.f32 %v708, %v3581
    %3583 = vmatmul.f32.gmra.mxu0 %v3582
    %v3584 = vpop.f32.mrf.mxu0
    %v3585 = vadd.f32 %v3540, %v3584
    %3586 = vdwg.mxu0
    %3587 = vmatpush.msra.mxu0 0.0
    %3588 = vmatpush.msra.mxu0 0.0
    %3589 = vmatpush.msra.mxu0 0.0
    %3590 = vmatpush.msra.mxu0 0.0
    %3591 = vmatpush.msra.mxu0 0.0
    %3592 = vmatpush.msra.mxu0 0.0
    %3593 = vmatpush.msra.mxu0 0.0
    %3594 = vmatpush.msra.mxu0 0.0
    %3595 = vmatpush.msra.mxu0 0.0
    %3596 = vmatpush.msra.mxu0 0.0
    %3597 = vmatpush.msra.mxu0 0.0
    %3598 = vmatpush.msra.mxu0 0.0
    %v3599 = vand.u32 %v3157, 4294901760
    %3600 = vmatpush.msra.mxu0 %v3599
    %v3601 = vand.u32 %v3155, 4294901760
    %3602 = vmatpush.msra.mxu0 %v3601
    %v3603 = vand.u32 %v3153, 4294901760
    %3604 = vmatpush.msra.mxu0 %v3603
    %v3605 = vand.u32 %v3151, 4294901760
    %3606 = vmatpush.msra.mxu0 %v3605
    %v3607 = vand.u32 %v702, 4294901760
    %v3608 = vsub.f32 %v702, %v3607
    %v3609 = vand.u32 %v3608, 4294901760
    %3610 = vmatmul.f32.gmra.mxu0 %v3609
    %v3611 = vpop.f32.mrf.mxu0
    %v3612 = vadd.f32 %v3570, %v3611
    %v3613 = vand.u32 %v704, 4294901760
    %v3614 = vsub.f32 %v704, %v3613
    %v3615 = vand.u32 %v3614, 4294901760
    %3616 = vmatmul.f32.gmra.mxu0 %v3615
    %v3617 = vpop.f32.mrf.mxu0
    %v3618 = vadd.f32 %v3575, %v3617
    %v3619 = vand.u32 %v706, 4294901760
    %v3620 = vsub.f32 %v706, %v3619
    %v3621 = vand.u32 %v3620, 4294901760
    %3622 = vmatmul.f32.gmra.mxu0 %v3621
    %v3623 = vpop.f32.mrf.mxu0
    %v3624 = vadd.f32 %v3580, %v3623
    %v3625 = vand.u32 %v708, 4294901760
    %v3626 = vsub.f32 %v708, %v3625
    %v3627 = vand.u32 %v3626, 4294901760
    %3628 = vmatmul.f32.gmra.mxu0 %v3627
    %v3629 = vpop.f32.mrf.mxu0
    %v3630 = vadd.f32 %v3585, %v3629
    %3631 = vdwg.mxu0
    %3632 = vmatpush.msra.mxu0 0.0
    %3633 = vmatpush.msra.mxu0 0.0
    %3634 = vmatpush.msra.mxu0 0.0
    %3635 = vmatpush.msra.mxu0 0.0
    %3636 = vmatpush.msra.mxu0 0.0
    %3637 = vmatpush.msra.mxu0 0.0
    %3638 = vmatpush.msra.mxu0 0.0
    %3639 = vmatpush.msra.mxu0 0.0
    %3640 = vmatpush.msra.mxu0 0.0
    %3641 = vmatpush.msra.mxu0 0.0
    %3642 = vmatpush.msra.mxu0 0.0
    %3643 = vmatpush.msra.mxu0 0.0
    %v3644 = vand.u32 %v3157, 4294901760
    %v3645 = vsub.f32 %v3157, %v3644
    %v3646 = vand.u32 %v3645, 4294901760
    %3647 = vmatpush.msra.mxu0 %v3646
    %v3648 = vand.u32 %v3155, 4294901760
    %v3649 = vsub.f32 %v3155, %v3648
    %v3650 = vand.u32 %v3649, 4294901760
    %3651 = vmatpush.msra.mxu0 %v3650
    %v3652 = vand.u32 %v3153, 4294901760
    %v3653 = vsub.f32 %v3153, %v3652
    %v3654 = vand.u32 %v3653, 4294901760
    %3655 = vmatpush.msra.mxu0 %v3654
    %v3656 = vand.u32 %v3151, 4294901760
    %v3657 = vsub.f32 %v3151, %v3656
    %v3658 = vand.u32 %v3657, 4294901760
    %3659 = vmatpush.msra.mxu0 %v3658
    %v3660 = vand.u32 %v702, 4294901760
    %3661 = vmatmul.f32.gmra.mxu0 %v3660
    %v3662 = vpop.f32.mrf.mxu0
    %v3663 = vadd.f32 %v3612, %v3662
    %v3664 = vand.u32 %v704, 4294901760
    %3665 = vmatmul.f32.gmra.mxu0 %v3664
    %v3666 = vpop.f32.mrf.mxu0
    %v3667 = vadd.f32 %v3618, %v3666
    %v3668 = vand.u32 %v706, 4294901760
    %3669 = vmatmul.f32.gmra.mxu0 %v3668
    %v3670 = vpop.f32.mrf.mxu0
    %v3671 = vadd.f32 %v3624, %v3670
    %v3672 = vand.u32 %v708, 4294901760
    %3673 = vmatmul.f32.gmra.mxu0 %v3672
    %v3674 = vpop.f32.mrf.mxu0
    %v3675 = vadd.f32 %v3630, %v3674
    %3676 = vdwg.mxu0
    %3677 = vmatpush.msra.mxu0 0.0
    %3678 = vmatpush.msra.mxu0 0.0
    %3679 = vmatpush.msra.mxu0 0.0
    %3680 = vmatpush.msra.mxu0 0.0
    %3681 = vmatpush.msra.mxu0 0.0
    %3682 = vmatpush.msra.mxu0 0.0
    %3683 = vmatpush.msra.mxu0 0.0
    %3684 = vmatpush.msra.mxu0 0.0
    %3685 = vmatpush.msra.mxu0 0.0
    %3686 = vmatpush.msra.mxu0 0.0
    %3687 = vmatpush.msra.mxu0 0.0
    %3688 = vmatpush.msra.mxu0 0.0
    %v3689 = vand.u32 %v3157, 4294901760
    %3690 = vmatpush.msra.mxu0 %v3689
    %v3691 = vand.u32 %v3155, 4294901760
    %3692 = vmatpush.msra.mxu0 %v3691
    %v3693 = vand.u32 %v3153, 4294901760
    %3694 = vmatpush.msra.mxu0 %v3693
    %v3695 = vand.u32 %v3151, 4294901760
    %3696 = vmatpush.msra.mxu0 %v3695
    %v3697 = vand.u32 %v702, 4294901760
    %3698 = vmatmul.f32.gmra.mxu0 %v3697
    %v3699 = vpop.f32.mrf.mxu0
    %v3700 = vadd.f32 %v3663, %v3699
    %v3701 = vand.u32 %v704, 4294901760
    %3702 = vmatmul.f32.gmra.mxu0 %v3701
    %v3703 = vpop.f32.mrf.mxu0
    %v3704 = vadd.f32 %v3667, %v3703
    %v3705 = vand.u32 %v706, 4294901760
    %3706 = vmatmul.f32.gmra.mxu0 %v3705
    %v3707 = vpop.f32.mrf.mxu0
    %v3708 = vadd.f32 %v3671, %v3707
    %v3709 = vand.u32 %v708, 4294901760
    %3710 = vmatmul.f32.gmra.mxu0 %v3709
    %v3711 = vpop.f32.mrf.mxu0
    %v3712 = vadd.f32 %v3675, %v3711
    %3713 = vdwg.mxu0
    %v3714 = vmax.f32 %v3422, 0.0
    %v3715 = vmax.f32 %v3700, 0.0
    %v3716 = vmax.f32 %v3426, 0.0
    %v3717 = vmax.f32 %v3704, 0.0
    %v3718 = vmax.f32 %v3430, 0.0
    %v3719 = vmax.f32 %v3708, 0.0
    %v3720 = vmax.f32 %v3434, 0.0
    %v3721 = vmax.f32 %v3712, 0.0
    %v3722 = vperm.slane %v596, 4
    %v3723 = vperm.slane %v597, 4
    %v3724 = vmul.f32 %v3714, %v3722
    %v3725 = vmul.f32 %v3715, %v3723
    %v3726 = vmul.f32 %v3716, %v3722
    %v3727 = vmul.f32 %v3717, %v3723
    %v3728 = vmul.f32 %v3718, %v3722
    %v3729 = vmul.f32 %v3719, %v3723
    %v3730 = vmul.f32 %v3720, %v3722
    %v3731 = vmul.f32 %v3721, %v3723
    %v3732 = vadd.f32 %v3118, %v3724
    %v3733 = vadd.f32 %v3119, %v3725
    %v3734 = vadd.f32 %v3120, %v3726
    %v3735 = vadd.f32 %v3121, %v3727
    %v3736 = vadd.f32 %v3122, %v3728
    %v3737 = vadd.f32 %v3123, %v3729
    %v3738 = vadd.f32 %v3124, %v3730
    %v3739 = vadd.f32 %v3125, %v3731
    %3740 = vset.pattern.permute.xlu0 39
    %3741 = vperm.xlu0 %3740, %v43
    %v3742 = vpop.permute.xlu0 %3741
    %3744 = vset.pattern.permute.xlu0 39
    %3745 = vperm.xlu0 %3744, %v44
    %v3746 = vpop.permute.xlu0 %3745
    %3748 = vset.pattern.permute.xlu0 39
    %3749 = vperm.xlu0 %3748, %v45
    %v3750 = vpop.permute.xlu0 %3749
    %3752 = vset.pattern.permute.xlu0 39
    %3753 = vperm.xlu0 %3752, %v46
    %v3754 = vpop.permute.xlu0 %3753
    %v3756 = vadd.f32 %v646, %v3742
    %v3757 = vadd.f32 %v647, %v3742
    %v3758 = vadd.f32 %v648, %v3746
    %v3759 = vadd.f32 %v649, %v3746
    %v3760 = vadd.f32 %v650, %v3750
    %v3761 = vadd.f32 %v651, %v3750
    %v3762 = vadd.f32 %v652, %v3754
    %v3763 = vadd.f32 %v653, %v3754
    %v3764 = vmax.f32 %v3756, 0.0
    %v3765 = vmax.f32 %v3757, 0.0
    %v3766 = vmax.f32 %v3758, 0.0
    %v3767 = vmax.f32 %v3759, 0.0
    %v3768 = vmax.f32 %v3760, 0.0
    %v3769 = vmax.f32 %v3761, 0.0
    %v3770 = vmax.f32 %v3762, 0.0
    %v3771 = vmax.f32 %v3763, 0.0
    %3772 = vmatpush.msra.mxu0 0.0
    %3773 = vmatpush.msra.mxu0 0.0
    %3774 = vmatpush.msra.mxu0 0.0
    %3775 = vmatpush.msra.mxu0 0.0
    %3776 = vmatpush.msra.mxu0 0.0
    %3777 = vmatpush.msra.mxu0 0.0
    %3778 = vmatpush.msra.mxu0 0.0
    %3779 = vmatpush.msra.mxu0 0.0
    %3780 = vmatpush.msra.mxu0 0.0
    %3781 = vmatpush.msra.mxu0 0.0
    %3782 = vmatpush.msra.mxu0 0.0
    %3783 = vmatpush.msra.mxu0 0.0
    %v3784 = vand.u32 %v3770, 4294901760
    %3785 = vmatpush.msra.mxu0 %v3784
    %v3786 = vand.u32 %v3768, 4294901760
    %3787 = vmatpush.msra.mxu0 %v3786
    %v3788 = vand.u32 %v3766, 4294901760
    %3789 = vmatpush.msra.mxu0 %v3788
    %v3790 = vand.u32 %v3764, 4294901760
    %3791 = vmatpush.msra.mxu0 %v3790
    %v3792 = vand.u32 %v702, 4294901760
    %v3793 = vsub.f32 %v702, %v3792
    %v3794 = vand.u32 %v3793, 4294901760
    %v3795 = vsub.f32 %v3793, %v3794
    %v3796 = vand.u32 %v3795, 4294901760
    %3797 = vmatmul.f32.gmra.mxu0 %v3796
    %v3798 = vpop.f32.mrf.mxu0
    %v3799 = vadd.f32 %v688, %v3798
    %v3800 = vand.u32 %v704, 4294901760
    %v3801 = vsub.f32 %v704, %v3800
    %v3802 = vand.u32 %v3801, 4294901760
    %v3803 = vsub.f32 %v3801, %v3802
    %v3804 = vand.u32 %v3803, 4294901760
    %3805 = vmatmul.f32.gmra.mxu0 %v3804
    %v3806 = vpop.f32.mrf.mxu0
    %v3807 = vadd.f32 %v692, %v3806
    %v3808 = vand.u32 %v706, 4294901760
    %v3809 = vsub.f32 %v706, %v3808
    %v3810 = vand.u32 %v3809, 4294901760
    %v3811 = vsub.f32 %v3809, %v3810
    %v3812 = vand.u32 %v3811, 4294901760
    %3813 = vmatmul.f32.gmra.mxu0 %v3812
    %v3814 = vpop.f32.mrf.mxu0
    %v3815 = vadd.f32 %v696, %v3814
    %v3816 = vand.u32 %v708, 4294901760
    %v3817 = vsub.f32 %v708, %v3816
    %v3818 = vand.u32 %v3817, 4294901760
    %v3819 = vsub.f32 %v3817, %v3818
    %v3820 = vand.u32 %v3819, 4294901760
    %3821 = vmatmul.f32.gmra.mxu0 %v3820
    %v3822 = vpop.f32.mrf.mxu0
    %v3823 = vadd.f32 %v700, %v3822
    %3824 = vdwg.mxu0
    %3825 = vmatpush.msra.mxu0 0.0
    %3826 = vmatpush.msra.mxu0 0.0
    %3827 = vmatpush.msra.mxu0 0.0
    %3828 = vmatpush.msra.mxu0 0.0
    %3829 = vmatpush.msra.mxu0 0.0
    %3830 = vmatpush.msra.mxu0 0.0
    %3831 = vmatpush.msra.mxu0 0.0
    %3832 = vmatpush.msra.mxu0 0.0
    %3833 = vmatpush.msra.mxu0 0.0
    %3834 = vmatpush.msra.mxu0 0.0
    %3835 = vmatpush.msra.mxu0 0.0
    %3836 = vmatpush.msra.mxu0 0.0
    %v3837 = vand.u32 %v3770, 4294901760
    %v3838 = vsub.f32 %v3770, %v3837
    %v3839 = vand.u32 %v3838, 4294901760
    %v3840 = vsub.f32 %v3838, %v3839
    %v3841 = vand.u32 %v3840, 4294901760
    %3842 = vmatpush.msra.mxu0 %v3841
    %v3843 = vand.u32 %v3768, 4294901760
    %v3844 = vsub.f32 %v3768, %v3843
    %v3845 = vand.u32 %v3844, 4294901760
    %v3846 = vsub.f32 %v3844, %v3845
    %v3847 = vand.u32 %v3846, 4294901760
    %3848 = vmatpush.msra.mxu0 %v3847
    %v3849 = vand.u32 %v3766, 4294901760
    %v3850 = vsub.f32 %v3766, %v3849
    %v3851 = vand.u32 %v3850, 4294901760
    %v3852 = vsub.f32 %v3850, %v3851
    %v3853 = vand.u32 %v3852, 4294901760
    %3854 = vmatpush.msra.mxu0 %v3853
    %v3855 = vand.u32 %v3764, 4294901760
    %v3856 = vsub.f32 %v3764, %v3855
    %v3857 = vand.u32 %v3856, 4294901760
    %v3858 = vsub.f32 %v3856, %v3857
    %v3859 = vand.u32 %v3858, 4294901760
    %3860 = vmatpush.msra.mxu0 %v3859
    %v3861 = vand.u32 %v702, 4294901760
    %3862 = vmatmul.f32.gmra.mxu0 %v3861
    %v3863 = vpop.f32.mrf.mxu0
    %v3864 = vadd.f32 %v3799, %v3863
    %v3865 = vand.u32 %v704, 4294901760
    %3866 = vmatmul.f32.gmra.mxu0 %v3865
    %v3867 = vpop.f32.mrf.mxu0
    %v3868 = vadd.f32 %v3807, %v3867
    %v3869 = vand.u32 %v706, 4294901760
    %3870 = vmatmul.f32.gmra.mxu0 %v3869
    %v3871 = vpop.f32.mrf.mxu0
    %v3872 = vadd.f32 %v3815, %v3871
    %v3873 = vand.u32 %v708, 4294901760
    %3874 = vmatmul.f32.gmra.mxu0 %v3873
    %v3875 = vpop.f32.mrf.mxu0
    %v3876 = vadd.f32 %v3823, %v3875
    %3877 = vdwg.mxu0
    %3878 = vmatpush.msra.mxu0 0.0
    %3879 = vmatpush.msra.mxu0 0.0
    %3880 = vmatpush.msra.mxu0 0.0
    %3881 = vmatpush.msra.mxu0 0.0
    %3882 = vmatpush.msra.mxu0 0.0
    %3883 = vmatpush.msra.mxu0 0.0
    %3884 = vmatpush.msra.mxu0 0.0
    %3885 = vmatpush.msra.mxu0 0.0
    %3886 = vmatpush.msra.mxu0 0.0
    %3887 = vmatpush.msra.mxu0 0.0
    %3888 = vmatpush.msra.mxu0 0.0
    %3889 = vmatpush.msra.mxu0 0.0
    %v3890 = vand.u32 %v3770, 4294901760
    %v3891 = vsub.f32 %v3770, %v3890
    %3892 = vmatpush.msra.mxu0 %v3891
    %v3893 = vand.u32 %v3768, 4294901760
    %v3894 = vsub.f32 %v3768, %v3893
    %3895 = vmatpush.msra.mxu0 %v3894
    %v3896 = vand.u32 %v3766, 4294901760
    %v3897 = vsub.f32 %v3766, %v3896
    %3898 = vmatpush.msra.mxu0 %v3897
    %v3899 = vand.u32 %v3764, 4294901760
    %v3900 = vsub.f32 %v3764, %v3899
    %3901 = vmatpush.msra.mxu0 %v3900
    %v3902 = vand.u32 %v702, 4294901760
    %v3903 = vsub.f32 %v702, %v3902
    %3904 = vmatmul.f32.gmra.mxu0 %v3903
    %v3905 = vpop.f32.mrf.mxu0
    %v3906 = vadd.f32 %v3864, %v3905
    %v3907 = vand.u32 %v704, 4294901760
    %v3908 = vsub.f32 %v704, %v3907
    %3909 = vmatmul.f32.gmra.mxu0 %v3908
    %v3910 = vpop.f32.mrf.mxu0
    %v3911 = vadd.f32 %v3868, %v3910
    %v3912 = vand.u32 %v706, 4294901760
    %v3913 = vsub.f32 %v706, %v3912
    %3914 = vmatmul.f32.gmra.mxu0 %v3913
    %v3915 = vpop.f32.mrf.mxu0
    %v3916 = vadd.f32 %v3872, %v3915
    %v3917 = vand.u32 %v708, 4294901760
    %v3918 = vsub.f32 %v708, %v3917
    %3919 = vmatmul.f32.gmra.mxu0 %v3918
    %v3920 = vpop.f32.mrf.mxu0
    %v3921 = vadd.f32 %v3876, %v3920
    %3922 = vdwg.mxu0
    %3923 = vmatpush.msra.mxu0 0.0
    %3924 = vmatpush.msra.mxu0 0.0
    %3925 = vmatpush.msra.mxu0 0.0
    %3926 = vmatpush.msra.mxu0 0.0
    %3927 = vmatpush.msra.mxu0 0.0
    %3928 = vmatpush.msra.mxu0 0.0
    %3929 = vmatpush.msra.mxu0 0.0
    %3930 = vmatpush.msra.mxu0 0.0
    %3931 = vmatpush.msra.mxu0 0.0
    %3932 = vmatpush.msra.mxu0 0.0
    %3933 = vmatpush.msra.mxu0 0.0
    %3934 = vmatpush.msra.mxu0 0.0
    %v3935 = vand.u32 %v3770, 4294901760
    %3936 = vmatpush.msra.mxu0 %v3935
    %v3937 = vand.u32 %v3768, 4294901760
    %3938 = vmatpush.msra.mxu0 %v3937
    %v3939 = vand.u32 %v3766, 4294901760
    %3940 = vmatpush.msra.mxu0 %v3939
    %v3941 = vand.u32 %v3764, 4294901760
    %3942 = vmatpush.msra.mxu0 %v3941
    %v3943 = vand.u32 %v702, 4294901760
    %v3944 = vsub.f32 %v702, %v3943
    %v3945 = vand.u32 %v3944, 4294901760
    %3946 = vmatmul.f32.gmra.mxu0 %v3945
    %v3947 = vpop.f32.mrf.mxu0
    %v3948 = vadd.f32 %v3906, %v3947
    %v3949 = vand.u32 %v704, 4294901760
    %v3950 = vsub.f32 %v704, %v3949
    %v3951 = vand.u32 %v3950, 4294901760
    %3952 = vmatmul.f32.gmra.mxu0 %v3951
    %v3953 = vpop.f32.mrf.mxu0
    %v3954 = vadd.f32 %v3911, %v3953
    %v3955 = vand.u32 %v706, 4294901760
    %v3956 = vsub.f32 %v706, %v3955
    %v3957 = vand.u32 %v3956, 4294901760
    %3958 = vmatmul.f32.gmra.mxu0 %v3957
    %v3959 = vpop.f32.mrf.mxu0
    %v3960 = vadd.f32 %v3916, %v3959
    %v3961 = vand.u32 %v708, 4294901760
    %v3962 = vsub.f32 %v708, %v3961
    %v3963 = vand.u32 %v3962, 4294901760
    %3964 = vmatmul.f32.gmra.mxu0 %v3963
    %v3965 = vpop.f32.mrf.mxu0
    %v3966 = vadd.f32 %v3921, %v3965
    %3967 = vdwg.mxu0
    %3968 = vmatpush.msra.mxu0 0.0
    %3969 = vmatpush.msra.mxu0 0.0
    %3970 = vmatpush.msra.mxu0 0.0
    %3971 = vmatpush.msra.mxu0 0.0
    %3972 = vmatpush.msra.mxu0 0.0
    %3973 = vmatpush.msra.mxu0 0.0
    %3974 = vmatpush.msra.mxu0 0.0
    %3975 = vmatpush.msra.mxu0 0.0
    %3976 = vmatpush.msra.mxu0 0.0
    %3977 = vmatpush.msra.mxu0 0.0
    %3978 = vmatpush.msra.mxu0 0.0
    %3979 = vmatpush.msra.mxu0 0.0
    %v3980 = vand.u32 %v3770, 4294901760
    %v3981 = vsub.f32 %v3770, %v3980
    %v3982 = vand.u32 %v3981, 4294901760
    %3983 = vmatpush.msra.mxu0 %v3982
    %v3984 = vand.u32 %v3768, 4294901760
    %v3985 = vsub.f32 %v3768, %v3984
    %v3986 = vand.u32 %v3985, 4294901760
    %3987 = vmatpush.msra.mxu0 %v3986
    %v3988 = vand.u32 %v3766, 4294901760
    %v3989 = vsub.f32 %v3766, %v3988
    %v3990 = vand.u32 %v3989, 4294901760
    %3991 = vmatpush.msra.mxu0 %v3990
    %v3992 = vand.u32 %v3764, 4294901760
    %v3993 = vsub.f32 %v3764, %v3992
    %v3994 = vand.u32 %v3993, 4294901760
    %3995 = vmatpush.msra.mxu0 %v3994
    %v3996 = vand.u32 %v702, 4294901760
    %3997 = vmatmul.f32.gmra.mxu0 %v3996
    %v3998 = vpop.f32.mrf.mxu0
    %v3999 = vadd.f32 %v3948, %v3998
    %v4000 = vand.u32 %v704, 4294901760
    %4001 = vmatmul.f32.gmra.mxu0 %v4000
    %v4002 = vpop.f32.mrf.mxu0
    %v4003 = vadd.f32 %v3954, %v4002
    %v4004 = vand.u32 %v706, 4294901760
    %4005 = vmatmul.f32.gmra.mxu0 %v4004
    %v4006 = vpop.f32.mrf.mxu0
    %v4007 = vadd.f32 %v3960, %v4006
    %v4008 = vand.u32 %v708, 4294901760
    %4009 = vmatmul.f32.gmra.mxu0 %v4008
    %v4010 = vpop.f32.mrf.mxu0
    %v4011 = vadd.f32 %v3966, %v4010
    %4012 = vdwg.mxu0
    %4013 = vmatpush.msra.mxu0 0.0
    %4014 = vmatpush.msra.mxu0 0.0
    %4015 = vmatpush.msra.mxu0 0.0
    %4016 = vmatpush.msra.mxu0 0.0
    %4017 = vmatpush.msra.mxu0 0.0
    %4018 = vmatpush.msra.mxu0 0.0
    %4019 = vmatpush.msra.mxu0 0.0
    %4020 = vmatpush.msra.mxu0 0.0
    %4021 = vmatpush.msra.mxu0 0.0
    %4022 = vmatpush.msra.mxu0 0.0
    %4023 = vmatpush.msra.mxu0 0.0
    %4024 = vmatpush.msra.mxu0 0.0
    %v4025 = vand.u32 %v3770, 4294901760
    %4026 = vmatpush.msra.mxu0 %v4025
    %v4027 = vand.u32 %v3768, 4294901760
    %4028 = vmatpush.msra.mxu0 %v4027
    %v4029 = vand.u32 %v3766, 4294901760
    %4030 = vmatpush.msra.mxu0 %v4029
    %v4031 = vand.u32 %v3764, 4294901760
    %4032 = vmatpush.msra.mxu0 %v4031
    %v4033 = vand.u32 %v702, 4294901760
    %4034 = vmatmul.f32.gmra.mxu0 %v4033
    %v4035 = vpop.f32.mrf.mxu0
    %v4036 = vadd.f32 %v3999, %v4035
    %v4037 = vand.u32 %v704, 4294901760
    %4038 = vmatmul.f32.gmra.mxu0 %v4037
    %v4039 = vpop.f32.mrf.mxu0
    %v4040 = vadd.f32 %v4003, %v4039
    %v4041 = vand.u32 %v706, 4294901760
    %4042 = vmatmul.f32.gmra.mxu0 %v4041
    %v4043 = vpop.f32.mrf.mxu0
    %v4044 = vadd.f32 %v4007, %v4043
    %v4045 = vand.u32 %v708, 4294901760
    %4046 = vmatmul.f32.gmra.mxu0 %v4045
    %v4047 = vpop.f32.mrf.mxu0
    %v4048 = vadd.f32 %v4011, %v4047
    %4049 = vdwg.mxu0
    %4050 = vmatpush.msra.mxu0 0.0
    %4051 = vmatpush.msra.mxu0 0.0
    %4052 = vmatpush.msra.mxu0 0.0
    %4053 = vmatpush.msra.mxu0 0.0
    %4054 = vmatpush.msra.mxu0 0.0
    %4055 = vmatpush.msra.mxu0 0.0
    %4056 = vmatpush.msra.mxu0 0.0
    %4057 = vmatpush.msra.mxu0 0.0
    %4058 = vmatpush.msra.mxu0 0.0
    %4059 = vmatpush.msra.mxu0 0.0
    %4060 = vmatpush.msra.mxu0 0.0
    %4061 = vmatpush.msra.mxu0 0.0
    %v4062 = vand.u32 %v3771, 4294901760
    %4063 = vmatpush.msra.mxu0 %v4062
    %v4064 = vand.u32 %v3769, 4294901760
    %4065 = vmatpush.msra.mxu0 %v4064
    %v4066 = vand.u32 %v3767, 4294901760
    %4067 = vmatpush.msra.mxu0 %v4066
    %v4068 = vand.u32 %v3765, 4294901760
    %4069 = vmatpush.msra.mxu0 %v4068
    %v4070 = vand.u32 %v702, 4294901760
    %v4071 = vsub.f32 %v702, %v4070
    %v4072 = vand.u32 %v4071, 4294901760
    %v4073 = vsub.f32 %v4071, %v4072
    %v4074 = vand.u32 %v4073, 4294901760
    %4075 = vmatmul.f32.gmra.mxu0 %v4074
    %v4076 = vpop.f32.mrf.mxu0
    %v4077 = vadd.f32 %v688, %v4076
    %v4078 = vand.u32 %v704, 4294901760
    %v4079 = vsub.f32 %v704, %v4078
    %v4080 = vand.u32 %v4079, 4294901760
    %v4081 = vsub.f32 %v4079, %v4080
    %v4082 = vand.u32 %v4081, 4294901760
    %4083 = vmatmul.f32.gmra.mxu0 %v4082
    %v4084 = vpop.f32.mrf.mxu0
    %v4085 = vadd.f32 %v692, %v4084
    %v4086 = vand.u32 %v706, 4294901760
    %v4087 = vsub.f32 %v706, %v4086
    %v4088 = vand.u32 %v4087, 4294901760
    %v4089 = vsub.f32 %v4087, %v4088
    %v4090 = vand.u32 %v4089, 4294901760
    %4091 = vmatmul.f32.gmra.mxu0 %v4090
    %v4092 = vpop.f32.mrf.mxu0
    %v4093 = vadd.f32 %v696, %v4092
    %v4094 = vand.u32 %v708, 4294901760
    %v4095 = vsub.f32 %v708, %v4094
    %v4096 = vand.u32 %v4095, 4294901760
    %v4097 = vsub.f32 %v4095, %v4096
    %v4098 = vand.u32 %v4097, 4294901760
    %4099 = vmatmul.f32.gmra.mxu0 %v4098
    %v4100 = vpop.f32.mrf.mxu0
    %v4101 = vadd.f32 %v700, %v4100
    %4102 = vdwg.mxu0
    %4103 = vmatpush.msra.mxu0 0.0
    %4104 = vmatpush.msra.mxu0 0.0
    %4105 = vmatpush.msra.mxu0 0.0
    %4106 = vmatpush.msra.mxu0 0.0
    %4107 = vmatpush.msra.mxu0 0.0
    %4108 = vmatpush.msra.mxu0 0.0
    %4109 = vmatpush.msra.mxu0 0.0
    %4110 = vmatpush.msra.mxu0 0.0
    %4111 = vmatpush.msra.mxu0 0.0
    %4112 = vmatpush.msra.mxu0 0.0
    %4113 = vmatpush.msra.mxu0 0.0
    %4114 = vmatpush.msra.mxu0 0.0
    %v4115 = vand.u32 %v3771, 4294901760
    %v4116 = vsub.f32 %v3771, %v4115
    %v4117 = vand.u32 %v4116, 4294901760
    %v4118 = vsub.f32 %v4116, %v4117
    %v4119 = vand.u32 %v4118, 4294901760
    %4120 = vmatpush.msra.mxu0 %v4119
    %v4121 = vand.u32 %v3769, 4294901760
    %v4122 = vsub.f32 %v3769, %v4121
    %v4123 = vand.u32 %v4122, 4294901760
    %v4124 = vsub.f32 %v4122, %v4123
    %v4125 = vand.u32 %v4124, 4294901760
    %4126 = vmatpush.msra.mxu0 %v4125
    %v4127 = vand.u32 %v3767, 4294901760
    %v4128 = vsub.f32 %v3767, %v4127
    %v4129 = vand.u32 %v4128, 4294901760
    %v4130 = vsub.f32 %v4128, %v4129
    %v4131 = vand.u32 %v4130, 4294901760
    %4132 = vmatpush.msra.mxu0 %v4131
    %v4133 = vand.u32 %v3765, 4294901760
    %v4134 = vsub.f32 %v3765, %v4133
    %v4135 = vand.u32 %v4134, 4294901760
    %v4136 = vsub.f32 %v4134, %v4135
    %v4137 = vand.u32 %v4136, 4294901760
    %4138 = vmatpush.msra.mxu0 %v4137
    %v4139 = vand.u32 %v702, 4294901760
    %4140 = vmatmul.f32.gmra.mxu0 %v4139
    %v4141 = vpop.f32.mrf.mxu0
    %v4142 = vadd.f32 %v4077, %v4141
    %v4143 = vand.u32 %v704, 4294901760
    %4144 = vmatmul.f32.gmra.mxu0 %v4143
    %v4145 = vpop.f32.mrf.mxu0
    %v4146 = vadd.f32 %v4085, %v4145
    %v4147 = vand.u32 %v706, 4294901760
    %4148 = vmatmul.f32.gmra.mxu0 %v4147
    %v4149 = vpop.f32.mrf.mxu0
    %v4150 = vadd.f32 %v4093, %v4149
    %v4151 = vand.u32 %v708, 4294901760
    %4152 = vmatmul.f32.gmra.mxu0 %v4151
    %v4153 = vpop.f32.mrf.mxu0
    %v4154 = vadd.f32 %v4101, %v4153
    %4155 = vdwg.mxu0
    %4156 = vmatpush.msra.mxu0 0.0
    %4157 = vmatpush.msra.mxu0 0.0
    %4158 = vmatpush.msra.mxu0 0.0
    %4159 = vmatpush.msra.mxu0 0.0
    %4160 = vmatpush.msra.mxu0 0.0
    %4161 = vmatpush.msra.mxu0 0.0
    %4162 = vmatpush.msra.mxu0 0.0
    %4163 = vmatpush.msra.mxu0 0.0
    %4164 = vmatpush.msra.mxu0 0.0
    %4165 = vmatpush.msra.mxu0 0.0
    %4166 = vmatpush.msra.mxu0 0.0
    %4167 = vmatpush.msra.mxu0 0.0
    %v4168 = vand.u32 %v3771, 4294901760
    %v4169 = vsub.f32 %v3771, %v4168
    %4170 = vmatpush.msra.mxu0 %v4169
    %v4171 = vand.u32 %v3769, 4294901760
    %v4172 = vsub.f32 %v3769, %v4171
    %4173 = vmatpush.msra.mxu0 %v4172
    %v4174 = vand.u32 %v3767, 4294901760
    %v4175 = vsub.f32 %v3767, %v4174
    %4176 = vmatpush.msra.mxu0 %v4175
    %v4177 = vand.u32 %v3765, 4294901760
    %v4178 = vsub.f32 %v3765, %v4177
    %4179 = vmatpush.msra.mxu0 %v4178
    %v4180 = vand.u32 %v702, 4294901760
    %v4181 = vsub.f32 %v702, %v4180
    %4182 = vmatmul.f32.gmra.mxu0 %v4181
    %v4183 = vpop.f32.mrf.mxu0
    %v4184 = vadd.f32 %v4142, %v4183
    %v4185 = vand.u32 %v704, 4294901760
    %v4186 = vsub.f32 %v704, %v4185
    %4187 = vmatmul.f32.gmra.mxu0 %v4186
    %v4188 = vpop.f32.mrf.mxu0
    %v4189 = vadd.f32 %v4146, %v4188
    %v4190 = vand.u32 %v706, 4294901760
    %v4191 = vsub.f32 %v706, %v4190
    %4192 = vmatmul.f32.gmra.mxu0 %v4191
    %v4193 = vpop.f32.mrf.mxu0
    %v4194 = vadd.f32 %v4150, %v4193
    %v4195 = vand.u32 %v708, 4294901760
    %v4196 = vsub.f32 %v708, %v4195
    %4197 = vmatmul.f32.gmra.mxu0 %v4196
    %v4198 = vpop.f32.mrf.mxu0
    %v4199 = vadd.f32 %v4154, %v4198
    %4200 = vdwg.mxu0
    %4201 = vmatpush.msra.mxu0 0.0
    %4202 = vmatpush.msra.mxu0 0.0
    %4203 = vmatpush.msra.mxu0 0.0
    %4204 = vmatpush.msra.mxu0 0.0
    %4205 = vmatpush.msra.mxu0 0.0
    %4206 = vmatpush.msra.mxu0 0.0
    %4207 = vmatpush.msra.mxu0 0.0
    %4208 = vmatpush.msra.mxu0 0.0
    %4209 = vmatpush.msra.mxu0 0.0
    %4210 = vmatpush.msra.mxu0 0.0
    %4211 = vmatpush.msra.mxu0 0.0
    %4212 = vmatpush.msra.mxu0 0.0
    %v4213 = vand.u32 %v3771, 4294901760
    %4214 = vmatpush.msra.mxu0 %v4213
    %v4215 = vand.u32 %v3769, 4294901760
    %4216 = vmatpush.msra.mxu0 %v4215
    %v4217 = vand.u32 %v3767, 4294901760
    %4218 = vmatpush.msra.mxu0 %v4217
    %v4219 = vand.u32 %v3765, 4294901760
    %4220 = vmatpush.msra.mxu0 %v4219
    %v4221 = vand.u32 %v702, 4294901760
    %v4222 = vsub.f32 %v702, %v4221
    %v4223 = vand.u32 %v4222, 4294901760
    %4224 = vmatmul.f32.gmra.mxu0 %v4223
    %v4225 = vpop.f32.mrf.mxu0
    %v4226 = vadd.f32 %v4184, %v4225
    %v4227 = vand.u32 %v704, 4294901760
    %v4228 = vsub.f32 %v704, %v4227
    %v4229 = vand.u32 %v4228, 4294901760
    %4230 = vmatmul.f32.gmra.mxu0 %v4229
    %v4231 = vpop.f32.mrf.mxu0
    %v4232 = vadd.f32 %v4189, %v4231
    %v4233 = vand.u32 %v706, 4294901760
    %v4234 = vsub.f32 %v706, %v4233
    %v4235 = vand.u32 %v4234, 4294901760
    %4236 = vmatmul.f32.gmra.mxu0 %v4235
    %v4237 = vpop.f32.mrf.mxu0
    %v4238 = vadd.f32 %v4194, %v4237
    %v4239 = vand.u32 %v708, 4294901760
    %v4240 = vsub.f32 %v708, %v4239
    %v4241 = vand.u32 %v4240, 4294901760
    %4242 = vmatmul.f32.gmra.mxu0 %v4241
    %v4243 = vpop.f32.mrf.mxu0
    %v4244 = vadd.f32 %v4199, %v4243
    %4245 = vdwg.mxu0
    %4246 = vmatpush.msra.mxu0 0.0
    %4247 = vmatpush.msra.mxu0 0.0
    %4248 = vmatpush.msra.mxu0 0.0
    %4249 = vmatpush.msra.mxu0 0.0
    %4250 = vmatpush.msra.mxu0 0.0
    %4251 = vmatpush.msra.mxu0 0.0
    %4252 = vmatpush.msra.mxu0 0.0
    %4253 = vmatpush.msra.mxu0 0.0
    %4254 = vmatpush.msra.mxu0 0.0
    %4255 = vmatpush.msra.mxu0 0.0
    %4256 = vmatpush.msra.mxu0 0.0
    %4257 = vmatpush.msra.mxu0 0.0
    %v4258 = vand.u32 %v3771, 4294901760
    %v4259 = vsub.f32 %v3771, %v4258
    %v4260 = vand.u32 %v4259, 4294901760
    %4261 = vmatpush.msra.mxu0 %v4260
    %v4262 = vand.u32 %v3769, 4294901760
    %v4263 = vsub.f32 %v3769, %v4262
    %v4264 = vand.u32 %v4263, 4294901760
    %4265 = vmatpush.msra.mxu0 %v4264
    %v4266 = vand.u32 %v3767, 4294901760
    %v4267 = vsub.f32 %v3767, %v4266
    %v4268 = vand.u32 %v4267, 4294901760
    %4269 = vmatpush.msra.mxu0 %v4268
    %v4270 = vand.u32 %v3765, 4294901760
    %v4271 = vsub.f32 %v3765, %v4270
    %v4272 = vand.u32 %v4271, 4294901760
    %4273 = vmatpush.msra.mxu0 %v4272
    %v4274 = vand.u32 %v702, 4294901760
    %4275 = vmatmul.f32.gmra.mxu0 %v4274
    %v4276 = vpop.f32.mrf.mxu0
    %v4277 = vadd.f32 %v4226, %v4276
    %v4278 = vand.u32 %v704, 4294901760
    %4279 = vmatmul.f32.gmra.mxu0 %v4278
    %v4280 = vpop.f32.mrf.mxu0
    %v4281 = vadd.f32 %v4232, %v4280
    %v4282 = vand.u32 %v706, 4294901760
    %4283 = vmatmul.f32.gmra.mxu0 %v4282
    %v4284 = vpop.f32.mrf.mxu0
    %v4285 = vadd.f32 %v4238, %v4284
    %v4286 = vand.u32 %v708, 4294901760
    %4287 = vmatmul.f32.gmra.mxu0 %v4286
    %v4288 = vpop.f32.mrf.mxu0
    %v4289 = vadd.f32 %v4244, %v4288
    %4290 = vdwg.mxu0
    %4291 = vmatpush.msra.mxu0 0.0
    %4292 = vmatpush.msra.mxu0 0.0
    %4293 = vmatpush.msra.mxu0 0.0
    %4294 = vmatpush.msra.mxu0 0.0
    %4295 = vmatpush.msra.mxu0 0.0
    %4296 = vmatpush.msra.mxu0 0.0
    %4297 = vmatpush.msra.mxu0 0.0
    %4298 = vmatpush.msra.mxu0 0.0
    %4299 = vmatpush.msra.mxu0 0.0
    %4300 = vmatpush.msra.mxu0 0.0
    %4301 = vmatpush.msra.mxu0 0.0
    %4302 = vmatpush.msra.mxu0 0.0
    %v4303 = vand.u32 %v3771, 4294901760
    %4304 = vmatpush.msra.mxu0 %v4303
    %v4305 = vand.u32 %v3769, 4294901760
    %4306 = vmatpush.msra.mxu0 %v4305
    %v4307 = vand.u32 %v3767, 4294901760
    %4308 = vmatpush.msra.mxu0 %v4307
    %v4309 = vand.u32 %v3765, 4294901760
    %4310 = vmatpush.msra.mxu0 %v4309
    %v4311 = vand.u32 %v702, 4294901760
    %4312 = vmatmul.f32.gmra.mxu0 %v4311
    %v4313 = vpop.f32.mrf.mxu0
    %v4314 = vadd.f32 %v4277, %v4313
    %v4315 = vand.u32 %v704, 4294901760
    %4316 = vmatmul.f32.gmra.mxu0 %v4315
    %v4317 = vpop.f32.mrf.mxu0
    %v4318 = vadd.f32 %v4281, %v4317
    %v4319 = vand.u32 %v706, 4294901760
    %4320 = vmatmul.f32.gmra.mxu0 %v4319
    %v4321 = vpop.f32.mrf.mxu0
    %v4322 = vadd.f32 %v4285, %v4321
    %v4323 = vand.u32 %v708, 4294901760
    %4324 = vmatmul.f32.gmra.mxu0 %v4323
    %v4325 = vpop.f32.mrf.mxu0
    %v4326 = vadd.f32 %v4289, %v4325
    %4327 = vdwg.mxu0
    %v4328 = vmax.f32 %v4036, 0.0
    %v4329 = vmax.f32 %v4314, 0.0
    %v4330 = vmax.f32 %v4040, 0.0
    %v4331 = vmax.f32 %v4318, 0.0
    %v4332 = vmax.f32 %v4044, 0.0
    %v4333 = vmax.f32 %v4322, 0.0
    %v4334 = vmax.f32 %v4048, 0.0
    %v4335 = vmax.f32 %v4326, 0.0
    %v4336 = vperm.slane %v596, 5
    %v4337 = vperm.slane %v597, 5
    %v4338 = vmul.f32 %v4328, %v4336
    %v4339 = vmul.f32 %v4329, %v4337
    %v4340 = vmul.f32 %v4330, %v4336
    %v4341 = vmul.f32 %v4331, %v4337
    %v4342 = vmul.f32 %v4332, %v4336
    %v4343 = vmul.f32 %v4333, %v4337
    %v4344 = vmul.f32 %v4334, %v4336
    %v4345 = vmul.f32 %v4335, %v4337
    %v4346 = vadd.f32 %v3732, %v4338
    %v4347 = vadd.f32 %v3733, %v4339
    %v4348 = vadd.f32 %v3734, %v4340
    %v4349 = vadd.f32 %v3735, %v4341
    %v4350 = vadd.f32 %v3736, %v4342
    %v4351 = vadd.f32 %v3737, %v4343
    %v4352 = vadd.f32 %v3738, %v4344
    %v4353 = vadd.f32 %v3739, %v4345
    %4354 = vset.pattern.permute.xlu0 40
    %4355 = vperm.xlu0 %4354, %v43
    %v4356 = vpop.permute.xlu0 %4355
    %4358 = vset.pattern.permute.xlu0 40
    %4359 = vperm.xlu0 %4358, %v44
    %v4360 = vpop.permute.xlu0 %4359
    %4362 = vset.pattern.permute.xlu0 40
    %4363 = vperm.xlu0 %4362, %v45
    %v4364 = vpop.permute.xlu0 %4363
    %4366 = vset.pattern.permute.xlu0 40
    %4367 = vperm.xlu0 %4366, %v46
    %v4368 = vpop.permute.xlu0 %4367
    %v4370 = vadd.f32 %v646, %v4356
    %v4371 = vadd.f32 %v647, %v4356
    %v4372 = vadd.f32 %v648, %v4360
    %v4373 = vadd.f32 %v649, %v4360
    %v4374 = vadd.f32 %v650, %v4364
    %v4375 = vadd.f32 %v651, %v4364
    %v4376 = vadd.f32 %v652, %v4368
    %v4377 = vadd.f32 %v653, %v4368
    %v4378 = vmax.f32 %v4370, 0.0
    %v4379 = vmax.f32 %v4371, 0.0
    %v4380 = vmax.f32 %v4372, 0.0
    %v4381 = vmax.f32 %v4373, 0.0
    %v4382 = vmax.f32 %v4374, 0.0
    %v4383 = vmax.f32 %v4375, 0.0
    %v4384 = vmax.f32 %v4376, 0.0
    %v4385 = vmax.f32 %v4377, 0.0
    %4386 = vmatpush.msra.mxu0 0.0
    %4387 = vmatpush.msra.mxu0 0.0
    %4388 = vmatpush.msra.mxu0 0.0
    %4389 = vmatpush.msra.mxu0 0.0
    %4390 = vmatpush.msra.mxu0 0.0
    %4391 = vmatpush.msra.mxu0 0.0
    %4392 = vmatpush.msra.mxu0 0.0
    %4393 = vmatpush.msra.mxu0 0.0
    %4394 = vmatpush.msra.mxu0 0.0
    %4395 = vmatpush.msra.mxu0 0.0
    %4396 = vmatpush.msra.mxu0 0.0
    %4397 = vmatpush.msra.mxu0 0.0
    %v4398 = vand.u32 %v4384, 4294901760
    %4399 = vmatpush.msra.mxu0 %v4398
    %v4400 = vand.u32 %v4382, 4294901760
    %4401 = vmatpush.msra.mxu0 %v4400
    %v4402 = vand.u32 %v4380, 4294901760
    %4403 = vmatpush.msra.mxu0 %v4402
    %v4404 = vand.u32 %v4378, 4294901760
    %4405 = vmatpush.msra.mxu0 %v4404
    %v4406 = vand.u32 %v702, 4294901760
    %v4407 = vsub.f32 %v702, %v4406
    %v4408 = vand.u32 %v4407, 4294901760
    %v4409 = vsub.f32 %v4407, %v4408
    %v4410 = vand.u32 %v4409, 4294901760
    %4411 = vmatmul.f32.gmra.mxu0 %v4410
    %v4412 = vpop.f32.mrf.mxu0
    %v4413 = vadd.f32 %v688, %v4412
    %v4414 = vand.u32 %v704, 4294901760
    %v4415 = vsub.f32 %v704, %v4414
    %v4416 = vand.u32 %v4415, 4294901760
    %v4417 = vsub.f32 %v4415, %v4416
    %v4418 = vand.u32 %v4417, 4294901760
    %4419 = vmatmul.f32.gmra.mxu0 %v4418
    %v4420 = vpop.f32.mrf.mxu0
    %v4421 = vadd.f32 %v692, %v4420
    %v4422 = vand.u32 %v706, 4294901760
    %v4423 = vsub.f32 %v706, %v4422
    %v4424 = vand.u32 %v4423, 4294901760
    %v4425 = vsub.f32 %v4423, %v4424
    %v4426 = vand.u32 %v4425, 4294901760
    %4427 = vmatmul.f32.gmra.mxu0 %v4426
    %v4428 = vpop.f32.mrf.mxu0
    %v4429 = vadd.f32 %v696, %v4428
    %v4430 = vand.u32 %v708, 4294901760
    %v4431 = vsub.f32 %v708, %v4430
    %v4432 = vand.u32 %v4431, 4294901760
    %v4433 = vsub.f32 %v4431, %v4432
    %v4434 = vand.u32 %v4433, 4294901760
    %4435 = vmatmul.f32.gmra.mxu0 %v4434
    %v4436 = vpop.f32.mrf.mxu0
    %v4437 = vadd.f32 %v700, %v4436
    %4438 = vdwg.mxu0
    %4439 = vmatpush.msra.mxu0 0.0
    %4440 = vmatpush.msra.mxu0 0.0
    %4441 = vmatpush.msra.mxu0 0.0
    %4442 = vmatpush.msra.mxu0 0.0
    %4443 = vmatpush.msra.mxu0 0.0
    %4444 = vmatpush.msra.mxu0 0.0
    %4445 = vmatpush.msra.mxu0 0.0
    %4446 = vmatpush.msra.mxu0 0.0
    %4447 = vmatpush.msra.mxu0 0.0
    %4448 = vmatpush.msra.mxu0 0.0
    %4449 = vmatpush.msra.mxu0 0.0
    %4450 = vmatpush.msra.mxu0 0.0
    %v4451 = vand.u32 %v4384, 4294901760
    %v4452 = vsub.f32 %v4384, %v4451
    %v4453 = vand.u32 %v4452, 4294901760
    %v4454 = vsub.f32 %v4452, %v4453
    %v4455 = vand.u32 %v4454, 4294901760
    %4456 = vmatpush.msra.mxu0 %v4455
    %v4457 = vand.u32 %v4382, 4294901760
    %v4458 = vsub.f32 %v4382, %v4457
    %v4459 = vand.u32 %v4458, 4294901760
    %v4460 = vsub.f32 %v4458, %v4459
    %v4461 = vand.u32 %v4460, 4294901760
    %4462 = vmatpush.msra.mxu0 %v4461
    %v4463 = vand.u32 %v4380, 4294901760
    %v4464 = vsub.f32 %v4380, %v4463
    %v4465 = vand.u32 %v4464, 4294901760
    %v4466 = vsub.f32 %v4464, %v4465
    %v4467 = vand.u32 %v4466, 4294901760
    %4468 = vmatpush.msra.mxu0 %v4467
    %v4469 = vand.u32 %v4378, 4294901760
    %v4470 = vsub.f32 %v4378, %v4469
    %v4471 = vand.u32 %v4470, 4294901760
    %v4472 = vsub.f32 %v4470, %v4471
    %v4473 = vand.u32 %v4472, 4294901760
    %4474 = vmatpush.msra.mxu0 %v4473
    %v4475 = vand.u32 %v702, 4294901760
    %4476 = vmatmul.f32.gmra.mxu0 %v4475
    %v4477 = vpop.f32.mrf.mxu0
    %v4478 = vadd.f32 %v4413, %v4477
    %v4479 = vand.u32 %v704, 4294901760
    %4480 = vmatmul.f32.gmra.mxu0 %v4479
    %v4481 = vpop.f32.mrf.mxu0
    %v4482 = vadd.f32 %v4421, %v4481
    %v4483 = vand.u32 %v706, 4294901760
    %4484 = vmatmul.f32.gmra.mxu0 %v4483
    %v4485 = vpop.f32.mrf.mxu0
    %v4486 = vadd.f32 %v4429, %v4485
    %v4487 = vand.u32 %v708, 4294901760
    %4488 = vmatmul.f32.gmra.mxu0 %v4487
    %v4489 = vpop.f32.mrf.mxu0
    %v4490 = vadd.f32 %v4437, %v4489
    %4491 = vdwg.mxu0
    %4492 = vmatpush.msra.mxu0 0.0
    %4493 = vmatpush.msra.mxu0 0.0
    %4494 = vmatpush.msra.mxu0 0.0
    %4495 = vmatpush.msra.mxu0 0.0
    %4496 = vmatpush.msra.mxu0 0.0
    %4497 = vmatpush.msra.mxu0 0.0
    %4498 = vmatpush.msra.mxu0 0.0
    %4499 = vmatpush.msra.mxu0 0.0
    %4500 = vmatpush.msra.mxu0 0.0
    %4501 = vmatpush.msra.mxu0 0.0
    %4502 = vmatpush.msra.mxu0 0.0
    %4503 = vmatpush.msra.mxu0 0.0
    %v4504 = vand.u32 %v4384, 4294901760
    %v4505 = vsub.f32 %v4384, %v4504
    %4506 = vmatpush.msra.mxu0 %v4505
    %v4507 = vand.u32 %v4382, 4294901760
    %v4508 = vsub.f32 %v4382, %v4507
    %4509 = vmatpush.msra.mxu0 %v4508
    %v4510 = vand.u32 %v4380, 4294901760
    %v4511 = vsub.f32 %v4380, %v4510
    %4512 = vmatpush.msra.mxu0 %v4511
    %v4513 = vand.u32 %v4378, 4294901760
    %v4514 = vsub.f32 %v4378, %v4513
    %4515 = vmatpush.msra.mxu0 %v4514
    %v4516 = vand.u32 %v702, 4294901760
    %v4517 = vsub.f32 %v702, %v4516
    %4518 = vmatmul.f32.gmra.mxu0 %v4517
    %v4519 = vpop.f32.mrf.mxu0
    %v4520 = vadd.f32 %v4478, %v4519
    %v4521 = vand.u32 %v704, 4294901760
    %v4522 = vsub.f32 %v704, %v4521
    %4523 = vmatmul.f32.gmra.mxu0 %v4522
    %v4524 = vpop.f32.mrf.mxu0
    %v4525 = vadd.f32 %v4482, %v4524
    %v4526 = vand.u32 %v706, 4294901760
    %v4527 = vsub.f32 %v706, %v4526
    %4528 = vmatmul.f32.gmra.mxu0 %v4527
    %v4529 = vpop.f32.mrf.mxu0
    %v4530 = vadd.f32 %v4486, %v4529
    %v4531 = vand.u32 %v708, 4294901760
    %v4532 = vsub.f32 %v708, %v4531
    %4533 = vmatmul.f32.gmra.mxu0 %v4532
    %v4534 = vpop.f32.mrf.mxu0
    %v4535 = vadd.f32 %v4490, %v4534
    %4536 = vdwg.mxu0
    %4537 = vmatpush.msra.mxu0 0.0
    %4538 = vmatpush.msra.mxu0 0.0
    %4539 = vmatpush.msra.mxu0 0.0
    %4540 = vmatpush.msra.mxu0 0.0
    %4541 = vmatpush.msra.mxu0 0.0
    %4542 = vmatpush.msra.mxu0 0.0
    %4543 = vmatpush.msra.mxu0 0.0
    %4544 = vmatpush.msra.mxu0 0.0
    %4545 = vmatpush.msra.mxu0 0.0
    %4546 = vmatpush.msra.mxu0 0.0
    %4547 = vmatpush.msra.mxu0 0.0
    %4548 = vmatpush.msra.mxu0 0.0
    %v4549 = vand.u32 %v4384, 4294901760
    %4550 = vmatpush.msra.mxu0 %v4549
    %v4551 = vand.u32 %v4382, 4294901760
    %4552 = vmatpush.msra.mxu0 %v4551
    %v4553 = vand.u32 %v4380, 4294901760
    %4554 = vmatpush.msra.mxu0 %v4553
    %v4555 = vand.u32 %v4378, 4294901760
    %4556 = vmatpush.msra.mxu0 %v4555
    %v4557 = vand.u32 %v702, 4294901760
    %v4558 = vsub.f32 %v702, %v4557
    %v4559 = vand.u32 %v4558, 4294901760
    %4560 = vmatmul.f32.gmra.mxu0 %v4559
    %v4561 = vpop.f32.mrf.mxu0
    %v4562 = vadd.f32 %v4520, %v4561
    %v4563 = vand.u32 %v704, 4294901760
    %v4564 = vsub.f32 %v704, %v4563
    %v4565 = vand.u32 %v4564, 4294901760
    %4566 = vmatmul.f32.gmra.mxu0 %v4565
    %v4567 = vpop.f32.mrf.mxu0
    %v4568 = vadd.f32 %v4525, %v4567
    %v4569 = vand.u32 %v706, 4294901760
    %v4570 = vsub.f32 %v706, %v4569
    %v4571 = vand.u32 %v4570, 4294901760
    %4572 = vmatmul.f32.gmra.mxu0 %v4571
    %v4573 = vpop.f32.mrf.mxu0
    %v4574 = vadd.f32 %v4530, %v4573
    %v4575 = vand.u32 %v708, 4294901760
    %v4576 = vsub.f32 %v708, %v4575
    %v4577 = vand.u32 %v4576, 4294901760
    %4578 = vmatmul.f32.gmra.mxu0 %v4577
    %v4579 = vpop.f32.mrf.mxu0
    %v4580 = vadd.f32 %v4535, %v4579
    %4581 = vdwg.mxu0
    %4582 = vmatpush.msra.mxu0 0.0
    %4583 = vmatpush.msra.mxu0 0.0
    %4584 = vmatpush.msra.mxu0 0.0
    %4585 = vmatpush.msra.mxu0 0.0
    %4586 = vmatpush.msra.mxu0 0.0
    %4587 = vmatpush.msra.mxu0 0.0
    %4588 = vmatpush.msra.mxu0 0.0
    %4589 = vmatpush.msra.mxu0 0.0
    %4590 = vmatpush.msra.mxu0 0.0
    %4591 = vmatpush.msra.mxu0 0.0
    %4592 = vmatpush.msra.mxu0 0.0
    %4593 = vmatpush.msra.mxu0 0.0
    %v4594 = vand.u32 %v4384, 4294901760
    %v4595 = vsub.f32 %v4384, %v4594
    %v4596 = vand.u32 %v4595, 4294901760
    %4597 = vmatpush.msra.mxu0 %v4596
    %v4598 = vand.u32 %v4382, 4294901760
    %v4599 = vsub.f32 %v4382, %v4598
    %v4600 = vand.u32 %v4599, 4294901760
    %4601 = vmatpush.msra.mxu0 %v4600
    %v4602 = vand.u32 %v4380, 4294901760
    %v4603 = vsub.f32 %v4380, %v4602
    %v4604 = vand.u32 %v4603, 4294901760
    %4605 = vmatpush.msra.mxu0 %v4604
    %v4606 = vand.u32 %v4378, 4294901760
    %v4607 = vsub.f32 %v4378, %v4606
    %v4608 = vand.u32 %v4607, 4294901760
    %4609 = vmatpush.msra.mxu0 %v4608
    %v4610 = vand.u32 %v702, 4294901760
    %4611 = vmatmul.f32.gmra.mxu0 %v4610
    %v4612 = vpop.f32.mrf.mxu0
    %v4613 = vadd.f32 %v4562, %v4612
    %v4614 = vand.u32 %v704, 4294901760
    %4615 = vmatmul.f32.gmra.mxu0 %v4614
    %v4616 = vpop.f32.mrf.mxu0
    %v4617 = vadd.f32 %v4568, %v4616
    %v4618 = vand.u32 %v706, 4294901760
    %4619 = vmatmul.f32.gmra.mxu0 %v4618
    %v4620 = vpop.f32.mrf.mxu0
    %v4621 = vadd.f32 %v4574, %v4620
    %v4622 = vand.u32 %v708, 4294901760
    %4623 = vmatmul.f32.gmra.mxu0 %v4622
    %v4624 = vpop.f32.mrf.mxu0
    %v4625 = vadd.f32 %v4580, %v4624
    %4626 = vdwg.mxu0
    %4627 = vmatpush.msra.mxu0 0.0
    %4628 = vmatpush.msra.mxu0 0.0
    %4629 = vmatpush.msra.mxu0 0.0
    %4630 = vmatpush.msra.mxu0 0.0
    %4631 = vmatpush.msra.mxu0 0.0
    %4632 = vmatpush.msra.mxu0 0.0
    %4633 = vmatpush.msra.mxu0 0.0
    %4634 = vmatpush.msra.mxu0 0.0
    %4635 = vmatpush.msra.mxu0 0.0
    %4636 = vmatpush.msra.mxu0 0.0
    %4637 = vmatpush.msra.mxu0 0.0
    %4638 = vmatpush.msra.mxu0 0.0
    %v4639 = vand.u32 %v4384, 4294901760
    %4640 = vmatpush.msra.mxu0 %v4639
    %v4641 = vand.u32 %v4382, 4294901760
    %4642 = vmatpush.msra.mxu0 %v4641
    %v4643 = vand.u32 %v4380, 4294901760
    %4644 = vmatpush.msra.mxu0 %v4643
    %v4645 = vand.u32 %v4378, 4294901760
    %4646 = vmatpush.msra.mxu0 %v4645
    %v4647 = vand.u32 %v702, 4294901760
    %4648 = vmatmul.f32.gmra.mxu0 %v4647
    %v4649 = vpop.f32.mrf.mxu0
    %v4650 = vadd.f32 %v4613, %v4649
    %v4651 = vand.u32 %v704, 4294901760
    %4652 = vmatmul.f32.gmra.mxu0 %v4651
    %v4653 = vpop.f32.mrf.mxu0
    %v4654 = vadd.f32 %v4617, %v4653
    %v4655 = vand.u32 %v706, 4294901760
    %4656 = vmatmul.f32.gmra.mxu0 %v4655
    %v4657 = vpop.f32.mrf.mxu0
    %v4658 = vadd.f32 %v4621, %v4657
    %v4659 = vand.u32 %v708, 4294901760
    %4660 = vmatmul.f32.gmra.mxu0 %v4659
    %v4661 = vpop.f32.mrf.mxu0
    %v4662 = vadd.f32 %v4625, %v4661
    %4663 = vdwg.mxu0
    %4664 = vmatpush.msra.mxu0 0.0
    %4665 = vmatpush.msra.mxu0 0.0
    %4666 = vmatpush.msra.mxu0 0.0
    %4667 = vmatpush.msra.mxu0 0.0
    %4668 = vmatpush.msra.mxu0 0.0
    %4669 = vmatpush.msra.mxu0 0.0
    %4670 = vmatpush.msra.mxu0 0.0
    %4671 = vmatpush.msra.mxu0 0.0
    %4672 = vmatpush.msra.mxu0 0.0
    %4673 = vmatpush.msra.mxu0 0.0
    %4674 = vmatpush.msra.mxu0 0.0
    %4675 = vmatpush.msra.mxu0 0.0
    %v4676 = vand.u32 %v4385, 4294901760
    %4677 = vmatpush.msra.mxu0 %v4676
    %v4678 = vand.u32 %v4383, 4294901760
    %4679 = vmatpush.msra.mxu0 %v4678
    %v4680 = vand.u32 %v4381, 4294901760
    %4681 = vmatpush.msra.mxu0 %v4680
    %v4682 = vand.u32 %v4379, 4294901760
    %4683 = vmatpush.msra.mxu0 %v4682
    %v4684 = vand.u32 %v702, 4294901760
    %v4685 = vsub.f32 %v702, %v4684
    %v4686 = vand.u32 %v4685, 4294901760
    %v4687 = vsub.f32 %v4685, %v4686
    %v4688 = vand.u32 %v4687, 4294901760
    %4689 = vmatmul.f32.gmra.mxu0 %v4688
    %v4690 = vpop.f32.mrf.mxu0
    %v4691 = vadd.f32 %v688, %v4690
    %v4692 = vand.u32 %v704, 4294901760
    %v4693 = vsub.f32 %v704, %v4692
    %v4694 = vand.u32 %v4693, 4294901760
    %v4695 = vsub.f32 %v4693, %v4694
    %v4696 = vand.u32 %v4695, 4294901760
    %4697 = vmatmul.f32.gmra.mxu0 %v4696
    %v4698 = vpop.f32.mrf.mxu0
    %v4699 = vadd.f32 %v692, %v4698
    %v4700 = vand.u32 %v706, 4294901760
    %v4701 = vsub.f32 %v706, %v4700
    %v4702 = vand.u32 %v4701, 4294901760
    %v4703 = vsub.f32 %v4701, %v4702
    %v4704 = vand.u32 %v4703, 4294901760
    %4705 = vmatmul.f32.gmra.mxu0 %v4704
    %v4706 = vpop.f32.mrf.mxu0
    %v4707 = vadd.f32 %v696, %v4706
    %v4708 = vand.u32 %v708, 4294901760
    %v4709 = vsub.f32 %v708, %v4708
    %v4710 = vand.u32 %v4709, 4294901760
    %v4711 = vsub.f32 %v4709, %v4710
    %v4712 = vand.u32 %v4711, 4294901760
    %4713 = vmatmul.f32.gmra.mxu0 %v4712
    %v4714 = vpop.f32.mrf.mxu0
    %v4715 = vadd.f32 %v700, %v4714
    %4716 = vdwg.mxu0
    %4717 = vmatpush.msra.mxu0 0.0
    %4718 = vmatpush.msra.mxu0 0.0
    %4719 = vmatpush.msra.mxu0 0.0
    %4720 = vmatpush.msra.mxu0 0.0
    %4721 = vmatpush.msra.mxu0 0.0
    %4722 = vmatpush.msra.mxu0 0.0
    %4723 = vmatpush.msra.mxu0 0.0
    %4724 = vmatpush.msra.mxu0 0.0
    %4725 = vmatpush.msra.mxu0 0.0
    %4726 = vmatpush.msra.mxu0 0.0
    %4727 = vmatpush.msra.mxu0 0.0
    %4728 = vmatpush.msra.mxu0 0.0
    %v4729 = vand.u32 %v4385, 4294901760
    %v4730 = vsub.f32 %v4385, %v4729
    %v4731 = vand.u32 %v4730, 4294901760
    %v4732 = vsub.f32 %v4730, %v4731
    %v4733 = vand.u32 %v4732, 4294901760
    %4734 = vmatpush.msra.mxu0 %v4733
    %v4735 = vand.u32 %v4383, 4294901760
    %v4736 = vsub.f32 %v4383, %v4735
    %v4737 = vand.u32 %v4736, 4294901760
    %v4738 = vsub.f32 %v4736, %v4737
    %v4739 = vand.u32 %v4738, 4294901760
    %4740 = vmatpush.msra.mxu0 %v4739
    %v4741 = vand.u32 %v4381, 4294901760
    %v4742 = vsub.f32 %v4381, %v4741
    %v4743 = vand.u32 %v4742, 4294901760
    %v4744 = vsub.f32 %v4742, %v4743
    %v4745 = vand.u32 %v4744, 4294901760
    %4746 = vmatpush.msra.mxu0 %v4745
    %v4747 = vand.u32 %v4379, 4294901760
    %v4748 = vsub.f32 %v4379, %v4747
    %v4749 = vand.u32 %v4748, 4294901760
    %v4750 = vsub.f32 %v4748, %v4749
    %v4751 = vand.u32 %v4750, 4294901760
    %4752 = vmatpush.msra.mxu0 %v4751
    %v4753 = vand.u32 %v702, 4294901760
    %4754 = vmatmul.f32.gmra.mxu0 %v4753
    %v4755 = vpop.f32.mrf.mxu0
    %v4756 = vadd.f32 %v4691, %v4755
    %v4757 = vand.u32 %v704, 4294901760
    %4758 = vmatmul.f32.gmra.mxu0 %v4757
    %v4759 = vpop.f32.mrf.mxu0
    %v4760 = vadd.f32 %v4699, %v4759
    %v4761 = vand.u32 %v706, 4294901760
    %4762 = vmatmul.f32.gmra.mxu0 %v4761
    %v4763 = vpop.f32.mrf.mxu0
    %v4764 = vadd.f32 %v4707, %v4763
    %v4765 = vand.u32 %v708, 4294901760
    %4766 = vmatmul.f32.gmra.mxu0 %v4765
    %v4767 = vpop.f32.mrf.mxu0
    %v4768 = vadd.f32 %v4715, %v4767
    %4769 = vdwg.mxu0
    %4770 = vmatpush.msra.mxu0 0.0
    %4771 = vmatpush.msra.mxu0 0.0
    %4772 = vmatpush.msra.mxu0 0.0
    %4773 = vmatpush.msra.mxu0 0.0
    %4774 = vmatpush.msra.mxu0 0.0
    %4775 = vmatpush.msra.mxu0 0.0
    %4776 = vmatpush.msra.mxu0 0.0
    %4777 = vmatpush.msra.mxu0 0.0
    %4778 = vmatpush.msra.mxu0 0.0
    %4779 = vmatpush.msra.mxu0 0.0
    %4780 = vmatpush.msra.mxu0 0.0
    %4781 = vmatpush.msra.mxu0 0.0
    %v4782 = vand.u32 %v4385, 4294901760
    %v4783 = vsub.f32 %v4385, %v4782
    %4784 = vmatpush.msra.mxu0 %v4783
    %v4785 = vand.u32 %v4383, 4294901760
    %v4786 = vsub.f32 %v4383, %v4785
    %4787 = vmatpush.msra.mxu0 %v4786
    %v4788 = vand.u32 %v4381, 4294901760
    %v4789 = vsub.f32 %v4381, %v4788
    %4790 = vmatpush.msra.mxu0 %v4789
    %v4791 = vand.u32 %v4379, 4294901760
    %v4792 = vsub.f32 %v4379, %v4791
    %4793 = vmatpush.msra.mxu0 %v4792
    %v4794 = vand.u32 %v702, 4294901760
    %v4795 = vsub.f32 %v702, %v4794
    %4796 = vmatmul.f32.gmra.mxu0 %v4795
    %v4797 = vpop.f32.mrf.mxu0
    %v4798 = vadd.f32 %v4756, %v4797
    %v4799 = vand.u32 %v704, 4294901760
    %v4800 = vsub.f32 %v704, %v4799
    %4801 = vmatmul.f32.gmra.mxu0 %v4800
    %v4802 = vpop.f32.mrf.mxu0
    %v4803 = vadd.f32 %v4760, %v4802
    %v4804 = vand.u32 %v706, 4294901760
    %v4805 = vsub.f32 %v706, %v4804
    %4806 = vmatmul.f32.gmra.mxu0 %v4805
    %v4807 = vpop.f32.mrf.mxu0
    %v4808 = vadd.f32 %v4764, %v4807
    %v4809 = vand.u32 %v708, 4294901760
    %v4810 = vsub.f32 %v708, %v4809
    %4811 = vmatmul.f32.gmra.mxu0 %v4810
    %v4812 = vpop.f32.mrf.mxu0
    %v4813 = vadd.f32 %v4768, %v4812
    %4814 = vdwg.mxu0
    %4815 = vmatpush.msra.mxu0 0.0
    %4816 = vmatpush.msra.mxu0 0.0
    %4817 = vmatpush.msra.mxu0 0.0
    %4818 = vmatpush.msra.mxu0 0.0
    %4819 = vmatpush.msra.mxu0 0.0
    %4820 = vmatpush.msra.mxu0 0.0
    %4821 = vmatpush.msra.mxu0 0.0
    %4822 = vmatpush.msra.mxu0 0.0
    %4823 = vmatpush.msra.mxu0 0.0
    %4824 = vmatpush.msra.mxu0 0.0
    %4825 = vmatpush.msra.mxu0 0.0
    %4826 = vmatpush.msra.mxu0 0.0
    %v4827 = vand.u32 %v4385, 4294901760
    %4828 = vmatpush.msra.mxu0 %v4827
    %v4829 = vand.u32 %v4383, 4294901760
    %4830 = vmatpush.msra.mxu0 %v4829
    %v4831 = vand.u32 %v4381, 4294901760
    %4832 = vmatpush.msra.mxu0 %v4831
    %v4833 = vand.u32 %v4379, 4294901760
    %4834 = vmatpush.msra.mxu0 %v4833
    %v4835 = vand.u32 %v702, 4294901760
    %v4836 = vsub.f32 %v702, %v4835
    %v4837 = vand.u32 %v4836, 4294901760
    %4838 = vmatmul.f32.gmra.mxu0 %v4837
    %v4839 = vpop.f32.mrf.mxu0
    %v4840 = vadd.f32 %v4798, %v4839
    %v4841 = vand.u32 %v704, 4294901760
    %v4842 = vsub.f32 %v704, %v4841
    %v4843 = vand.u32 %v4842, 4294901760
    %4844 = vmatmul.f32.gmra.mxu0 %v4843
    %v4845 = vpop.f32.mrf.mxu0
    %v4846 = vadd.f32 %v4803, %v4845
    %v4847 = vand.u32 %v706, 4294901760
    %v4848 = vsub.f32 %v706, %v4847
    %v4849 = vand.u32 %v4848, 4294901760
    %4850 = vmatmul.f32.gmra.mxu0 %v4849
    %v4851 = vpop.f32.mrf.mxu0
    %v4852 = vadd.f32 %v4808, %v4851
    %v4853 = vand.u32 %v708, 4294901760
    %v4854 = vsub.f32 %v708, %v4853
    %v4855 = vand.u32 %v4854, 4294901760
    %4856 = vmatmul.f32.gmra.mxu0 %v4855
    %v4857 = vpop.f32.mrf.mxu0
    %v4858 = vadd.f32 %v4813, %v4857
    %4859 = vdwg.mxu0
    %4860 = vmatpush.msra.mxu0 0.0
    %4861 = vmatpush.msra.mxu0 0.0
    %4862 = vmatpush.msra.mxu0 0.0
    %4863 = vmatpush.msra.mxu0 0.0
    %4864 = vmatpush.msra.mxu0 0.0
    %4865 = vmatpush.msra.mxu0 0.0
    %4866 = vmatpush.msra.mxu0 0.0
    %4867 = vmatpush.msra.mxu0 0.0
    %4868 = vmatpush.msra.mxu0 0.0
    %4869 = vmatpush.msra.mxu0 0.0
    %4870 = vmatpush.msra.mxu0 0.0
    %4871 = vmatpush.msra.mxu0 0.0
    %v4872 = vand.u32 %v4385, 4294901760
    %v4873 = vsub.f32 %v4385, %v4872
    %v4874 = vand.u32 %v4873, 4294901760
    %4875 = vmatpush.msra.mxu0 %v4874
    %v4876 = vand.u32 %v4383, 4294901760
    %v4877 = vsub.f32 %v4383, %v4876
    %v4878 = vand.u32 %v4877, 4294901760
    %4879 = vmatpush.msra.mxu0 %v4878
    %v4880 = vand.u32 %v4381, 4294901760
    %v4881 = vsub.f32 %v4381, %v4880
    %v4882 = vand.u32 %v4881, 4294901760
    %4883 = vmatpush.msra.mxu0 %v4882
    %v4884 = vand.u32 %v4379, 4294901760
    %v4885 = vsub.f32 %v4379, %v4884
    %v4886 = vand.u32 %v4885, 4294901760
    %4887 = vmatpush.msra.mxu0 %v4886
    %v4888 = vand.u32 %v702, 4294901760
    %4889 = vmatmul.f32.gmra.mxu0 %v4888
    %v4890 = vpop.f32.mrf.mxu0
    %v4891 = vadd.f32 %v4840, %v4890
    %v4892 = vand.u32 %v704, 4294901760
    %4893 = vmatmul.f32.gmra.mxu0 %v4892
    %v4894 = vpop.f32.mrf.mxu0
    %v4895 = vadd.f32 %v4846, %v4894
    %v4896 = vand.u32 %v706, 4294901760
    %4897 = vmatmul.f32.gmra.mxu0 %v4896
    %v4898 = vpop.f32.mrf.mxu0
    %v4899 = vadd.f32 %v4852, %v4898
    %v4900 = vand.u32 %v708, 4294901760
    %4901 = vmatmul.f32.gmra.mxu0 %v4900
    %v4902 = vpop.f32.mrf.mxu0
    %v4903 = vadd.f32 %v4858, %v4902
    %4904 = vdwg.mxu0
    %4905 = vmatpush.msra.mxu0 0.0
    %4906 = vmatpush.msra.mxu0 0.0
    %4907 = vmatpush.msra.mxu0 0.0
    %4908 = vmatpush.msra.mxu0 0.0
    %4909 = vmatpush.msra.mxu0 0.0
    %4910 = vmatpush.msra.mxu0 0.0
    %4911 = vmatpush.msra.mxu0 0.0
    %4912 = vmatpush.msra.mxu0 0.0
    %4913 = vmatpush.msra.mxu0 0.0
    %4914 = vmatpush.msra.mxu0 0.0
    %4915 = vmatpush.msra.mxu0 0.0
    %4916 = vmatpush.msra.mxu0 0.0
    %v4917 = vand.u32 %v4385, 4294901760
    %4918 = vmatpush.msra.mxu0 %v4917
    %v4919 = vand.u32 %v4383, 4294901760
    %4920 = vmatpush.msra.mxu0 %v4919
    %v4921 = vand.u32 %v4381, 4294901760
    %4922 = vmatpush.msra.mxu0 %v4921
    %v4923 = vand.u32 %v4379, 4294901760
    %4924 = vmatpush.msra.mxu0 %v4923
    %v4925 = vand.u32 %v702, 4294901760
    %4926 = vmatmul.f32.gmra.mxu0 %v4925
    %v4927 = vpop.f32.mrf.mxu0
    %v4928 = vadd.f32 %v4891, %v4927
    %v4929 = vand.u32 %v704, 4294901760
    %4930 = vmatmul.f32.gmra.mxu0 %v4929
    %v4931 = vpop.f32.mrf.mxu0
    %v4932 = vadd.f32 %v4895, %v4931
    %v4933 = vand.u32 %v706, 4294901760
    %4934 = vmatmul.f32.gmra.mxu0 %v4933
    %v4935 = vpop.f32.mrf.mxu0
    %v4936 = vadd.f32 %v4899, %v4935
    %v4937 = vand.u32 %v708, 4294901760
    %4938 = vmatmul.f32.gmra.mxu0 %v4937
    %v4939 = vpop.f32.mrf.mxu0
    %v4940 = vadd.f32 %v4903, %v4939
    %4941 = vdwg.mxu0
    %v4942 = vmax.f32 %v4650, 0.0
    %v4943 = vmax.f32 %v4928, 0.0
    %v4944 = vmax.f32 %v4654, 0.0
    %v4945 = vmax.f32 %v4932, 0.0
    %v4946 = vmax.f32 %v4658, 0.0
    %v4947 = vmax.f32 %v4936, 0.0
    %v4948 = vmax.f32 %v4662, 0.0
    %v4949 = vmax.f32 %v4940, 0.0
    %v4950 = vperm.slane %v596, 6
    %v4951 = vperm.slane %v597, 6
    %v4952 = vmul.f32 %v4942, %v4950
    %v4953 = vmul.f32 %v4943, %v4951
    %v4954 = vmul.f32 %v4944, %v4950
    %v4955 = vmul.f32 %v4945, %v4951
    %v4956 = vmul.f32 %v4946, %v4950
    %v4957 = vmul.f32 %v4947, %v4951
    %v4958 = vmul.f32 %v4948, %v4950
    %v4959 = vmul.f32 %v4949, %v4951
    %v4960 = vadd.f32 %v4346, %v4952
    %v4961 = vadd.f32 %v4347, %v4953
    %v4962 = vadd.f32 %v4348, %v4954
    %v4963 = vadd.f32 %v4349, %v4955
    %v4964 = vadd.f32 %v4350, %v4956
    %v4965 = vadd.f32 %v4351, %v4957
    %v4966 = vadd.f32 %v4352, %v4958
    %v4967 = vadd.f32 %v4353, %v4959
    %4968 = vrot.lane.b32.xlu0 %v47, 64
    %v4969 = vpop.permute.xlu0 %4968
    %v4970 = vsel %vm158, %v4969, 0
    %4972 = vmatpush.msra.mxu0 0.0
    %4973 = vmatpush.msra.mxu0 0.0
    %4974 = vmatpush.msra.mxu0 0.0
    %4975 = vmatpush.msra.mxu0 0.0
    %4976 = vmatpush.msra.mxu0 0.0
    %4977 = vmatpush.msra.mxu0 0.0
    %4978 = vmatpush.msra.mxu0 0.0
    %4979 = vmatpush.msra.mxu0 0.0
    %4980 = vmatpush.msra.mxu0 0.0
    %4981 = vmatpush.msra.mxu0 0.0
    %4982 = vmatpush.msra.mxu0 0.0
    %4983 = vmatpush.msra.mxu0 0.0
    %v4984 = vand.u32 %v4966, 4294901760
    %4985 = vmatpush.msra.mxu0 %v4984
    %v4986 = vand.u32 %v4964, 4294901760
    %4987 = vmatpush.msra.mxu0 %v4986
    %v4988 = vand.u32 %v4962, 4294901760
    %4989 = vmatpush.msra.mxu0 %v4988
    %v4990 = vand.u32 %v4960, 4294901760
    %4991 = vmatpush.msra.mxu0 %v4990
    %v4992 = vand.u32 %v4970, 4294901760
    %v4993 = vsub.f32 %v4970, %v4992
    %v4994 = vand.u32 %v4993, 4294901760
    %v4995 = vsub.f32 %v4993, %v4994
    %v4996 = vand.u32 %v4995, 4294901760
    %4997 = vmatmul.f32.gmra.mxu0 %v4996
    %v4998 = vpop.f32.mrf.mxu0
    %v4999 = vadd.f32 0.0, %v4998
    %5000 = vdwg.mxu0
    %5001 = vmatpush.msra.mxu0 0.0
    %5002 = vmatpush.msra.mxu0 0.0
    %5003 = vmatpush.msra.mxu0 0.0
    %5004 = vmatpush.msra.mxu0 0.0
    %5005 = vmatpush.msra.mxu0 0.0
    %5006 = vmatpush.msra.mxu0 0.0
    %5007 = vmatpush.msra.mxu0 0.0
    %5008 = vmatpush.msra.mxu0 0.0
    %5009 = vmatpush.msra.mxu0 0.0
    %5010 = vmatpush.msra.mxu0 0.0
    %5011 = vmatpush.msra.mxu0 0.0
    %5012 = vmatpush.msra.mxu0 0.0
    %v5013 = vand.u32 %v4966, 4294901760
    %v5014 = vsub.f32 %v4966, %v5013
    %v5015 = vand.u32 %v5014, 4294901760
    %v5016 = vsub.f32 %v5014, %v5015
    %v5017 = vand.u32 %v5016, 4294901760
    %5018 = vmatpush.msra.mxu0 %v5017
    %v5019 = vand.u32 %v4964, 4294901760
    %v5020 = vsub.f32 %v4964, %v5019
    %v5021 = vand.u32 %v5020, 4294901760
    %v5022 = vsub.f32 %v5020, %v5021
    %v5023 = vand.u32 %v5022, 4294901760
    %5024 = vmatpush.msra.mxu0 %v5023
    %v5025 = vand.u32 %v4962, 4294901760
    %v5026 = vsub.f32 %v4962, %v5025
    %v5027 = vand.u32 %v5026, 4294901760
    %v5028 = vsub.f32 %v5026, %v5027
    %v5029 = vand.u32 %v5028, 4294901760
    %5030 = vmatpush.msra.mxu0 %v5029
    %v5031 = vand.u32 %v4960, 4294901760
    %v5032 = vsub.f32 %v4960, %v5031
    %v5033 = vand.u32 %v5032, 4294901760
    %v5034 = vsub.f32 %v5032, %v5033
    %v5035 = vand.u32 %v5034, 4294901760
    %5036 = vmatpush.msra.mxu0 %v5035
    %v5037 = vand.u32 %v4970, 4294901760
    %5038 = vmatmul.f32.gmra.mxu0 %v5037
    %v5039 = vpop.f32.mrf.mxu0
    %v5040 = vadd.f32 %v4999, %v5039
    %5041 = vdwg.mxu0
    %5042 = vmatpush.msra.mxu0 0.0
    %5043 = vmatpush.msra.mxu0 0.0
    %5044 = vmatpush.msra.mxu0 0.0
    %5045 = vmatpush.msra.mxu0 0.0
    %5046 = vmatpush.msra.mxu0 0.0
    %5047 = vmatpush.msra.mxu0 0.0
    %5048 = vmatpush.msra.mxu0 0.0
    %5049 = vmatpush.msra.mxu0 0.0
    %5050 = vmatpush.msra.mxu0 0.0
    %5051 = vmatpush.msra.mxu0 0.0
    %5052 = vmatpush.msra.mxu0 0.0
    %5053 = vmatpush.msra.mxu0 0.0
    %v5054 = vand.u32 %v4966, 4294901760
    %v5055 = vsub.f32 %v4966, %v5054
    %5056 = vmatpush.msra.mxu0 %v5055
    %v5057 = vand.u32 %v4964, 4294901760
    %v5058 = vsub.f32 %v4964, %v5057
    %5059 = vmatpush.msra.mxu0 %v5058
    %v5060 = vand.u32 %v4962, 4294901760
    %v5061 = vsub.f32 %v4962, %v5060
    %5062 = vmatpush.msra.mxu0 %v5061
    %v5063 = vand.u32 %v4960, 4294901760
    %v5064 = vsub.f32 %v4960, %v5063
    %5065 = vmatpush.msra.mxu0 %v5064
    %v5066 = vand.u32 %v4970, 4294901760
    %v5067 = vsub.f32 %v4970, %v5066
    %5068 = vmatmul.f32.gmra.mxu0 %v5067
    %v5069 = vpop.f32.mrf.mxu0
    %v5070 = vadd.f32 %v5040, %v5069
    %5071 = vdwg.mxu0
    %5072 = vmatpush.msra.mxu0 0.0
    %5073 = vmatpush.msra.mxu0 0.0
    %5074 = vmatpush.msra.mxu0 0.0
    %5075 = vmatpush.msra.mxu0 0.0
    %5076 = vmatpush.msra.mxu0 0.0
    %5077 = vmatpush.msra.mxu0 0.0
    %5078 = vmatpush.msra.mxu0 0.0
    %5079 = vmatpush.msra.mxu0 0.0
    %5080 = vmatpush.msra.mxu0 0.0
    %5081 = vmatpush.msra.mxu0 0.0
    %5082 = vmatpush.msra.mxu0 0.0
    %5083 = vmatpush.msra.mxu0 0.0
    %v5084 = vand.u32 %v4966, 4294901760
    %5085 = vmatpush.msra.mxu0 %v5084
    %v5086 = vand.u32 %v4964, 4294901760
    %5087 = vmatpush.msra.mxu0 %v5086
    %v5088 = vand.u32 %v4962, 4294901760
    %5089 = vmatpush.msra.mxu0 %v5088
    %v5090 = vand.u32 %v4960, 4294901760
    %5091 = vmatpush.msra.mxu0 %v5090
    %v5092 = vand.u32 %v4970, 4294901760
    %v5093 = vsub.f32 %v4970, %v5092
    %v5094 = vand.u32 %v5093, 4294901760
    %5095 = vmatmul.f32.gmra.mxu0 %v5094
    %v5096 = vpop.f32.mrf.mxu0
    %v5097 = vadd.f32 %v5070, %v5096
    %5098 = vdwg.mxu0
    %5099 = vmatpush.msra.mxu0 0.0
    %5100 = vmatpush.msra.mxu0 0.0
    %5101 = vmatpush.msra.mxu0 0.0
    %5102 = vmatpush.msra.mxu0 0.0
    %5103 = vmatpush.msra.mxu0 0.0
    %5104 = vmatpush.msra.mxu0 0.0
    %5105 = vmatpush.msra.mxu0 0.0
    %5106 = vmatpush.msra.mxu0 0.0
    %5107 = vmatpush.msra.mxu0 0.0
    %5108 = vmatpush.msra.mxu0 0.0
    %5109 = vmatpush.msra.mxu0 0.0
    %5110 = vmatpush.msra.mxu0 0.0
    %v5111 = vand.u32 %v4966, 4294901760
    %v5112 = vsub.f32 %v4966, %v5111
    %v5113 = vand.u32 %v5112, 4294901760
    %5114 = vmatpush.msra.mxu0 %v5113
    %v5115 = vand.u32 %v4964, 4294901760
    %v5116 = vsub.f32 %v4964, %v5115
    %v5117 = vand.u32 %v5116, 4294901760
    %5118 = vmatpush.msra.mxu0 %v5117
    %v5119 = vand.u32 %v4962, 4294901760
    %v5120 = vsub.f32 %v4962, %v5119
    %v5121 = vand.u32 %v5120, 4294901760
    %5122 = vmatpush.msra.mxu0 %v5121
    %v5123 = vand.u32 %v4960, 4294901760
    %v5124 = vsub.f32 %v4960, %v5123
    %v5125 = vand.u32 %v5124, 4294901760
    %5126 = vmatpush.msra.mxu0 %v5125
    %v5127 = vand.u32 %v4970, 4294901760
    %5128 = vmatmul.f32.gmra.mxu0 %v5127
    %v5129 = vpop.f32.mrf.mxu0
    %v5130 = vadd.f32 %v5097, %v5129
    %5131 = vdwg.mxu0
    %5132 = vmatpush.msra.mxu0 0.0
    %5133 = vmatpush.msra.mxu0 0.0
    %5134 = vmatpush.msra.mxu0 0.0
    %5135 = vmatpush.msra.mxu0 0.0
    %5136 = vmatpush.msra.mxu0 0.0
    %5137 = vmatpush.msra.mxu0 0.0
    %5138 = vmatpush.msra.mxu0 0.0
    %5139 = vmatpush.msra.mxu0 0.0
    %5140 = vmatpush.msra.mxu0 0.0
    %5141 = vmatpush.msra.mxu0 0.0
    %5142 = vmatpush.msra.mxu0 0.0
    %5143 = vmatpush.msra.mxu0 0.0
    %v5144 = vand.u32 %v4966, 4294901760
    %5145 = vmatpush.msra.mxu0 %v5144
    %v5146 = vand.u32 %v4964, 4294901760
    %5147 = vmatpush.msra.mxu0 %v5146
    %v5148 = vand.u32 %v4962, 4294901760
    %5149 = vmatpush.msra.mxu0 %v5148
    %v5150 = vand.u32 %v4960, 4294901760
    %5151 = vmatpush.msra.mxu0 %v5150
    %v5152 = vand.u32 %v4970, 4294901760
    %5153 = vmatmul.f32.gmra.mxu0 %v5152
    %v5154 = vpop.f32.mrf.mxu0
    %v5155 = vadd.f32 %v5130, %v5154
    %5156 = vdwg.mxu0
    %5157 = vmatpush.msra.mxu0 0.0
    %5158 = vmatpush.msra.mxu0 0.0
    %5159 = vmatpush.msra.mxu0 0.0
    %5160 = vmatpush.msra.mxu0 0.0
    %5161 = vmatpush.msra.mxu0 0.0
    %5162 = vmatpush.msra.mxu0 0.0
    %5163 = vmatpush.msra.mxu0 0.0
    %5164 = vmatpush.msra.mxu0 0.0
    %5165 = vmatpush.msra.mxu0 0.0
    %5166 = vmatpush.msra.mxu0 0.0
    %5167 = vmatpush.msra.mxu0 0.0
    %5168 = vmatpush.msra.mxu0 0.0
    %v5169 = vand.u32 %v4967, 4294901760
    %5170 = vmatpush.msra.mxu0 %v5169
    %v5171 = vand.u32 %v4965, 4294901760
    %5172 = vmatpush.msra.mxu0 %v5171
    %v5173 = vand.u32 %v4963, 4294901760
    %5174 = vmatpush.msra.mxu0 %v5173
    %v5175 = vand.u32 %v4961, 4294901760
    %5176 = vmatpush.msra.mxu0 %v5175
    %v5177 = vand.u32 %v4970, 4294901760
    %v5178 = vsub.f32 %v4970, %v5177
    %v5179 = vand.u32 %v5178, 4294901760
    %v5180 = vsub.f32 %v5178, %v5179
    %v5181 = vand.u32 %v5180, 4294901760
    %5182 = vmatmul.f32.gmra.mxu0 %v5181
    %v5183 = vpop.f32.mrf.mxu0
    %v5184 = vadd.f32 0.0, %v5183
    %5185 = vdwg.mxu0
    %5186 = vmatpush.msra.mxu0 0.0
    %5187 = vmatpush.msra.mxu0 0.0
    %5188 = vmatpush.msra.mxu0 0.0
    %5189 = vmatpush.msra.mxu0 0.0
    %5190 = vmatpush.msra.mxu0 0.0
    %5191 = vmatpush.msra.mxu0 0.0
    %5192 = vmatpush.msra.mxu0 0.0
    %5193 = vmatpush.msra.mxu0 0.0
    %5194 = vmatpush.msra.mxu0 0.0
    %5195 = vmatpush.msra.mxu0 0.0
    %5196 = vmatpush.msra.mxu0 0.0
    %5197 = vmatpush.msra.mxu0 0.0
    %v5198 = vand.u32 %v4967, 4294901760
    %v5199 = vsub.f32 %v4967, %v5198
    %v5200 = vand.u32 %v5199, 4294901760
    %v5201 = vsub.f32 %v5199, %v5200
    %v5202 = vand.u32 %v5201, 4294901760
    %5203 = vmatpush.msra.mxu0 %v5202
    %v5204 = vand.u32 %v4965, 4294901760
    %v5205 = vsub.f32 %v4965, %v5204
    %v5206 = vand.u32 %v5205, 4294901760
    %v5207 = vsub.f32 %v5205, %v5206
    %v5208 = vand.u32 %v5207, 4294901760
    %5209 = vmatpush.msra.mxu0 %v5208
    %v5210 = vand.u32 %v4963, 4294901760
    %v5211 = vsub.f32 %v4963, %v5210
    %v5212 = vand.u32 %v5211, 4294901760
    %v5213 = vsub.f32 %v5211, %v5212
    %v5214 = vand.u32 %v5213, 4294901760
    %5215 = vmatpush.msra.mxu0 %v5214
    %v5216 = vand.u32 %v4961, 4294901760
    %v5217 = vsub.f32 %v4961, %v5216
    %v5218 = vand.u32 %v5217, 4294901760
    %v5219 = vsub.f32 %v5217, %v5218
    %v5220 = vand.u32 %v5219, 4294901760
    %5221 = vmatpush.msra.mxu0 %v5220
    %v5222 = vand.u32 %v4970, 4294901760
    %5223 = vmatmul.f32.gmra.mxu0 %v5222
    %v5224 = vpop.f32.mrf.mxu0
    %v5225 = vadd.f32 %v5184, %v5224
    %5226 = vdwg.mxu0
    %5227 = vmatpush.msra.mxu0 0.0
    %5228 = vmatpush.msra.mxu0 0.0
    %5229 = vmatpush.msra.mxu0 0.0
    %5230 = vmatpush.msra.mxu0 0.0
    %5231 = vmatpush.msra.mxu0 0.0
    %5232 = vmatpush.msra.mxu0 0.0
    %5233 = vmatpush.msra.mxu0 0.0
    %5234 = vmatpush.msra.mxu0 0.0
    %5235 = vmatpush.msra.mxu0 0.0
    %5236 = vmatpush.msra.mxu0 0.0
    %5237 = vmatpush.msra.mxu0 0.0
    %5238 = vmatpush.msra.mxu0 0.0
    %v5239 = vand.u32 %v4967, 4294901760
    %v5240 = vsub.f32 %v4967, %v5239
    %5241 = vmatpush.msra.mxu0 %v5240
    %v5242 = vand.u32 %v4965, 4294901760
    %v5243 = vsub.f32 %v4965, %v5242
    %5244 = vmatpush.msra.mxu0 %v5243
    %v5245 = vand.u32 %v4963, 4294901760
    %v5246 = vsub.f32 %v4963, %v5245
    %5247 = vmatpush.msra.mxu0 %v5246
    %v5248 = vand.u32 %v4961, 4294901760
    %v5249 = vsub.f32 %v4961, %v5248
    %5250 = vmatpush.msra.mxu0 %v5249
    %v5251 = vand.u32 %v4970, 4294901760
    %v5252 = vsub.f32 %v4970, %v5251
    %5253 = vmatmul.f32.gmra.mxu0 %v5252
    %v5254 = vpop.f32.mrf.mxu0
    %v5255 = vadd.f32 %v5225, %v5254
    %5256 = vdwg.mxu0
    %5257 = vmatpush.msra.mxu0 0.0
    %5258 = vmatpush.msra.mxu0 0.0
    %5259 = vmatpush.msra.mxu0 0.0
    %5260 = vmatpush.msra.mxu0 0.0
    %5261 = vmatpush.msra.mxu0 0.0
    %5262 = vmatpush.msra.mxu0 0.0
    %5263 = vmatpush.msra.mxu0 0.0
    %5264 = vmatpush.msra.mxu0 0.0
    %5265 = vmatpush.msra.mxu0 0.0
    %5266 = vmatpush.msra.mxu0 0.0
    %5267 = vmatpush.msra.mxu0 0.0
    %5268 = vmatpush.msra.mxu0 0.0
    %v5269 = vand.u32 %v4967, 4294901760
    %5270 = vmatpush.msra.mxu0 %v5269
    %v5271 = vand.u32 %v4965, 4294901760
    %5272 = vmatpush.msra.mxu0 %v5271
    %v5273 = vand.u32 %v4963, 4294901760
    %5274 = vmatpush.msra.mxu0 %v5273
    %v5275 = vand.u32 %v4961, 4294901760
    %5276 = vmatpush.msra.mxu0 %v5275
    %v5277 = vand.u32 %v4970, 4294901760
    %v5278 = vsub.f32 %v4970, %v5277
    %v5279 = vand.u32 %v5278, 4294901760
    %5280 = vmatmul.f32.gmra.mxu0 %v5279
    %v5281 = vpop.f32.mrf.mxu0
    %v5282 = vadd.f32 %v5255, %v5281
    %5283 = vdwg.mxu0
    %5284 = vmatpush.msra.mxu0 0.0
    %5285 = vmatpush.msra.mxu0 0.0
    %5286 = vmatpush.msra.mxu0 0.0
    %5287 = vmatpush.msra.mxu0 0.0
    %5288 = vmatpush.msra.mxu0 0.0
    %5289 = vmatpush.msra.mxu0 0.0
    %5290 = vmatpush.msra.mxu0 0.0
    %5291 = vmatpush.msra.mxu0 0.0
    %5292 = vmatpush.msra.mxu0 0.0
    %5293 = vmatpush.msra.mxu0 0.0
    %5294 = vmatpush.msra.mxu0 0.0
    %5295 = vmatpush.msra.mxu0 0.0
    %v5296 = vand.u32 %v4967, 4294901760
    %v5297 = vsub.f32 %v4967, %v5296
    %v5298 = vand.u32 %v5297, 4294901760
    %5299 = vmatpush.msra.mxu0 %v5298
    %v5300 = vand.u32 %v4965, 4294901760
    %v5301 = vsub.f32 %v4965, %v5300
    %v5302 = vand.u32 %v5301, 4294901760
    %5303 = vmatpush.msra.mxu0 %v5302
    %v5304 = vand.u32 %v4963, 4294901760
    %v5305 = vsub.f32 %v4963, %v5304
    %v5306 = vand.u32 %v5305, 4294901760
    %5307 = vmatpush.msra.mxu0 %v5306
    %v5308 = vand.u32 %v4961, 4294901760
    %v5309 = vsub.f32 %v4961, %v5308
    %v5310 = vand.u32 %v5309, 4294901760
    %5311 = vmatpush.msra.mxu0 %v5310
    %v5312 = vand.u32 %v4970, 4294901760
    %5313 = vmatmul.f32.gmra.mxu0 %v5312
    %v5314 = vpop.f32.mrf.mxu0
    %v5315 = vadd.f32 %v5282, %v5314
    %5316 = vdwg.mxu0
    %5317 = vmatpush.msra.mxu0 0.0
    %5318 = vmatpush.msra.mxu0 0.0
    %5319 = vmatpush.msra.mxu0 0.0
    %5320 = vmatpush.msra.mxu0 0.0
    %5321 = vmatpush.msra.mxu0 0.0
    %5322 = vmatpush.msra.mxu0 0.0
    %5323 = vmatpush.msra.mxu0 0.0
    %5324 = vmatpush.msra.mxu0 0.0
    %5325 = vmatpush.msra.mxu0 0.0
    %5326 = vmatpush.msra.mxu0 0.0
    %5327 = vmatpush.msra.mxu0 0.0
    %5328 = vmatpush.msra.mxu0 0.0
    %v5329 = vand.u32 %v4967, 4294901760
    %5330 = vmatpush.msra.mxu0 %v5329
    %v5331 = vand.u32 %v4965, 4294901760
    %5332 = vmatpush.msra.mxu0 %v5331
    %v5333 = vand.u32 %v4963, 4294901760
    %5334 = vmatpush.msra.mxu0 %v5333
    %v5335 = vand.u32 %v4961, 4294901760
    %5336 = vmatpush.msra.mxu0 %v5335
    %v5337 = vand.u32 %v4970, 4294901760
    %5338 = vmatmul.f32.gmra.mxu0 %v5337
    %v5339 = vpop.f32.mrf.mxu0
    %v5340 = vadd.f32 %v5315, %v5339
    %5341 = vdwg.mxu0
    %5342 = vset.pattern.permute.xlu0 96
    %5343 = vperm.xlu0 %5342, %v47
    %v5344 = vpop.permute.xlu0 %5343
    %v5346 = vadd.f32 %v5155, %v5344
    %v5347 = vadd.f32 %v5340, %v5344
    %5348 = vst [vmem:[#allocation7] sm:$0x7f] %v596
    %5349 = vst [vmem:[#allocation7 + $0x8] sm:$0x7f] %v597
    %v5352 = vrot.slane %v5347, 7
    %vm5353 = vcmask 1040384
    %v5354 = vsel %vm5353, %v5346, %v5352
    %v5356 = vlaneseq
    %vm5357 = vcmp.ge.s32.totalorder %v5356, 0
    %vm5358 = vcmp.lt.s32.totalorder %v5356, 256
    %vm5359 = vmand %vm5357, %vm5358
    %s5360 = scalar_lea.vmem [#allocation7], 7
    %5361 = vst.msk [vmem:[%s5360] ss:$8 sm:$0x3] %vm5359, %v5354
    %5362 = vst.msk [vmem:[%s5360] ss:$8 sm:$0x0] %vm5359, %v5354
    // Predicated region
    $region18: #{tpu_custom_call.1} parent=1 // pred_check
      _
    $region19: #{tpu_custom_call.1} parent=1 // pred_check_branch
      %5364 = sbr.rel (0) target = $region21
    $region20: #{tpu_custom_call.1} parent=1 // pred_region
      %5366 = vsyncadd [#allocation4], 0
      %s5368 = sshll.u32 [#allocation7], 4
      %s5369 = int_to_ptr.vmem [resolvable:$true] %s5368
      %s5370 = sshll.u32 %s2, 4
      %s5371 = int_to_ptr.hbm [resolvable:$true] %s5370
      %5373 = dma.vmem_to_hbm [thread:$0]  %s5369, 256, %s5371, [#allocation4]
    $region21: #{tpu_custom_call.1} parent=1 // pred_fallthru
      _
    // Predicated region
    $region22: #{tpu_custom_call.1} parent=1 // pred_check
      _
    $region23: #{tpu_custom_call.1} parent=1 // pred_check_branch
      %5375 = sbr.rel (0) target = $region25
    $region24: #{tpu_custom_call.1} parent=1 // pred_region
      %5377 = dma.done [#allocation4], 256
    $region25: #{tpu_custom_call.1} parent=1 // pred_fallthru
      _
    %5378 = vsyncpa [#allocation3], 1
    %5379 = vsyncpa [#allocation6], 1
    %5380 = vsyncpa [#allocation4], 1

</llo_original>
